<compile_context>
chip_gen: v6e
topology: v6e:2x2x1
jax: 0.10.0
libtpu: 0.0.40
codegen_flags: <defaults>
</compile_context>

<pallas_src>
import jax
import jax.numpy as jnp
from jax.experimental import pallas as pl
from jax.experimental.pallas import tpu as pltpu


_M_TARGET = 256          # rows fed to the MXU per grid step (fills v6e/v7x 256-row MXU)
_SINGLE_BUFFER_OK = True  # flips to False if pl.Buffered(1) is rejected by this JAX build


def _time_mixer_kernel(prev_ref, curr_ref,
                       wq_ref, bq_ref,
                       wv_ref, bv_ref,
                       wo_ref, bo_ref,
                       out_ref):
    # One block of TB timesteps per grid point; weight/bias refs map to the
    # same block every step (constant index_map -> DMA'd once, VMEM-resident).
    tb, bs, dim = curr_ref.shape
    prev = prev_ref[...].reshape(tb * bs, dim)   # bf16, M = tb*bs rows
    curr = curr_ref[...].reshape(tb * bs, dim)   # bf16

    # Linear layers: x @ W_t + b   (W_t bf16 (dim_in, dim_out); f32 MXU accumulate)
    q = jnp.dot(curr, wq_ref[...], preferred_element_type=jnp.float32) + bq_ref[...]
    v = jnp.dot(prev, wv_ref[...], preferred_element_type=jnp.float32) + bv_ref[...]

    # Original: sum(exp(k)*v, n) / sum(exp(k), n) with n == 1  ==  v exactly,
    # so fc_k, exp and the divide drop out (and with them the NaN overflow path).
    gated = jax.nn.sigmoid(q) * v                # elementwise kept in f32

    out = jnp.dot(gated.astype(jnp.bfloat16), wo_ref[...],
                  preferred_element_type=jnp.float32) + bo_ref[...]
    out_ref[...] = out.reshape(tb, bs, dim).astype(out_ref.dtype)


def _build_seq_call(n_blocks, tb, bs, dim, single_buffer_weights):
    step_spec = pl.BlockSpec((tb, bs, dim), lambda t: (t, 0, 0))
    const_kwargs = {"pipeline_mode": pl.Buffered(1)} if single_buffer_weights else {}
    w_spec = pl.BlockSpec((dim, dim), lambda t: (0, 0), **const_kwargs)
    b_spec = pl.BlockSpec((1, dim), lambda t: (0, 0), **const_kwargs)

    return pl.pallas_call(
        _time_mixer_kernel,
        out_shape=jax.ShapeDtypeStruct((n_blocks * tb, bs, dim), jnp.float32),
        grid=(n_blocks,),
        in_specs=[step_spec, step_spec,
                  w_spec, b_spec,     # fc_q
                  w_spec, b_spec,     # fc_v
                  w_spec, b_spec],    # output linear
        out_specs=step_spec,
        compiler_params=pltpu.CompilerParams(
            dimension_semantics=("parallel",)),
    )


def time_mixer_seq(prev_seq, curr_seq, params, tb=None):
    """prev_seq, curr_seq: (T, bs, dim) -> (T, bs, dim) f32.

    Activations are streamed as bf16; weights stay resident in VMEM across all
    grid steps (one DMA total, single-buffered)."""
    global _SINGLE_BUFFER_OK
    T, bs, dim = curr_seq.shape

    if tb is None:
        # Target >=256 MXU rows per step; never exceed T (and T>=2*tb keeps
        # both v7x TensorCores busy whenever T allows).
        tb = min(max(1, pl.cdiv(_M_TARGET, bs)), T)
    n_blocks = pl.cdiv(T, tb)
    t_pad = n_blocks * tb

    prev_b = prev_seq.astype(jnp.bfloat16)
    curr_b = curr_seq.astype(jnp.bfloat16)
    if t_pad != T:
        pad = ((0, t_pad - T), (0, 0), (0, 0))
        prev_b = jnp.pad(prev_b, pad)
        curr_b = jnp.pad(curr_b, pad)

    args = (prev_b, curr_b,
            params["wq_t"], params["bq"],
            params["wv_t"], params["bv"],
            params["wo_t"], params["bo"])

    out = None
    if _SINGLE_BUFFER_OK:
        try:
            out = jax.block_until_ready(
                _build_seq_call(n_blocks, tb, bs, dim, True)(*args))
        except Exception:
            _SINGLE_BUFFER_OK = False   # this JAX build rejects Buffered(1)
    if out is None:
        out = _build_seq_call(n_blocks, tb, bs, dim, False)(*args)
    return out[:T]


def time_mixer(prev, curr, params):
    """Single-step API matching the PyTorch module: (bs, dim) -> (bs, dim)."""
    return time_mixer_seq(prev[None], curr[None], params)[0]


def init_params(key, dim):
    """PyTorch-Linear-style init: U(-1/sqrt(dim), 1/sqrt(dim))."""
    bound = 1.0 / (dim ** 0.5)
    keys = jax.random.split(key, 8)

    def lin(kw, kb):
        w = jax.random.uniform(kw, (dim, dim), jnp.float32, -bound, bound)  # (out, in)
        b = jax.random.uniform(kb, (dim,), jnp.float32, -bound, bound)
        return w, b

    wq, bq = lin(keys[0], keys[1])
    wk, bk = lin(keys[2], keys[3])   # kept only for the faithful f32 reference
    wv, bv = lin(keys[4], keys[5])
    wo, bo = lin(keys[6], keys[7])
    return {
        # kernel inputs: bf16 transposed weights (dim_in, dim_out), f32 (1, dim) biases
        "wq_t": wq.T.astype(jnp.bfloat16), "bq": bq[None, :],
        "wv_t": wv.T.astype(jnp.bfloat16), "bv": bv[None, :],
        "wo_t": wo.T.astype(jnp.bfloat16), "bo": bo[None, :],
        # full-precision copies (incl. fc_k) for the PyTorch-faithful reference
        "f32": {"wq": wq, "bq": bq, "wk": wk, "bk": bk,
                "wv": wv, "bv": bv, "wo": wo, "bo": bo},
    }


def time_mixer_ref_full(prev, curr, p):
    """Pure-JAX f32 reference mirroring the PyTorch forward exactly (n == 1 folded)."""
    q = curr @ p["wq"].T + p["bq"]
    k = prev @ p["wk"].T + p["bk"]
    v = prev @ p["wv"].T + p["bv"]
    ek = jnp.exp(k)
    mix = (ek * v) / ek
    out = jax.nn.sigmoid(q) * mix
    return out @ p["wo"].T + p["bo"]


def time_mixer_ref_kernelpath(prev, curr, params):
    """Pure-JAX reference on the same numeric path as the kernel (bf16 in, f32 acc)."""
    b16, f32 = jnp.bfloat16, jnp.float32
    q = jnp.dot(curr.astype(b16), params["wq_t"], preferred_element_type=f32) + params["bq"]
    v = jnp.dot(prev.astype(b16), params["wv_t"], preferred_element_type=f32) + params["bv"]
    g = jax.nn.sigmoid(q) * v
    return jnp.dot(g.astype(b16), params["wo_t"], preferred_element_type=f32) + params["bo"]


if __name__ == "__main__":
    T, bs, dim = 64, 8, 128          # TB=32 -> M=256 rows/step, grid of 2 blocks
    key = jax.random.PRNGKey(0)
    k_prev, k_curr, k_params = jax.random.split(key, 3)

    prev_seq = jax.random.normal(k_prev, (T, bs, dim), jnp.float32)
    curr_seq = jax.random.normal(k_curr, (T, bs, dim), jnp.float32)
    params = init_params(k_params, dim)

    out_seq = jax.block_until_ready(time_mixer_seq(prev_seq, curr_seq, params))
    assert out_seq.shape == (T, bs, dim)

    # Single-step API (matches the PyTorch module signature) agrees with the seq kernel.
    out0 = jax.block_until_ready(time_mixer(prev_seq[0], curr_seq[0], params))
    assert out0.shape == (bs, dim)
    assert jnp.allclose(out0, out_seq[0], atol=1e-5, rtol=1e-5)

    pf, cf = prev_seq.reshape(-1, dim), curr_seq.reshape(-1, dim)

    # (a) Tight check vs. the identical bf16-weight numeric path in pure JAX.
    ref_k = time_mixer_ref_kernelpath(pf, cf, params).reshape(T, bs, dim)
    assert jnp.allclose(out_seq, ref_k, atol=1e-3, rtol=1e-3)

    # (b) Faithful f32 PyTorch semantics (incl. fc_k / exp / divide): only bf16
    #     weight/activation quantization separates the kernel from it.
    ref_f = time_mixer_ref_full(pf, cf, params["f32"]).reshape(T, bs, dim)
    assert jnp.allclose(out_seq, ref_f, atol=3e-2, rtol=3e-2)

    # (c) Exercise the padded (T not a multiple of TB) path.
    T2 = 20
    out_pad = jax.block_until_ready(
        time_mixer_seq(prev_seq[:T2], curr_seq[:T2], params, tb=8))
    ref_pad = time_mixer_ref_kernelpath(
        prev_seq[:T2].reshape(-1, dim), curr_seq[:T2].reshape(-1, dim),
        params).reshape(T2, bs, dim)
    assert out_pad.shape == (T2, bs, dim)
    assert jnp.allclose(out_pad, ref_pad, atol=1e-3, rtol=1e-3)

    print("KERNEL_OK")
</pallas_src>

<mosaic_0001>
module attributes {stable_mosaic.version = 11 : i64} {
  func.func @_time_mixer_kernel(%arg0: i32, %arg1: memref<32x8x128xbf16, #tpu.memory_space<vmem>>, %arg2: memref<32x8x128xbf16, #tpu.memory_space<vmem>>, %arg3: memref<128x128xbf16, #tpu.memory_space<vmem>>, %arg4: memref<1x128xf32, #tpu.memory_space<vmem>>, %arg5: memref<128x128xbf16, #tpu.memory_space<vmem>>, %arg6: memref<1x128xf32, #tpu.memory_space<vmem>>, %arg7: memref<128x128xbf16, #tpu.memory_space<vmem>>, %arg8: memref<1x128xf32, #tpu.memory_space<vmem>>, %arg9: memref<32x8x128xf32, #tpu.memory_space<vmem>>) attributes {dimension_semantics = [#tpu.dimension_semantics<parallel>], iteration_bounds = array<i64: 2>, scalar_prefetch = 0 : i64, scratch_operands = 0 : i64, tpu.core_type = #tpu.core_type<tc>, window_params = [{transform_indices = @transform_0, window_bounds = array<i64: 32, 8, 128>}, {transform_indices = @transform_1, window_bounds = array<i64: 32, 8, 128>}, {pipeline_mode = #tpu.pipeline_mode<synchronous>, transform_indices = @transform_2, window_bounds = array<i64: 128, 128>}, {pipeline_mode = #tpu.pipeline_mode<synchronous>, transform_indices = @transform_3, window_bounds = array<i64: 1, 128>}, {pipeline_mode = #tpu.pipeline_mode<synchronous>, transform_indices = @transform_4, window_bounds = array<i64: 128, 128>}, {pipeline_mode = #tpu.pipeline_mode<synchronous>, transform_indices = @transform_5, window_bounds = array<i64: 1, 128>}, {pipeline_mode = #tpu.pipeline_mode<synchronous>, transform_indices = @transform_6, window_bounds = array<i64: 128, 128>}, {pipeline_mode = #tpu.pipeline_mode<synchronous>, transform_indices = @transform_7, window_bounds = array<i64: 1, 128>}, {transform_indices = @transform_8, window_bounds = array<i64: 32, 8, 128>}]} {
    %c0 = arith.constant 0 : index
    %c0_0 = arith.constant 0 : index
    %c0_1 = arith.constant 0 : index
    %0 = vector.load %arg1[%c0, %c0_0, %c0_1] : memref<32x8x128xbf16, #tpu.memory_space<vmem>>, vector<32x8x128xbf16>
    %1 = vector.shape_cast %0 : vector<32x8x128xbf16> to vector<256x128xbf16>
    %c0_2 = arith.constant 0 : index
    %c0_3 = arith.constant 0 : index
    %c0_4 = arith.constant 0 : index
    %2 = vector.load %arg2[%c0_2, %c0_3, %c0_4] : memref<32x8x128xbf16, #tpu.memory_space<vmem>>, vector<32x8x128xbf16>
    %3 = vector.shape_cast %2 : vector<32x8x128xbf16> to vector<256x128xbf16>
    %c0_5 = arith.constant 0 : index
    %c0_6 = arith.constant 0 : index
    %4 = vector.load %arg3[%c0_5, %c0_6] : memref<128x128xbf16, #tpu.memory_space<vmem>>, vector<128x128xbf16>
    %cst = arith.constant dense<0.000000e+00> : vector<256x128xf32>
    %5 = tpu.matmul %3, %4, %cst {dimension_numbers = #tpu.dot_dimension_numbers<[1], [0], [0], [1], [0, 0, 1, 1], [], []>} : vector<256x128xbf16>, vector<128x128xbf16>, vector<256x128xf32> -> vector<256x128xf32>
    %c0_7 = arith.constant 0 : index
    %c0_8 = arith.constant 0 : index
    %6 = vector.load %arg4[%c0_7, %c0_8] : memref<1x128xf32, #tpu.memory_space<vmem>>, vector<1x128xf32>
    %7 = vector.broadcast %6 : vector<1x128xf32> to vector<256x128xf32>
    %8 = arith.addf %5, %7 : vector<256x128xf32>
    %c0_9 = arith.constant 0 : index
    %c0_10 = arith.constant 0 : index
    %9 = vector.load %arg5[%c0_9, %c0_10] : memref<128x128xbf16, #tpu.memory_space<vmem>>, vector<128x128xbf16>
    %cst_11 = arith.constant dense<0.000000e+00> : vector<256x128xf32>
    %10 = tpu.matmul %1, %9, %cst_11 {dimension_numbers = #tpu.dot_dimension_numbers<[1], [0], [0], [1], [0, 0, 1, 1], [], []>} : vector<256x128xbf16>, vector<128x128xbf16>, vector<256x128xf32> -> vector<256x128xf32>
    %c0_12 = arith.constant 0 : index
    %c0_13 = arith.constant 0 : index
    %11 = vector.load %arg6[%c0_12, %c0_13] : memref<1x128xf32, #tpu.memory_space<vmem>>, vector<1x128xf32>
    %12 = vector.broadcast %11 : vector<1x128xf32> to vector<256x128xf32>
    %13 = arith.addf %10, %12 : vector<256x128xf32>
    %14 = arith.negf %8 : vector<256x128xf32>
    %15 = math.exp %14 : vector<256x128xf32>
    %cst_14 = arith.constant 1.000000e+00 : f32
    %16 = vector.broadcast %cst_14 : f32 to vector<256x128xf32>
    %17 = arith.addf %16, %15 : vector<256x128xf32>
    %18 = arith.divf %16, %17 : vector<256x128xf32>
    %19 = arith.mulf %18, %13 : vector<256x128xf32>
    %20 = arith.truncf %19 : vector<256x128xf32> to vector<256x128xbf16>
    %c0_15 = arith.constant 0 : index
    %c0_16 = arith.constant 0 : index
    %21 = vector.load %arg7[%c0_15, %c0_16] : memref<128x128xbf16, #tpu.memory_space<vmem>>, vector<128x128xbf16>
    %cst_17 = arith.constant dense<0.000000e+00> : vector<256x128xf32>
    %22 = tpu.matmul %20, %21, %cst_17 {dimension_numbers = #tpu.dot_dimension_numbers<[1], [0], [0], [1], [0, 0, 1, 1], [], []>} : vector<256x128xbf16>, vector<128x128xbf16>, vector<256x128xf32> -> vector<256x128xf32>
    %c0_18 = arith.constant 0 : index
    %c0_19 = arith.constant 0 : index
    %23 = vector.load %arg8[%c0_18, %c0_19] : memref<1x128xf32, #tpu.memory_space<vmem>>, vector<1x128xf32>
    %24 = vector.broadcast %23 : vector<1x128xf32> to vector<256x128xf32>
    %25 = arith.addf %22, %24 : vector<256x128xf32>
    %26 = vector.shape_cast %25 : vector<256x128xf32> to vector<32x8x128xf32>
    %c0_20 = arith.constant 0 : index
    %c0_21 = arith.constant 0 : index
    %c0_22 = arith.constant 0 : index
    %27 = vector.load %arg9[%c0_20, %c0_21, %c0_22] : memref<32x8x128xf32, #tpu.memory_space<vmem>>, vector<32x8x128xf32>
    tpu.vector_store %arg9[%c0_20, %c0_21, %c0_22], %26 {strides = array<i32>} : memref<32x8x128xf32, #tpu.memory_space<vmem>>, vector<32x8x128xf32>,
    return
  }
  func.func @transform_0(%arg0: i32) -> (i32, i32, i32) {
    %c0_i32 = arith.constant 0 : i32
    %c0_i32_0 = arith.constant 0 : i32
    %c0_i32_1 = arith.constant 0 : i32
    return %arg0, %c0_i32, %c0_i32_0 : i32, i32, i32
  }
  func.func @transform_1(%arg0: i32) -> (i32, i32, i32) {
    %c0_i32 = arith.constant 0 : i32
    %c0_i32_0 = arith.constant 0 : i32
    %c0_i32_1 = arith.constant 0 : i32
    return %arg0, %c0_i32, %c0_i32_0 : i32, i32, i32
  }
  func.func @transform_2(%arg0: i32) -> (i32, i32) {
    %c0_i32 = arith.constant 0 : i32
    %c0_i32_0 = arith.constant 0 : i32
    %c0_i32_1 = arith.constant 0 : i32
    return %c0_i32, %c0_i32_0 : i32, i32
  }
  func.func @transform_3(%arg0: i32) -> (i32, i32) {
    %c0_i32 = arith.constant 0 : i32
    %c0_i32_0 = arith.constant 0 : i32
    %c0_i32_1 = arith.constant 0 : i32
    return %c0_i32, %c0_i32_0 : i32, i32
  }
  func.func @transform_4(%arg0: i32) -> (i32, i32) {
    %c0_i32 = arith.constant 0 : i32
    %c0_i32_0 = arith.constant 0 : i32
    %c0_i32_1 = arith.constant 0 : i32
    return %c0_i32, %c0_i32_0 : i32, i32
  }
  func.func @transform_5(%arg0: i32) -> (i32, i32) {
    %c0_i32 = arith.constant 0 : i32
    %c0_i32_0 = arith.constant 0 : i32
    %c0_i32_1 = arith.constant 0 : i32
    return %c0_i32, %c0_i32_0 : i32, i32
  }
  func.func @transform_6(%arg0: i32) -> (i32, i32) {
    %c0_i32 = arith.constant 0 : i32
    %c0_i32_0 = arith.constant 0 : i32
    %c0_i32_1 = arith.constant 0 : i32
    return %c0_i32, %c0_i32_0 : i32, i32
  }
  func.func @transform_7(%arg0: i32) -> (i32, i32) {
    %c0_i32 = arith.constant 0 : i32
    %c0_i32_0 = arith.constant 0 : i32
    %c0_i32_1 = arith.constant 0 : i32
    return %c0_i32, %c0_i32_0 : i32, i32
  }
  func.func @transform_8(%arg0: i32) -> (i32, i32, i32) {
    %c0_i32 = arith.constant 0 : i32
    %c0_i32_0 = arith.constant 0 : i32
    %c0_i32_1 = arith.constant 0 : i32
    return %arg0, %c0_i32, %c0_i32_0 : i32, i32, i32
  }
}

module attributes {stable_mosaic.version = 11 : i64} {
  func.func @_time_mixer_kernel(%arg0: i32, %arg1: memref<32x8x128xbf16, #tpu.memory_space<vmem>>, %arg2: memref<32x8x128xbf16, #tpu.memory_space<vmem>>, %arg3: memref<128x128xbf16, #tpu.memory_space<vmem>>, %arg4: memref<1x128xf32, #tpu.memory_space<vmem>>, %arg5: memref<128x128xbf16, #tpu.memory_space<vmem>>, %arg6: memref<1x128xf32, #tpu.memory_space<vmem>>, %arg7: memref<128x128xbf16, #tpu.memory_space<vmem>>, %arg8: memref<1x128xf32, #tpu.memory_space<vmem>>, %arg9: memref<32x8x128xf32, #tpu.memory_space<vmem>>) attributes {dimension_semantics = [#tpu.dimension_semantics<parallel>], iteration_bounds = array<i64: 2>, scalar_prefetch = 0 : i64, scratch_operands = 0 : i64, tpu.core_type = #tpu.core_type<tc>, window_params = [{transform_indices = @transform_0, window_bounds = array<i64: 32, 8, 128>}, {transform_indices = @transform_1, window_bounds = array<i64: 32, 8, 128>}, {pipeline_mode = #tpu.pipeline_mode<synchronous>, transform_indices = @transform_2, window_bounds = array<i64: 128, 128>}, {pipeline_mode = #tpu.pipeline_mode<synchronous>, transform_indices = @transform_3, window_bounds = array<i64: 1, 128>}, {pipeline_mode = #tpu.pipeline_mode<synchronous>, transform_indices = @transform_4, window_bounds = array<i64: 128, 128>}, {pipeline_mode = #tpu.pipeline_mode<synchronous>, transform_indices = @transform_5, window_bounds = array<i64: 1, 128>}, {pipeline_mode = #tpu.pipeline_mode<synchronous>, transform_indices = @transform_6, window_bounds = array<i64: 128, 128>}, {pipeline_mode = #tpu.pipeline_mode<synchronous>, transform_indices = @transform_7, window_bounds = array<i64: 1, 128>}, {transform_indices = @transform_8, window_bounds = array<i64: 32, 8, 128>}]} {
    %c0 = arith.constant 0 : index
    %c0_0 = arith.constant 0 : index
    %c0_1 = arith.constant 0 : index
    %0 = vector.load %arg1[%c0, %c0_0, %c0_1] : memref<32x8x128xbf16, #tpu.memory_space<vmem>>, vector<32x8x128xbf16>
    %1 = vector.shape_cast %0 : vector<32x8x128xbf16> to vector<256x128xbf16>
    %c0_2 = arith.constant 0 : index
    %c0_3 = arith.constant 0 : index
    %c0_4 = arith.constant 0 : index
    %2 = vector.load %arg2[%c0_2, %c0_3, %c0_4] : memref<32x8x128xbf16, #tpu.memory_space<vmem>>, vector<32x8x128xbf16>
    %3 = vector.shape_cast %2 : vector<32x8x128xbf16> to vector<256x128xbf16>
    %c0_5 = arith.constant 0 : index
    %c0_6 = arith.constant 0 : index
    %4 = vector.load %arg3[%c0_5, %c0_6] : memref<128x128xbf16, #tpu.memory_space<vmem>>, vector<128x128xbf16>
    %cst = arith.constant dense<0.000000e+00> : vector<256x128xf32>
    %5 = tpu.matmul %3, %4, %cst {dimension_numbers = #tpu.dot_dimension_numbers<[1], [0], [0], [1], [0, 0, 1, 1], [], []>} : vector<256x128xbf16>, vector<128x128xbf16>, vector<256x128xf32> -> vector<256x128xf32>
    %c0_7 = arith.constant 0 : index
    %c0_8 = arith.constant 0 : index
    %6 = vector.load %arg4[%c0_7, %c0_8] : memref<1x128xf32, #tpu.memory_space<vmem>>, vector<1x128xf32>
    %7 = vector.broadcast %6 : vector<1x128xf32> to vector<256x128xf32>
    %8 = arith.addf %5, %7 : vector<256x128xf32>
    %c0_9 = arith.constant 0 : index
    %c0_10 = arith.constant 0 : index
    %9 = vector.load %arg5[%c0_9, %c0_10] : memref<128x128xbf16, #tpu.memory_space<vmem>>, vector<128x128xbf16>
    %cst_11 = arith.constant dense<0.000000e+00> : vector<256x128xf32>
    %10 = tpu.matmul %1, %9, %cst_11 {dimension_numbers = #tpu.dot_dimension_numbers<[1], [0], [0], [1], [0, 0, 1, 1], [], []>} : vector<256x128xbf16>, vector<128x128xbf16>, vector<256x128xf32> -> vector<256x128xf32>
    %c0_12 = arith.constant 0 : index
    %c0_13 = arith.constant 0 : index
    %11 = vector.load %arg6[%c0_12, %c0_13] : memref<1x128xf32, #tpu.memory_space<vmem>>, vector<1x128xf32>
    %12 = vector.broadcast %11 : vector<1x128xf32> to vector<256x128xf32>
    %13 = arith.addf %10, %12 : vector<256x128xf32>
    %14 = arith.negf %8 : vector<256x128xf32>
    %15 = math.exp %14 : vector<256x128xf32>
    %cst_14 = arith.constant 1.000000e+00 : f32
    %16 = vector.broadcast %cst_14 : f32 to vector<256x128xf32>
    %17 = arith.addf %16, %15 : vector<256x128xf32>
    %18 = arith.divf %16, %17 : vector<256x128xf32>
    %19 = arith.mulf %18, %13 : vector<256x128xf32>
    %20 = arith.truncf %19 : vector<256x128xf32> to vector<256x128xbf16>
    %c0_15 = arith.constant 0 : index
    %c0_16 = arith.constant 0 : index
    %21 = vector.load %arg7[%c0_15, %c0_16] : memref<128x128xbf16, #tpu.memory_space<vmem>>, vector<128x128xbf16>
    %cst_17 = arith.constant dense<0.000000e+00> : vector<256x128xf32>
    %22 = tpu.matmul %20, %21, %cst_17 {dimension_numbers = #tpu.dot_dimension_numbers<[1], [0], [0], [1], [0, 0, 1, 1], [], []>} : vector<256x128xbf16>, vector<128x128xbf16>, vector<256x128xf32> -> vector<256x128xf32>
    %c0_18 = arith.constant 0 : index
    %c0_19 = arith.constant 0 : index
    %23 = vector.load %arg8[%c0_18, %c0_19] : memref<1x128xf32, #tpu.memory_space<vmem>>, vector<1x128xf32>
    %24 = vector.broadcast %23 : vector<1x128xf32> to vector<256x128xf32>
    %25 = arith.addf %22, %24 : vector<256x128xf32>
    %26 = vector.shape_cast %25 : vector<256x128xf32> to vector<32x8x128xf32>
    %c0_20 = arith.constant 0 : index
    %c0_21 = arith.constant 0 : index
    %c0_22 = arith.constant 0 : index
    %27 = vector.load %arg9[%c0_20, %c0_21, %c0_22] : memref<32x8x128xf32, #tpu.memory_space<vmem>>, vector<32x8x128xf32>
    tpu.vector_store %arg9[%c0_20, %c0_21, %c0_22], %26 {strides = array<i32>} : memref<32x8x128xf32, #tpu.memory_space<vmem>>, vector<32x8x128xf32>,
    return
  }
  func.func @transform_0(%arg0: i32) -> (i32, i32, i32) {
    %c0_i32 = arith.constant 0 : i32
    %c0_i32_0 = arith.constant 0 : i32
    %c0_i32_1 = arith.constant 0 : i32
    return %arg0, %c0_i32, %c0_i32_0 : i32, i32, i32
  }
  func.func @transform_1(%arg0: i32) -> (i32, i32, i32) {
    %c0_i32 = arith.constant 0 : i32
    %c0_i32_0 = arith.constant 0 : i32
    %c0_i32_1 = arith.constant 0 : i32
    return %arg0, %c0_i32, %c0_i32_0 : i32, i32, i32
  }
  func.func @transform_2(%arg0: i32) -> (i32, i32) {
    %c0_i32 = arith.constant 0 : i32
    %c0_i32_0 = arith.constant 0 : i32
    %c0_i32_1 = arith.constant 0 : i32
    return %c0_i32, %c0_i32_0 : i32, i32
  }
  func.func @transform_3(%arg0: i32) -> (i32, i32) {
    %c0_i32 = arith.constant 0 : i32
    %c0_i32_0 = arith.constant 0 : i32
    %c0_i32_1 = arith.constant 0 : i32
    return %c0_i32, %c0_i32_0 : i32, i32
  }
  func.func @transform_4(%arg0: i32) -> (i32, i32) {
    %c0_i32 = arith.constant 0 : i32
    %c0_i32_0 = arith.constant 0 : i32
    %c0_i32_1 = arith.constant 0 : i32
    return %c0_i32, %c0_i32_0 : i32, i32
  }
  func.func @transform_5(%arg0: i32) -> (i32, i32) {
    %c0_i32 = arith.constant 0 : i32
    %c0_i32_0 = arith.constant 0 : i32
    %c0_i32_1 = arith.constant 0 : i32
    return %c0_i32, %c0_i32_0 : i32, i32
  }
  func.func @transform_6(%arg0: i32) -> (i32, i32) {
    %c0_i32 = arith.constant 0 : i32
    %c0_i32_0 = arith.constant 0 : i32
    %c0_i32_1 = arith.constant 0 : i32
    return %c0_i32, %c0_i32_0 : i32, i32
  }
  func.func @transform_7(%arg0: i32) -> (i32, i32) {
    %c0_i32 = arith.constant 0 : i32
    %c0_i32_0 = arith.constant 0 : i32
    %c0_i32_1 = arith.constant 0 : i32
    return %c0_i32, %c0_i32_0 : i32, i32
  }
  func.func @transform_8(%arg0: i32) -> (i32, i32, i32) {
    %c0_i32 = arith.constant 0 : i32
    %c0_i32_0 = arith.constant 0 : i32
    %c0_i32_1 = arith.constant 0 : i32
    return %arg0, %c0_i32, %c0_i32_0 : i32, i32, i32
  }
}

</mosaic_0001>

<llo_original>
// kernel: tpu_custom_call.1
$region0: #{tpu_custom_call.1}
  #allocation0 [shape = 'u32[]', space=smem, size = 0x4, offset = 0x4, fixed_abs, tag = 'smem constant byte address 0x4 - core index']
  #allocation1 [shape = 'u32[144,128]{1,0:T(1,128)}', space=vmem, size = 0x12000, scoped, tag = 'internal scratch']
  %s0 = inlined_call_operand.hbm [shape: bf16[64,8,128], index: 0, kind: input, shape index: {}]
  %s1 = inlined_call_operand.hbm [shape: bf16[64,8,128], index: 1, kind: input, shape index: {}]
  %s2 = inlined_call_operand.hbm [shape: bf16[128,128], index: 2, kind: input, shape index: {}]
  %s3 = inlined_call_operand.vmem [shape: f32[1,128], index: 3, kind: input, shape index: {}]
  %s4 = inlined_call_operand.hbm [shape: bf16[128,128], index: 4, kind: input, shape index: {}]
  %s5 = inlined_call_operand.vmem [shape: f32[1,128], index: 5, kind: input, shape index: {}]
  %s6 = inlined_call_operand.hbm [shape: bf16[128,128], index: 6, kind: input, shape index: {}]
  %s7 = inlined_call_operand.vmem [shape: f32[1,128], index: 7, kind: input, shape index: {}]
  %s8 = inlined_call_operand.hbm [shape: f32[64,8,128], index: 8, kind: output, shape index: {}]
  %s9 = sld [smem:[#allocation0]]
  $region85: #{tpu_custom_call.1} parent=0
    _
  %s11 = ssub.s32 1, %s9
  %s12 = scalar_select 0, %s11, %s9
  $region1: #{tpu_custom_call.1} parent=0
    #allocation2 [shape = 'u8[131072]{0}', space=vmem, size = 0x20000, scoped, tag = 'input window, operand 0']
    #allocation3 [shape = 's32[2]{0}', space=sflag, size = 0x8, scoped, tag = 'scoped memory for tpu_custom_call.1']
    #allocation4 [shape = 's32[2]{0}', space=sflag, size = 0x8, scoped, tag = 'scoped memory for tpu_custom_call.1']
    #allocation5 [shape = 'u8[131072]{0}', space=vmem, size = 0x20000, scoped, tag = 'input window, operand 1']
    #allocation6 [shape = 's32[2]{0}', space=sflag, size = 0x8, scoped, tag = 'scoped memory for tpu_custom_call.1']
    #allocation7 [shape = 'u8[32768]{0}', space=vmem, size = 0x8000, scoped, tag = 'input window, operand 2, single buffered']
    #allocation8 [shape = 'u8[32768]{0}', space=vmem, size = 0x8000, scoped, tag = 'input window, operand 4, single buffered']
    #allocation9 [shape = 's32[1]{0}', space=sflag, size = 0x4, scoped, tag = 'scoped memory for tpu_custom_call.1']
    #allocation10 [shape = 'u8[32768]{0}', space=vmem, size = 0x8000, scoped, tag = 'input window, operand 6, single buffered']
    #allocation11 [shape = 'u8[262144]{0}', space=vmem, size = 0x40000, scoped, tag = 'output window, operand 0']
    %13 = vsyncpa [#allocation3], 0
    %s14 = scalar_lea.sflag [#allocation3], 1
    %15 = vsyncpa %s14, 0
    %16 = vsyncpa [#allocation6], 0
    %s17 = scalar_lea.sflag [#allocation6], 1
    %18 = vsyncpa %s17, 0
    %19 = vsyncpa [#allocation9], 0
    %20 = vsyncpa [#allocation4], 0
    %s21 = scalar_lea.sflag [#allocation4], 1
    %22 = vsyncpa %s21, 0
    loop: start=0, step=1, limit=4
    $region2: #{tpu_custom_call.1} parent=1 // loop_pre_header
      _
    $region3: #{tpu_custom_call.1} parent=1 // loop_header
      %s24 = sphi 0, %s28
      %p25 = scmp.ge.s32.totalorder %s24, 4
      %s34 = sphi 0, %s36
      %s37 = sphi 0, %s34
      %s38 = sphi 0, %s37
      %s54 = sphi 0, %s38
      %s60 = sphi 0, %s62
      %s63 = sphi 0, %s60
      %s64 = sphi 0, %s63
      %s80 = sphi 0, %s64
      %s84 = sphi 0, %s84
      %s86 = sphi 0, %s84
      %s87 = sphi 0, %s86
      %s101 = sphi 0, %s87
      %s105 = sphi 0, %s105
      %s107 = sphi 0, %s105
      %s108 = sphi 0, %s107
      %s122 = sphi 0, %s108
      %s126 = sphi 0, %s126
      %s128 = sphi 0, %s126
      %s129 = sphi 0, %s128
      %s143 = sphi 0, %s129
      %s147 = sphi 0, %s147
      %s149 = sphi 0, %s147
      %s150 = sphi 0, %s149
      %s164 = sphi 0, %s150
      %s168 = sphi 0, %s168
      %s170 = sphi 0, %s168
      %s171 = sphi 0, %s170
      %s185 = sphi 0, %s171
      %s189 = sphi 0, %s189
      %s191 = sphi 0, %s189
      %s192 = sphi 0, %s191
      %s206 = sphi 0, %s192
      %s212 = sphi 0, %s214
      %s215 = sphi 0, %s212
      %s216 = sphi 0, %s215
      %s232 = sphi 0, %s216
    $region4: #{tpu_custom_call.1} parent=1 // loop_header_branch
      %27 = sbr.rel (%p25) target = $region8
    $region5: #{tpu_custom_call.1} parent=1 // loop_body
      %s29 = ssub.s32 %s24, 1
      %s30 = ssub.s32 %s24, 2
      %s31 = sadd.s32 %s24, 1
      %s32 = ssub.s32 %s24, %s31
      %p33 = scmp.eq.s32.totalorder %s32, 0
      %s35 = sadd.s32 %s34, 1
      %s36 = scalar_select %p33, %s34, %s35
      %p39 = pneg %p33
      %p40 = scmp.eq.s32.totalorder %s24, 1
      %p41 = por %p39, %p40
      %p42 = scmp.ne.s32.totalorder %s34, %s37
      %p43 = scmp.eq.s32.totalorder %s24, 0
      %p44 = por %p42, %p43
      %p45 = scmp.ne.s32.totalorder %s34, %s37
      %p46 = scmp.eq.s32.totalorder %s29, 1
      %p47 = por %p45, %p46
      %p48 = scmp.ne.s32.totalorder %s37, %s38
      %p49 = scmp.eq.s32.totalorder %s29, 0
      %p50 = por %p48, %p49
      %p51 = scmp.ne.s32.totalorder %s37, %s38
      %p52 = scmp.eq.s32.totalorder %s30, 1
      %p53 = por %p51, %p52
      %p55 = scmp.ne.s32.totalorder %s38, %s54
      %p56 = scmp.eq.s32.totalorder %s30, 0
      %p57 = por %p55, %p56
      %s58 = ssub.s32 %s24, %s31
      %p59 = scmp.eq.s32.totalorder %s58, 0
      %s61 = sadd.s32 %s60, 1
      %s62 = scalar_select %p59, %s60, %s61
      %p65 = pneg %p59
      %p66 = scmp.eq.s32.totalorder %s24, 1
      %p67 = por %p65, %p66
      %p68 = scmp.ne.s32.totalorder %s60, %s63
      %p69 = scmp.eq.s32.totalorder %s24, 0
      %p70 = por %p68, %p69
      %p71 = scmp.ne.s32.totalorder %s60, %s63
      %p72 = scmp.eq.s32.totalorder %s29, 1
      %p73 = por %p71, %p72
      %p74 = scmp.ne.s32.totalorder %s63, %s64
      %p75 = scmp.eq.s32.totalorder %s29, 0
      %p76 = por %p74, %p75
      %p77 = scmp.ne.s32.totalorder %s63, %s64
      %p78 = scmp.eq.s32.totalorder %s30, 1
      %p79 = por %p77, %p78
      %p81 = scmp.ne.s32.totalorder %s64, %s80
      %p82 = scmp.eq.s32.totalorder %s30, 0
      %p83 = por %p81, %p82
      %s85 = sadd.s32 %s84, 1
      %p88 = scmp.eq.s32.totalorder %s24, 1
      %p89 = scmp.ne.s32.totalorder %s84, %s86
      %p90 = scmp.eq.s32.totalorder %s24, 0
      %p91 = por %p89, %p90
      %p92 = scmp.ne.s32.totalorder %s84, %s86
      %p93 = scmp.eq.s32.totalorder %s29, 1
      %p94 = por %p92, %p93
      %p95 = scmp.ne.s32.totalorder %s86, %s87
      %p96 = scmp.eq.s32.totalorder %s29, 0
      %p97 = por %p95, %p96
      %p98 = scmp.ne.s32.totalorder %s86, %s87
      %p99 = scmp.eq.s32.totalorder %s30, 1
      %p100 = por %p98, %p99
      %p102 = scmp.ne.s32.totalorder %s87, %s101
      %p103 = scmp.eq.s32.totalorder %s30, 0
      %p104 = por %p102, %p103
      %s106 = sadd.s32 %s105, 1
      %p109 = scmp.eq.s32.totalorder %s24, 1
      %p110 = scmp.ne.s32.totalorder %s105, %s107
      %p111 = scmp.eq.s32.totalorder %s24, 0
      %p112 = por %p110, %p111
      %p113 = scmp.ne.s32.totalorder %s105, %s107
      %p114 = scmp.eq.s32.totalorder %s29, 1
      %p115 = por %p113, %p114
      %p116 = scmp.ne.s32.totalorder %s107, %s108
      %p117 = scmp.eq.s32.totalorder %s29, 0
      %p118 = por %p116, %p117
      %p119 = scmp.ne.s32.totalorder %s107, %s108
      %p120 = scmp.eq.s32.totalorder %s30, 1
      %p121 = por %p119, %p120
      %p123 = scmp.ne.s32.totalorder %s108, %s122
      %p124 = scmp.eq.s32.totalorder %s30, 0
      %p125 = por %p123, %p124
      %s127 = sadd.s32 %s126, 1
      %p130 = scmp.eq.s32.totalorder %s24, 1
      %p131 = scmp.ne.s32.totalorder %s126, %s128
      %p132 = scmp.eq.s32.totalorder %s24, 0
      %p133 = por %p131, %p132
      %p134 = scmp.ne.s32.totalorder %s126, %s128
      %p135 = scmp.eq.s32.totalorder %s29, 1
      %p136 = por %p134, %p135
      %p137 = scmp.ne.s32.totalorder %s128, %s129
      %p138 = scmp.eq.s32.totalorder %s29, 0
      %p139 = por %p137, %p138
      %p140 = scmp.ne.s32.totalorder %s128, %s129
      %p141 = scmp.eq.s32.totalorder %s30, 1
      %p142 = por %p140, %p141
      %p144 = scmp.ne.s32.totalorder %s129, %s143
      %p145 = scmp.eq.s32.totalorder %s30, 0
      %p146 = por %p144, %p145
      %s148 = sadd.s32 %s147, 1
      %p151 = scmp.eq.s32.totalorder %s24, 1
      %p152 = scmp.ne.s32.totalorder %s147, %s149
      %p153 = scmp.eq.s32.totalorder %s24, 0
      %p154 = por %p152, %p153
      %p155 = scmp.ne.s32.totalorder %s147, %s149
      %p156 = scmp.eq.s32.totalorder %s29, 1
      %p157 = por %p155, %p156
      %p158 = scmp.ne.s32.totalorder %s149, %s150
      %p159 = scmp.eq.s32.totalorder %s29, 0
      %p160 = por %p158, %p159
      %p161 = scmp.ne.s32.totalorder %s149, %s150
      %p162 = scmp.eq.s32.totalorder %s30, 1
      %p163 = por %p161, %p162
      %p165 = scmp.ne.s32.totalorder %s150, %s164
      %p166 = scmp.eq.s32.totalorder %s30, 0
      %p167 = por %p165, %p166
      %s169 = sadd.s32 %s168, 1
      %p172 = scmp.eq.s32.totalorder %s24, 1
      %p173 = scmp.ne.s32.totalorder %s168, %s170
      %p174 = scmp.eq.s32.totalorder %s24, 0
      %p175 = por %p173, %p174
      %p176 = scmp.ne.s32.totalorder %s168, %s170
      %p177 = scmp.eq.s32.totalorder %s29, 1
      %p178 = por %p176, %p177
      %p179 = scmp.ne.s32.totalorder %s170, %s171
      %p180 = scmp.eq.s32.totalorder %s29, 0
      %p181 = por %p179, %p180
      %p182 = scmp.ne.s32.totalorder %s170, %s171
      %p183 = scmp.eq.s32.totalorder %s30, 1
      %p184 = por %p182, %p183
      %p186 = scmp.ne.s32.totalorder %s171, %s185
      %p187 = scmp.eq.s32.totalorder %s30, 0
      %p188 = por %p186, %p187
      %s190 = sadd.s32 %s189, 1
      %p193 = scmp.eq.s32.totalorder %s24, 1
      %p194 = scmp.ne.s32.totalorder %s189, %s191
      %p195 = scmp.eq.s32.totalorder %s24, 0
      %p196 = por %p194, %p195
      %p197 = scmp.ne.s32.totalorder %s189, %s191
      %p198 = scmp.eq.s32.totalorder %s29, 1
      %p199 = por %p197, %p198
      %p200 = scmp.ne.s32.totalorder %s191, %s192
      %p201 = scmp.eq.s32.totalorder %s29, 0
      %p202 = por %p200, %p201
      %p203 = scmp.ne.s32.totalorder %s191, %s192
      %p204 = scmp.eq.s32.totalorder %s30, 1
      %p205 = por %p203, %p204
      %p207 = scmp.ne.s32.totalorder %s192, %s206
      %p208 = scmp.eq.s32.totalorder %s30, 0
      %p209 = por %p207, %p208
      %s210 = ssub.s32 %s24, %s31
      %p211 = scmp.eq.s32.totalorder %s210, 0
      %s213 = sadd.s32 %s212, 1
      %s214 = scalar_select %p211, %s212, %s213
      %p217 = pneg %p211
      %p218 = scmp.eq.s32.totalorder %s24, 1
      %p219 = por %p217, %p218
      %p220 = scmp.ne.s32.totalorder %s212, %s215
      %p221 = scmp.eq.s32.totalorder %s24, 0
      %p222 = por %p220, %p221
      %p223 = scmp.ne.s32.totalorder %s212, %s215
      %p224 = scmp.eq.s32.totalorder %s29, 1
      %p225 = por %p223, %p224
      %p226 = scmp.ne.s32.totalorder %s215, %s216
      %p227 = scmp.eq.s32.totalorder %s29, 0
      %p228 = por %p226, %p227
      %p229 = scmp.ne.s32.totalorder %s215, %s216
      %p230 = scmp.eq.s32.totalorder %s30, 1
      %p231 = por %p229, %p230
      %p233 = scmp.ne.s32.totalorder %s216, %s232
      %p234 = scmp.eq.s32.totalorder %s30, 0
      %p235 = por %p233, %p234
      %p236 = scmp.le.s32.totalorder 1, %s24
      %p237 = scmp.lt.s32.totalorder %s24, 3
      %p238 = pnand %p236, %p237
      %p239 = pneg %p238
      // Predicated region
      $region9: #{tpu_custom_call.1} parent=5 // pred_check
        _
      $region10: #{tpu_custom_call.1} parent=5 // pred_check_branch
        %241 = sbr.rel (%p238) target = $region12
      $region11: #{tpu_custom_call.1} parent=5 // pred_region
        %s242 = ssub.s32 %s24, 1
        // Predicated region
        $region13: #{tpu_custom_call.1} parent=11 // pred_check
          %p243 = pneg %p97
        $region14: #{tpu_custom_call.1} parent=11 // pred_check_branch
          %245 = sbr.rel (%p243) target = $region16
        $region15: #{tpu_custom_call.1} parent=11 // pred_region
          %s247 = ssub.s32 1024, 1024
          %248 = vsyncadd [#allocation6], %s247
          %s249 = sshll.u32 [#allocation7], 4
          %s250 = int_to_ptr.vmem [resolvable:$true] %s249
          %255 = dma.hbm_to_vmem [thread:$0]  %s2, 1024, %s250, [#allocation6], 64, 64, 4
        $region16: #{tpu_custom_call.1} parent=11 // pred_fallthru
          _
        // Predicated region
        $region17: #{tpu_custom_call.1} parent=11 // pred_check
          %p256 = pneg %p118
        $region18: #{tpu_custom_call.1} parent=11 // pred_check_branch
          %258 = sbr.rel (%p256) target = $region20
        $region19: #{tpu_custom_call.1} parent=11 // pred_region
          _
        $region20: #{tpu_custom_call.1} parent=11 // pred_fallthru
          _
        // Predicated region
        $region21: #{tpu_custom_call.1} parent=11 // pred_check
          %p259 = pneg %p139
        $region22: #{tpu_custom_call.1} parent=11 // pred_check_branch
          %261 = sbr.rel (%p259) target = $region24
        $region23: #{tpu_custom_call.1} parent=11 // pred_region
          %s263 = ssub.s32 1024, 1024
          %264 = vsyncadd [#allocation9], %s263
          %s265 = sshll.u32 [#allocation8], 4
          %s266 = int_to_ptr.vmem [resolvable:$true] %s265
          %271 = dma.hbm_to_vmem [thread:$0]  %s4, 1024, %s266, [#allocation9], 64, 64, 4
        $region24: #{tpu_custom_call.1} parent=11 // pred_fallthru
          _
        // Predicated region
        $region25: #{tpu_custom_call.1} parent=11 // pred_check
          %p272 = pneg %p160
        $region26: #{tpu_custom_call.1} parent=11 // pred_check_branch
          %274 = sbr.rel (%p272) target = $region28
        $region27: #{tpu_custom_call.1} parent=11 // pred_region
          _
        $region28: #{tpu_custom_call.1} parent=11 // pred_fallthru
          _
        // Predicated region
        $region29: #{tpu_custom_call.1} parent=11 // pred_check
          %p275 = pneg %p181
        $region30: #{tpu_custom_call.1} parent=11 // pred_check_branch
          %277 = sbr.rel (%p275) target = $region32
        $region31: #{tpu_custom_call.1} parent=11 // pred_region
          %s279 = ssub.s32 1024, 1024
          %280 = vsyncadd [#allocation9], %s279
          %s281 = sshll.u32 [#allocation10], 4
          %s282 = int_to_ptr.vmem [resolvable:$true] %s281
          %287 = dma.hbm_to_vmem [thread:$0]  %s6, 1024, %s282, [#allocation9], 64, 64, 4
        $region32: #{tpu_custom_call.1} parent=11 // pred_fallthru
          _
        // Predicated region
        $region33: #{tpu_custom_call.1} parent=11 // pred_check
          %p288 = pneg %p202
        $region34: #{tpu_custom_call.1} parent=11 // pred_check_branch
          %290 = sbr.rel (%p288) target = $region36
        $region35: #{tpu_custom_call.1} parent=11 // pred_region
          _
        $region36: #{tpu_custom_call.1} parent=11 // pred_fallthru
          _
      $region12: #{tpu_custom_call.1} parent=5 // pred_fallthru
        _
      %p291 = scmp.lt.s32.totalorder %s24, 2
      // Predicated region
      $region37: #{tpu_custom_call.1} parent=5 // pred_check
        %p292 = pneg %p291
      $region38: #{tpu_custom_call.1} parent=5 // pred_check_branch
        %294 = sbr.rel (%p292) target = $region40
      $region39: #{tpu_custom_call.1} parent=5 // pred_region
        // Predicated region
        $region41: #{tpu_custom_call.1} parent=39 // pred_check
          %p295 = pneg %p44
        $region42: #{tpu_custom_call.1} parent=39 // pred_check_branch
          %297 = sbr.rel (%p295) target = $region44
        $region43: #{tpu_custom_call.1} parent=39 // pred_region
          %s298 = sand.u32 %s34, 1
          %s299 = scalar_lea.sflag [#allocation3], %s298
          %s300 = sand.u32 %s34, 1
          %s301 = smul.addr %s300, 128
          %s302 = scalar_lea.vmem [#allocation2], %s301
          %s303 = smul.u32 32, %s24
          %s305 = ssub.s32 2048, 2048
          %306 = vsyncadd %s299, %s305
          %s307 = smul.addr %s303, 64
          %s308 = scalar_lea.hbm %s0, %s307
          %s309 = sshll.u32 %s302, 4
          %s310 = int_to_ptr.vmem [resolvable:$true] %s309
          %315 = dma.hbm_to_vmem [thread:$0]  %s308, 2048, %s310, %s299, 64, 64, 4
        $region44: #{tpu_custom_call.1} parent=39 // pred_fallthru
          _
        // Predicated region
        $region45: #{tpu_custom_call.1} parent=39 // pred_check
          %p316 = pneg %p70
        $region46: #{tpu_custom_call.1} parent=39 // pred_check_branch
          %318 = sbr.rel (%p316) target = $region48
        $region47: #{tpu_custom_call.1} parent=39 // pred_region
          %s319 = sand.u32 %s24, 1
          %s320 = scalar_lea.sflag [#allocation6], %s319
          %s321 = sand.u32 %s60, 1
          %s322 = smul.addr %s321, 128
          %s323 = scalar_lea.vmem [#allocation5], %s322
          %s324 = smul.u32 32, %s24
          %s326 = ssub.s32 2048, 2048
          %327 = vsyncadd %s320, %s326
          %s328 = smul.addr %s324, 64
          %s329 = scalar_lea.hbm %s1, %s328
          %s330 = sshll.u32 %s323, 4
          %s331 = int_to_ptr.vmem [resolvable:$true] %s330
          %336 = dma.hbm_to_vmem [thread:$0]  %s329, 2048, %s331, %s320, 64, 64, 4
        $region48: #{tpu_custom_call.1} parent=39 // pred_fallthru
          _
      $region40: #{tpu_custom_call.1} parent=5 // pred_fallthru
        _
      %p337 = scmp.le.s32.totalorder 1, %s24
      %p338 = scmp.lt.s32.totalorder %s24, 3
      %p339 = pnand %p337, %p338
      %p340 = pneg %p339
      // Predicated region
      $region49: #{tpu_custom_call.1} parent=5 // pred_check
        _
      $region50: #{tpu_custom_call.1} parent=5 // pred_check_branch
        %342 = sbr.rel (%p339) target = $region52
      $region51: #{tpu_custom_call.1} parent=5 // pred_region
        %s343 = ssub.s32 %s24, 1
        %s344 = sand.u32 %s37, 1
        %s345 = scalar_lea.sflag [#allocation3], %s344
        %s346 = sand.u32 %s37, 1
        %s347 = smul.addr %s346, 128
        %s348 = scalar_lea.vmem [#allocation2], %s347
        // Predicated region
        $region53: #{tpu_custom_call.1} parent=51 // pred_check
          %p349 = pneg %p50
        $region54: #{tpu_custom_call.1} parent=51 // pred_check_branch
          %351 = sbr.rel (%p349) target = $region56
        $region55: #{tpu_custom_call.1} parent=51 // pred_region
          %352 = dma.done %s345, 2048
        $region56: #{tpu_custom_call.1} parent=51 // pred_fallthru
          _
        %s353 = sand.u32 %s29, 1
        %s354 = scalar_lea.sflag [#allocation6], %s353
        %s355 = sand.u32 %s63, 1
        %s356 = smul.addr %s355, 128
        %s357 = scalar_lea.vmem [#allocation5], %s356
        // Predicated region
        $region57: #{tpu_custom_call.1} parent=51 // pred_check
          %p358 = pneg %p76
        $region58: #{tpu_custom_call.1} parent=51 // pred_check_branch
          %360 = sbr.rel (%p358) target = $region60
        $region59: #{tpu_custom_call.1} parent=51 // pred_region
          %361 = dma.done %s354, 2048
        $region60: #{tpu_custom_call.1} parent=51 // pred_fallthru
          _
        // Predicated region
        $region61: #{tpu_custom_call.1} parent=51 // pred_check
          %p362 = pneg %p97
        $region62: #{tpu_custom_call.1} parent=51 // pred_check_branch
          %364 = sbr.rel (%p362) target = $region64
        $region63: #{tpu_custom_call.1} parent=51 // pred_region
          %365 = dma.done [#allocation6], 1024
        $region64: #{tpu_custom_call.1} parent=51 // pred_fallthru
          _
        // Predicated region
        $region65: #{tpu_custom_call.1} parent=51 // pred_check
          %p366 = pneg %p139
        $region66: #{tpu_custom_call.1} parent=51 // pred_check_branch
          %368 = sbr.rel (%p366) target = $region68
        $region67: #{tpu_custom_call.1} parent=51 // pred_region
          %369 = dma.done [#allocation9], 1024
        $region68: #{tpu_custom_call.1} parent=51 // pred_fallthru
          _
        // Predicated region
        $region69: #{tpu_custom_call.1} parent=51 // pred_check
          %p370 = pneg %p181
        $region70: #{tpu_custom_call.1} parent=51 // pred_check_branch
          %372 = sbr.rel (%p370) target = $region72
        $region71: #{tpu_custom_call.1} parent=51 // pred_region
          %373 = dma.done [#allocation9], 1024
        $region72: #{tpu_custom_call.1} parent=51 // pred_fallthru
          _
        %s374 = sand.u32 %s37, 1
        %s375 = scalar_lea.sflag [#allocation3], %s374
        %s376 = sand.u32 %s37, 1
        %s377 = smul.addr %s376, 128
        %s378 = scalar_lea.vmem [#allocation2], %s377
        %p379 = pneg %p50
        %p380 = pneg %p47
        %s381 = sand.u32 %s29, 1
        %s382 = scalar_lea.sflag [#allocation6], %s381
        %s383 = sand.u32 %s63, 1
        %s384 = smul.addr %s383, 128
        %s385 = scalar_lea.vmem [#allocation5], %s384
        %p386 = pneg %p76
        %p387 = pneg %p73
        %p388 = pneg %p97
        %p389 = pneg %p94
        %p390 = pneg %p118
        %p391 = pneg %p115
        %p392 = pneg %p139
        %p393 = pneg %p136
        %p394 = pneg %p160
        %p395 = pneg %p157
        %p396 = pneg %p181
        %p397 = pneg %p178
        %p398 = pneg %p202
        %p399 = pneg %p199
        %p400 = pneg %p228
        %p401 = pneg %p225
        %s402 = sand.u32 %s215, 1
        %s403 = scalar_lea.sflag [#allocation4], %s402
        %s404 = sand.u32 %s215, 1
        %s405 = smul.addr %s404, 256
        %s406 = scalar_lea.vmem [#allocation11], %s405
        %s407 = smul.u32 32, %s29
        %s408 = smul.u32 32, %s29
        %s409 = smul.u32 32, %s29
        %v411 = vld [vmem:[%s348] sm:$0xf]
        %v412 = vld [vmem:[%s348 + $0x4] sm:$0xf]
        %v413 = vld [vmem:[%s348 + $0x8] sm:$0xf]
        %v414 = vld [vmem:[%s348 + $0xc] sm:$0xf]
        %v415 = vld [vmem:[%s348 + $0x10] sm:$0xf]
        %v416 = vld [vmem:[%s348 + $0x14] sm:$0xf]
        %v417 = vld [vmem:[%s348 + $0x18] sm:$0xf]
        %v418 = vld [vmem:[%s348 + $0x1c] sm:$0xf]
        %v419 = vld [vmem:[%s348 + $0x20] sm:$0xf]
        %v420 = vld [vmem:[%s348 + $0x24] sm:$0xf]
        %v421 = vld [vmem:[%s348 + $0x28] sm:$0xf]
        %v422 = vld [vmem:[%s348 + $0x2c] sm:$0xf]
        %v423 = vld [vmem:[%s348 + $0x30] sm:$0xf]
        %v424 = vld [vmem:[%s348 + $0x34] sm:$0xf]
        %v425 = vld [vmem:[%s348 + $0x38] sm:$0xf]
        %v426 = vld [vmem:[%s348 + $0x3c] sm:$0xf]
        %v427 = vld [vmem:[%s348 + $0x40] sm:$0xf]
        %v428 = vld [vmem:[%s348 + $0x44] sm:$0xf]
        %v429 = vld [vmem:[%s348 + $0x48] sm:$0xf]
        %v430 = vld [vmem:[%s348 + $0x4c] sm:$0xf]
        %v431 = vld [vmem:[%s348 + $0x50] sm:$0xf]
        %v432 = vld [vmem:[%s348 + $0x54] sm:$0xf]
        %v433 = vld [vmem:[%s348 + $0x58] sm:$0xf]
        %v434 = vld [vmem:[%s348 + $0x5c] sm:$0xf]
        %v435 = vld [vmem:[%s348 + $0x60] sm:$0xf]
        %v436 = vld [vmem:[%s348 + $0x64] sm:$0xf]
        %v437 = vld [vmem:[%s348 + $0x68] sm:$0xf]
        %v438 = vld [vmem:[%s348 + $0x6c] sm:$0xf]
        %v439 = vld [vmem:[%s348 + $0x70] sm:$0xf]
        %v440 = vld [vmem:[%s348 + $0x74] sm:$0xf]
        %v441 = vld [vmem:[%s348 + $0x78] sm:$0xf]
        %v442 = vld [vmem:[%s348 + $0x7c] sm:$0xf]
        %v443 = vld [vmem:[%s357] sm:$0xf]
        %v444 = vld [vmem:[%s357 + $0x4] sm:$0xf]
        %v445 = vld [vmem:[%s357 + $0x8] sm:$0xf]
        %v446 = vld [vmem:[%s357 + $0xc] sm:$0xf]
        %v447 = vld [vmem:[%s357 + $0x10] sm:$0xf]
        %v448 = vld [vmem:[%s357 + $0x14] sm:$0xf]
        %v449 = vld [vmem:[%s357 + $0x18] sm:$0xf]
        %v450 = vld [vmem:[%s357 + $0x1c] sm:$0xf]
        %v451 = vld [vmem:[%s357 + $0x20] sm:$0xf]
        %v452 = vld [vmem:[%s357 + $0x24] sm:$0xf]
        %v453 = vld [vmem:[%s357 + $0x28] sm:$0xf]
        %v454 = vld [vmem:[%s357 + $0x2c] sm:$0xf]
        %v455 = vld [vmem:[%s357 + $0x30] sm:$0xf]
        %v456 = vld [vmem:[%s357 + $0x34] sm:$0xf]
        %v457 = vld [vmem:[%s357 + $0x38] sm:$0xf]
        %v458 = vld [vmem:[%s357 + $0x3c] sm:$0xf]
        %v459 = vld [vmem:[%s357 + $0x40] sm:$0xf]
        %v460 = vld [vmem:[%s357 + $0x44] sm:$0xf]
        %v461 = vld [vmem:[%s357 + $0x48] sm:$0xf]
        %v462 = vld [vmem:[%s357 + $0x4c] sm:$0xf]
        %v463 = vld [vmem:[%s357 + $0x50] sm:$0xf]
        %v464 = vld [vmem:[%s357 + $0x54] sm:$0xf]
        %v465 = vld [vmem:[%s357 + $0x58] sm:$0xf]
        %v466 = vld [vmem:[%s357 + $0x5c] sm:$0xf]
        %v467 = vld [vmem:[%s357 + $0x60] sm:$0xf]
        %v468 = vld [vmem:[%s357 + $0x64] sm:$0xf]
        %v469 = vld [vmem:[%s357 + $0x68] sm:$0xf]
        %v470 = vld [vmem:[%s357 + $0x6c] sm:$0xf]
        %v471 = vld [vmem:[%s357 + $0x70] sm:$0xf]
        %v472 = vld [vmem:[%s357 + $0x74] sm:$0xf]
        %v473 = vld [vmem:[%s357 + $0x78] sm:$0xf]
        %v474 = vld [vmem:[%s357 + $0x7c] sm:$0xf]
        %v475 = vld [vmem:[#allocation7] sm:$0xf]
        %v476 = vld [vmem:[#allocation7 + $0x4] sm:$0xf]
        %v477 = vld [vmem:[#allocation7 + $0x8] sm:$0xf]
        %v478 = vld [vmem:[#allocation7 + $0xc] sm:$0xf]
        %v479 = vld [vmem:[#allocation7 + $0x10] sm:$0xf]
        %v480 = vld [vmem:[#allocation7 + $0x14] sm:$0xf]
        %v481 = vld [vmem:[#allocation7 + $0x18] sm:$0xf]
        %v482 = vld [vmem:[#allocation7 + $0x1c] sm:$0xf]
        %v483 = vld [vmem:[#allocation7 + $0x20] sm:$0xf]
        %v484 = vld [vmem:[#allocation7 + $0x24] sm:$0xf]
        %v485 = vld [vmem:[#allocation7 + $0x28] sm:$0xf]
        %v486 = vld [vmem:[#allocation7 + $0x2c] sm:$0xf]
        %v487 = vld [vmem:[#allocation7 + $0x30] sm:$0xf]
        %v488 = vld [vmem:[#allocation7 + $0x34] sm:$0xf]
        %v489 = vld [vmem:[#allocation7 + $0x38] sm:$0xf]
        %v490 = vld [vmem:[#allocation7 + $0x3c] sm:$0xf]
        %v491 = vld [vmem:[%s3] sm:$0x1]
        %v493 = vlaneseq
        %v494 = vshrl.u32 %v493, 7
        %v495 = vsub.s32 0, %v494
        %v496 = vrot.slane %v491, %v495
        %v530 = vunpack.c.l.b16 %v443
        %v531 = vunpack.c.l.b16 %v444
        %v532 = vunpack.c.l.b16 %v445
        %v533 = vunpack.c.l.b16 %v446
        %v534 = vunpack.c.l.b16 %v447
        %v535 = vunpack.c.l.b16 %v448
        %v536 = vunpack.c.l.b16 %v449
        %v537 = vunpack.c.l.b16 %v450
        %v538 = vunpack.c.l.b16 %v451
        %v539 = vunpack.c.l.b16 %v452
        %v540 = vunpack.c.l.b16 %v453
        %v541 = vunpack.c.l.b16 %v454
        %v542 = vunpack.c.l.b16 %v455
        %v543 = vunpack.c.l.b16 %v456
        %v544 = vunpack.c.l.b16 %v457
        %v545 = vunpack.c.l.b16 %v458
        %v546 = vunpack.c.l.b16 %v459
        %v547 = vunpack.c.l.b16 %v460
        %v548 = vunpack.c.l.b16 %v461
        %v549 = vunpack.c.l.b16 %v462
        %v550 = vunpack.c.l.b16 %v463
        %v551 = vunpack.c.l.b16 %v464
        %v552 = vunpack.c.l.b16 %v465
        %v553 = vunpack.c.l.b16 %v466
        %v554 = vunpack.c.l.b16 %v467
        %v555 = vunpack.c.l.b16 %v468
        %v556 = vunpack.c.l.b16 %v469
        %v557 = vunpack.c.l.b16 %v470
        %v558 = vunpack.c.l.b16 %v471
        %v559 = vunpack.c.l.b16 %v472
        %v560 = vunpack.c.l.b16 %v473
        %v561 = vunpack.c.l.b16 %v474
        %v562 = vpack.c.b16 %v531, %v530
        %v563 = vpack.c.b16 %v533, %v532
        %v564 = vpack.c.b16 %v535, %v534
        %v565 = vpack.c.b16 %v537, %v536
        %v566 = vpack.c.b16 %v539, %v538
        %v567 = vpack.c.b16 %v541, %v540
        %v568 = vpack.c.b16 %v543, %v542
        %v569 = vpack.c.b16 %v545, %v544
        %v570 = vpack.c.b16 %v547, %v546
        %v571 = vpack.c.b16 %v549, %v548
        %v572 = vpack.c.b16 %v551, %v550
        %v573 = vpack.c.b16 %v553, %v552
        %v574 = vpack.c.b16 %v555, %v554
        %v575 = vpack.c.b16 %v557, %v556
        %v576 = vpack.c.b16 %v559, %v558
        %v577 = vpack.c.b16 %v561, %v560
        %v610 = vunpack.c.l.b16 %v475
        %v611 = vunpack.c.l.b16 %v476
        %v612 = vunpack.c.l.b16 %v477
        %v613 = vunpack.c.l.b16 %v478
        %v614 = vunpack.c.l.b16 %v479
        %v615 = vunpack.c.l.b16 %v480
        %v616 = vunpack.c.l.b16 %v481
        %v617 = vunpack.c.l.b16 %v482
        %v618 = vunpack.c.l.b16 %v483
        %v619 = vunpack.c.l.b16 %v484
        %v620 = vunpack.c.l.b16 %v485
        %v621 = vunpack.c.l.b16 %v486
        %v622 = vunpack.c.l.b16 %v487
        %v623 = vunpack.c.l.b16 %v488
        %v624 = vunpack.c.l.b16 %v489
        %v625 = vunpack.c.l.b16 %v490
        %v626 = vpack.c.b16 %v611, %v610
        %v627 = vpack.c.b16 %v613, %v612
        %v628 = vpack.c.b16 %v615, %v614
        %v629 = vpack.c.b16 %v617, %v616
        %v630 = vpack.c.b16 %v619, %v618
        %v631 = vpack.c.b16 %v621, %v620
        %v632 = vpack.c.b16 %v623, %v622
        %v633 = vpack.c.b16 %v625, %v624
        %642 = vmatprep.subr.bf16.mxu0 0
        %643 = vmatpush1.bf16.msra.mxu0 %v633
        %644 = vmatprep.subr.bf16.mxu0 0
        %645 = vmatpush1.bf16.msra.mxu0 %v632
        %646 = vmatprep.subr.bf16.mxu0 0
        %647 = vmatpush1.bf16.msra.mxu0 %v631
        %648 = vmatprep.subr.bf16.mxu0 0
        %649 = vmatpush1.bf16.msra.mxu0 %v630
        %650 = vmatprep.subr.bf16.mxu0 0
        %651 = vmatpush1.bf16.msra.mxu0 %v629
        %652 = vmatprep.subr.bf16.mxu0 0
        %653 = vmatpush1.bf16.msra.mxu0 %v628
        %654 = vmatprep.subr.bf16.mxu0 0
        %655 = vmatpush1.bf16.msra.mxu0 %v627
        %656 = vmatprep.subr.bf16.mxu0 0
        %657 = vmatpush1.bf16.msra.mxu0 %v626
        %658 = vmatprep.subr.bf16.mxu0 0
        %659 = vmatpush2.bf16.msra.mxu0 0
        %660 = vmatprep.subr.bf16.mxu0 0
        %661 = vmatpush2.bf16.msra.mxu0 0
        %662 = vmatprep.subr.bf16.mxu0 0
        %663 = vmatpush2.bf16.msra.mxu0 0
        %664 = vmatprep.subr.bf16.mxu0 0
        %665 = vmatpush2.bf16.msra.mxu0 0
        %666 = vmatprep.subr.bf16.mxu0 0
        %667 = vmatpush2.bf16.msra.mxu0 0
        %668 = vmatprep.subr.bf16.mxu0 0
        %669 = vmatpush2.bf16.msra.mxu0 0
        %670 = vmatprep.subr.bf16.mxu0 0
        %671 = vmatpush2.bf16.msra.mxu0 0
        %672 = vmatprep.subr.bf16.mxu0 0
        %673 = vmatpush2.bf16.msra.mxu0 0
        %674 = vmatprep.mubr.bf16.mxu0 0
        %675 = vmatmul.mubr.bf16.gmra.mxu0 %v562
        %v676 = vpop.f32.mrf.mxu0
        %v677 = vadd.f32 %v496, %v676
        %v678 = vpop.f32.mrf.mxu0
        %v679 = vpop.f32.mrf.mxu0
        %v680 = vadd.f32 %v496, %v679
        %v681 = vpop.f32.mrf.mxu0
        %682 = vmatprep.mubr.bf16.mxu0 0
        %683 = vmatmul.mubr.bf16.gmra.mxu0 %v563
        %v684 = vpop.f32.mrf.mxu0
        %v685 = vadd.f32 %v496, %v684
        %v686 = vpop.f32.mrf.mxu0
        %v687 = vpop.f32.mrf.mxu0
        %v688 = vadd.f32 %v496, %v687
        %v689 = vpop.f32.mrf.mxu0
        %690 = vmatprep.mubr.bf16.mxu0 0
        %691 = vmatmul.mubr.bf16.gmra.mxu0 %v564
        %v692 = vpop.f32.mrf.mxu0
        %v693 = vadd.f32 %v496, %v692
        %v694 = vpop.f32.mrf.mxu0
        %v695 = vpop.f32.mrf.mxu0
        %v696 = vadd.f32 %v496, %v695
        %v697 = vpop.f32.mrf.mxu0
        %698 = vmatprep.mubr.bf16.mxu0 0
        %699 = vmatmul.mubr.bf16.gmra.mxu0 %v565
        %v700 = vpop.f32.mrf.mxu0
        %v701 = vadd.f32 %v496, %v700
        %v702 = vpop.f32.mrf.mxu0
        %v703 = vpop.f32.mrf.mxu0
        %v704 = vadd.f32 %v496, %v703
        %v705 = vpop.f32.mrf.mxu0
        %706 = vmatprep.mubr.bf16.mxu0 0
        %707 = vmatmul.mubr.bf16.gmra.mxu0 %v566
        %v708 = vpop.f32.mrf.mxu0
        %v709 = vadd.f32 %v496, %v708
        %v710 = vpop.f32.mrf.mxu0
        %v711 = vpop.f32.mrf.mxu0
        %v712 = vadd.f32 %v496, %v711
        %v713 = vpop.f32.mrf.mxu0
        %714 = vmatprep.mubr.bf16.mxu0 0
        %715 = vmatmul.mubr.bf16.gmra.mxu0 %v567
        %v716 = vpop.f32.mrf.mxu0
        %v717 = vadd.f32 %v496, %v716
        %v718 = vpop.f32.mrf.mxu0
        %v719 = vpop.f32.mrf.mxu0
        %v720 = vadd.f32 %v496, %v719
        %v721 = vpop.f32.mrf.mxu0
        %722 = vmatprep.mubr.bf16.mxu0 0
        %723 = vmatmul.mubr.bf16.gmra.mxu0 %v568
        %v724 = vpop.f32.mrf.mxu0
        %v725 = vadd.f32 %v496, %v724
        %v726 = vpop.f32.mrf.mxu0
        %v727 = vpop.f32.mrf.mxu0
        %v728 = vadd.f32 %v496, %v727
        %v729 = vpop.f32.mrf.mxu0
        %730 = vmatprep.mubr.bf16.mxu0 0
        %731 = vmatmul.mubr.bf16.gmra.mxu0 %v569
        %v732 = vpop.f32.mrf.mxu0
        %v733 = vadd.f32 %v496, %v732
        %v734 = vpop.f32.mrf.mxu0
        %v735 = vpop.f32.mrf.mxu0
        %v736 = vadd.f32 %v496, %v735
        %v737 = vpop.f32.mrf.mxu0
        %738 = vmatprep.mubr.bf16.mxu0 0
        %739 = vmatmul.mubr.bf16.gmra.mxu0 %v570
        %v740 = vpop.f32.mrf.mxu0
        %v741 = vadd.f32 %v496, %v740
        %v742 = vpop.f32.mrf.mxu0
        %v743 = vpop.f32.mrf.mxu0
        %v744 = vadd.f32 %v496, %v743
        %v745 = vpop.f32.mrf.mxu0
        %746 = vmatprep.mubr.bf16.mxu0 0
        %747 = vmatmul.mubr.bf16.gmra.mxu0 %v571
        %v748 = vpop.f32.mrf.mxu0
        %v749 = vadd.f32 %v496, %v748
        %v750 = vpop.f32.mrf.mxu0
        %v751 = vpop.f32.mrf.mxu0
        %v752 = vadd.f32 %v496, %v751
        %v753 = vpop.f32.mrf.mxu0
        %754 = vmatprep.mubr.bf16.mxu0 0
        %755 = vmatmul.mubr.bf16.gmra.mxu0 %v572
        %v756 = vpop.f32.mrf.mxu0
        %v757 = vadd.f32 %v496, %v756
        %v758 = vpop.f32.mrf.mxu0
        %v759 = vpop.f32.mrf.mxu0
        %v760 = vadd.f32 %v496, %v759
        %v761 = vpop.f32.mrf.mxu0
        %762 = vmatprep.mubr.bf16.mxu0 0
        %763 = vmatmul.mubr.bf16.gmra.mxu0 %v573
        %v764 = vpop.f32.mrf.mxu0
        %v765 = vadd.f32 %v496, %v764
        %v766 = vpop.f32.mrf.mxu0
        %v767 = vpop.f32.mrf.mxu0
        %v768 = vadd.f32 %v496, %v767
        %v769 = vpop.f32.mrf.mxu0
        %770 = vmatprep.mubr.bf16.mxu0 0
        %771 = vmatmul.mubr.bf16.gmra.mxu0 %v574
        %v772 = vpop.f32.mrf.mxu0
        %v773 = vadd.f32 %v496, %v772
        %v774 = vpop.f32.mrf.mxu0
        %v775 = vpop.f32.mrf.mxu0
        %v776 = vadd.f32 %v496, %v775
        %v777 = vpop.f32.mrf.mxu0
        %778 = vmatprep.mubr.bf16.mxu0 0
        %779 = vmatmul.mubr.bf16.gmra.mxu0 %v575
        %v780 = vpop.f32.mrf.mxu0
        %v781 = vadd.f32 %v496, %v780
        %v782 = vpop.f32.mrf.mxu0
        %v783 = vpop.f32.mrf.mxu0
        %v784 = vadd.f32 %v496, %v783
        %v785 = vpop.f32.mrf.mxu0
        %786 = vmatprep.mubr.bf16.mxu0 0
        %787 = vmatmul.mubr.bf16.gmra.mxu0 %v576
        %v788 = vpop.f32.mrf.mxu0
        %v789 = vadd.f32 %v496, %v788
        %v790 = vpop.f32.mrf.mxu0
        %v791 = vpop.f32.mrf.mxu0
        %v792 = vadd.f32 %v496, %v791
        %v793 = vpop.f32.mrf.mxu0
        %794 = vmatprep.mubr.bf16.mxu0 0
        %795 = vmatmul.mubr.bf16.gmra.mxu0 %v577
        %v796 = vpop.f32.mrf.mxu0
        %v797 = vadd.f32 %v496, %v796
        %v798 = vpop.f32.mrf.mxu0
        %v799 = vpop.f32.mrf.mxu0
        %v800 = vadd.f32 %v496, %v799
        %v801 = vpop.f32.mrf.mxu0
        %802 = vdwg.mxu0
        %v803 = vld [vmem:[#allocation8] sm:$0xf]
        %v804 = vld [vmem:[#allocation8 + $0x4] sm:$0xf]
        %v805 = vld [vmem:[#allocation8 + $0x8] sm:$0xf]
        %v806 = vld [vmem:[#allocation8 + $0xc] sm:$0xf]
        %v807 = vld [vmem:[#allocation8 + $0x10] sm:$0xf]
        %v808 = vld [vmem:[#allocation8 + $0x14] sm:$0xf]
        %v809 = vld [vmem:[#allocation8 + $0x18] sm:$0xf]
        %v810 = vld [vmem:[#allocation8 + $0x1c] sm:$0xf]
        %v811 = vld [vmem:[#allocation8 + $0x20] sm:$0xf]
        %v812 = vld [vmem:[#allocation8 + $0x24] sm:$0xf]
        %v813 = vld [vmem:[#allocation8 + $0x28] sm:$0xf]
        %v814 = vld [vmem:[#allocation8 + $0x2c] sm:$0xf]
        %v815 = vld [vmem:[#allocation8 + $0x30] sm:$0xf]
        %v816 = vld [vmem:[#allocation8 + $0x34] sm:$0xf]
        %v817 = vld [vmem:[#allocation8 + $0x38] sm:$0xf]
        %v818 = vld [vmem:[#allocation8 + $0x3c] sm:$0xf]
        %v819 = vld [vmem:[%s5] sm:$0x1]
        %v821 = vlaneseq
        %v822 = vshrl.u32 %v821, 7
        %v823 = vsub.s32 0, %v822
        %v824 = vrot.slane %v819, %v823
        %v858 = vunpack.c.l.b16 %v411
        %v859 = vunpack.c.l.b16 %v412
        %v860 = vunpack.c.l.b16 %v413
        %v861 = vunpack.c.l.b16 %v414
        %v862 = vunpack.c.l.b16 %v415
        %v863 = vunpack.c.l.b16 %v416
        %v864 = vunpack.c.l.b16 %v417
        %v865 = vunpack.c.l.b16 %v418
        %v866 = vunpack.c.l.b16 %v419
        %v867 = vunpack.c.l.b16 %v420
        %v868 = vunpack.c.l.b16 %v421
        %v869 = vunpack.c.l.b16 %v422
        %v870 = vunpack.c.l.b16 %v423
        %v871 = vunpack.c.l.b16 %v424
        %v872 = vunpack.c.l.b16 %v425
        %v873 = vunpack.c.l.b16 %v426
        %v874 = vunpack.c.l.b16 %v427
        %v875 = vunpack.c.l.b16 %v428
        %v876 = vunpack.c.l.b16 %v429
        %v877 = vunpack.c.l.b16 %v430
        %v878 = vunpack.c.l.b16 %v431
        %v879 = vunpack.c.l.b16 %v432
        %v880 = vunpack.c.l.b16 %v433
        %v881 = vunpack.c.l.b16 %v434
        %v882 = vunpack.c.l.b16 %v435
        %v883 = vunpack.c.l.b16 %v436
        %v884 = vunpack.c.l.b16 %v437
        %v885 = vunpack.c.l.b16 %v438
        %v886 = vunpack.c.l.b16 %v439
        %v887 = vunpack.c.l.b16 %v440
        %v888 = vunpack.c.l.b16 %v441
        %v889 = vunpack.c.l.b16 %v442
        %v890 = vpack.c.b16 %v859, %v858
        %v891 = vpack.c.b16 %v861, %v860
        %v892 = vpack.c.b16 %v863, %v862
        %v893 = vpack.c.b16 %v865, %v864
        %v894 = vpack.c.b16 %v867, %v866
        %v895 = vpack.c.b16 %v869, %v868
        %v896 = vpack.c.b16 %v871, %v870
        %v897 = vpack.c.b16 %v873, %v872
        %v898 = vpack.c.b16 %v875, %v874
        %v899 = vpack.c.b16 %v877, %v876
        %v900 = vpack.c.b16 %v879, %v878
        %v901 = vpack.c.b16 %v881, %v880
        %v902 = vpack.c.b16 %v883, %v882
        %v903 = vpack.c.b16 %v885, %v884
        %v904 = vpack.c.b16 %v887, %v886
        %v905 = vpack.c.b16 %v889, %v888
        %v938 = vunpack.c.l.b16 %v803
        %v939 = vunpack.c.l.b16 %v804
        %v940 = vunpack.c.l.b16 %v805
        %v941 = vunpack.c.l.b16 %v806
        %v942 = vunpack.c.l.b16 %v807
        %v943 = vunpack.c.l.b16 %v808
        %v944 = vunpack.c.l.b16 %v809
        %v945 = vunpack.c.l.b16 %v810
        %v946 = vunpack.c.l.b16 %v811
        %v947 = vunpack.c.l.b16 %v812
        %v948 = vunpack.c.l.b16 %v813
        %v949 = vunpack.c.l.b16 %v814
        %v950 = vunpack.c.l.b16 %v815
        %v951 = vunpack.c.l.b16 %v816
        %v952 = vunpack.c.l.b16 %v817
        %v953 = vunpack.c.l.b16 %v818
        %v954 = vpack.c.b16 %v939, %v938
        %v955 = vpack.c.b16 %v941, %v940
        %v956 = vpack.c.b16 %v943, %v942
        %v957 = vpack.c.b16 %v945, %v944
        %v958 = vpack.c.b16 %v947, %v946
        %v959 = vpack.c.b16 %v949, %v948
        %v960 = vpack.c.b16 %v951, %v950
        %v961 = vpack.c.b16 %v953, %v952
        %970 = vmatprep.subr.bf16.mxu0 0
        %971 = vmatpush1.bf16.msra.mxu0 %v961
        %972 = vmatprep.subr.bf16.mxu0 0
        %973 = vmatpush1.bf16.msra.mxu0 %v960
        %974 = vmatprep.subr.bf16.mxu0 0
        %975 = vmatpush1.bf16.msra.mxu0 %v959
        %976 = vmatprep.subr.bf16.mxu0 0
        %977 = vmatpush1.bf16.msra.mxu0 %v958
        %978 = vmatprep.subr.bf16.mxu0 0
        %979 = vmatpush1.bf16.msra.mxu0 %v957
        %980 = vmatprep.subr.bf16.mxu0 0
        %981 = vmatpush1.bf16.msra.mxu0 %v956
        %982 = vmatprep.subr.bf16.mxu0 0
        %983 = vmatpush1.bf16.msra.mxu0 %v955
        %984 = vmatprep.subr.bf16.mxu0 0
        %985 = vmatpush1.bf16.msra.mxu0 %v954
        %986 = vmatprep.subr.bf16.mxu0 0
        %987 = vmatpush2.bf16.msra.mxu0 0
        %988 = vmatprep.subr.bf16.mxu0 0
        %989 = vmatpush2.bf16.msra.mxu0 0
        %990 = vmatprep.subr.bf16.mxu0 0
        %991 = vmatpush2.bf16.msra.mxu0 0
        %992 = vmatprep.subr.bf16.mxu0 0
        %993 = vmatpush2.bf16.msra.mxu0 0
        %994 = vmatprep.subr.bf16.mxu0 0
        %995 = vmatpush2.bf16.msra.mxu0 0
        %996 = vmatprep.subr.bf16.mxu0 0
        %997 = vmatpush2.bf16.msra.mxu0 0
        %998 = vmatprep.subr.bf16.mxu0 0
        %999 = vmatpush2.bf16.msra.mxu0 0
        %1000 = vmatprep.subr.bf16.mxu0 0
        %1001 = vmatpush2.bf16.msra.mxu0 0
        %1002 = vmatprep.mubr.bf16.mxu0 0
        %1003 = vmatmul.mubr.bf16.gmra.mxu0 %v890
        %v1004 = vpop.f32.mrf.mxu0
        %v1005 = vadd.f32 %v824, %v1004
        %v1006 = vpop.f32.mrf.mxu0
        %v1007 = vpop.f32.mrf.mxu0
        %v1008 = vadd.f32 %v824, %v1007
        %v1009 = vpop.f32.mrf.mxu0
        %1010 = vmatprep.mubr.bf16.mxu0 0
        %1011 = vmatmul.mubr.bf16.gmra.mxu0 %v891
        %v1012 = vpop.f32.mrf.mxu0
        %v1013 = vadd.f32 %v824, %v1012
        %v1014 = vpop.f32.mrf.mxu0
        %v1015 = vpop.f32.mrf.mxu0
        %v1016 = vadd.f32 %v824, %v1015
        %v1017 = vpop.f32.mrf.mxu0
        %1018 = vmatprep.mubr.bf16.mxu0 0
        %1019 = vmatmul.mubr.bf16.gmra.mxu0 %v892
        %v1020 = vpop.f32.mrf.mxu0
        %v1021 = vadd.f32 %v824, %v1020
        %v1022 = vpop.f32.mrf.mxu0
        %v1023 = vpop.f32.mrf.mxu0
        %v1024 = vadd.f32 %v824, %v1023
        %v1025 = vpop.f32.mrf.mxu0
        %1026 = vmatprep.mubr.bf16.mxu0 0
        %1027 = vmatmul.mubr.bf16.gmra.mxu0 %v893
        %v1028 = vpop.f32.mrf.mxu0
        %v1029 = vadd.f32 %v824, %v1028
        %v1030 = vpop.f32.mrf.mxu0
        %v1031 = vpop.f32.mrf.mxu0
        %v1032 = vadd.f32 %v824, %v1031
        %v1033 = vpop.f32.mrf.mxu0
        %1034 = vmatprep.mubr.bf16.mxu0 0
        %1035 = vmatmul.mubr.bf16.gmra.mxu0 %v894
        %v1036 = vpop.f32.mrf.mxu0
        %v1037 = vadd.f32 %v824, %v1036
        %v1038 = vpop.f32.mrf.mxu0
        %v1039 = vpop.f32.mrf.mxu0
        %v1040 = vadd.f32 %v824, %v1039
        %v1041 = vpop.f32.mrf.mxu0
        %1042 = vmatprep.mubr.bf16.mxu0 0
        %1043 = vmatmul.mubr.bf16.gmra.mxu0 %v895
        %v1044 = vpop.f32.mrf.mxu0
        %v1045 = vadd.f32 %v824, %v1044
        %v1046 = vpop.f32.mrf.mxu0
        %v1047 = vpop.f32.mrf.mxu0
        %v1048 = vadd.f32 %v824, %v1047
        %v1049 = vpop.f32.mrf.mxu0
        %1050 = vmatprep.mubr.bf16.mxu0 0
        %1051 = vmatmul.mubr.bf16.gmra.mxu0 %v896
        %v1052 = vpop.f32.mrf.mxu0
        %v1053 = vadd.f32 %v824, %v1052
        %v1054 = vpop.f32.mrf.mxu0
        %v1055 = vpop.f32.mrf.mxu0
        %v1056 = vadd.f32 %v824, %v1055
        %v1057 = vpop.f32.mrf.mxu0
        %1058 = vmatprep.mubr.bf16.mxu0 0
        %1059 = vmatmul.mubr.bf16.gmra.mxu0 %v897
        %v1060 = vpop.f32.mrf.mxu0
        %v1061 = vadd.f32 %v824, %v1060
        %v1062 = vpop.f32.mrf.mxu0
        %v1063 = vpop.f32.mrf.mxu0
        %v1064 = vadd.f32 %v824, %v1063
        %v1065 = vpop.f32.mrf.mxu0
        %1066 = vmatprep.mubr.bf16.mxu0 0
        %1067 = vmatmul.mubr.bf16.gmra.mxu0 %v898
        %v1068 = vpop.f32.mrf.mxu0
        %v1069 = vadd.f32 %v824, %v1068
        %v1070 = vpop.f32.mrf.mxu0
        %v1071 = vpop.f32.mrf.mxu0
        %v1072 = vadd.f32 %v824, %v1071
        %v1073 = vpop.f32.mrf.mxu0
        %1074 = vmatprep.mubr.bf16.mxu0 0
        %1075 = vmatmul.mubr.bf16.gmra.mxu0 %v899
        %v1076 = vpop.f32.mrf.mxu0
        %v1077 = vadd.f32 %v824, %v1076
        %v1078 = vpop.f32.mrf.mxu0
        %v1079 = vpop.f32.mrf.mxu0
        %v1080 = vadd.f32 %v824, %v1079
        %v1081 = vpop.f32.mrf.mxu0
        %1082 = vmatprep.mubr.bf16.mxu0 0
        %1083 = vmatmul.mubr.bf16.gmra.mxu0 %v900
        %v1084 = vpop.f32.mrf.mxu0
        %v1085 = vadd.f32 %v824, %v1084
        %v1086 = vpop.f32.mrf.mxu0
        %v1087 = vpop.f32.mrf.mxu0
        %v1088 = vadd.f32 %v824, %v1087
        %v1089 = vpop.f32.mrf.mxu0
        %1090 = vmatprep.mubr.bf16.mxu0 0
        %1091 = vmatmul.mubr.bf16.gmra.mxu0 %v901
        %v1092 = vpop.f32.mrf.mxu0
        %v1093 = vadd.f32 %v824, %v1092
        %v1094 = vpop.f32.mrf.mxu0
        %v1095 = vpop.f32.mrf.mxu0
        %v1096 = vadd.f32 %v824, %v1095
        %v1097 = vpop.f32.mrf.mxu0
        %1098 = vmatprep.mubr.bf16.mxu0 0
        %1099 = vmatmul.mubr.bf16.gmra.mxu0 %v902
        %v1100 = vpop.f32.mrf.mxu0
        %v1101 = vadd.f32 %v824, %v1100
        %v1102 = vpop.f32.mrf.mxu0
        %v1103 = vpop.f32.mrf.mxu0
        %v1104 = vadd.f32 %v824, %v1103
        %v1105 = vpop.f32.mrf.mxu0
        %1106 = vmatprep.mubr.bf16.mxu0 0
        %1107 = vmatmul.mubr.bf16.gmra.mxu0 %v903
        %v1108 = vpop.f32.mrf.mxu0
        %v1109 = vadd.f32 %v824, %v1108
        %v1110 = vpop.f32.mrf.mxu0
        %v1111 = vpop.f32.mrf.mxu0
        %v1112 = vadd.f32 %v824, %v1111
        %v1113 = vpop.f32.mrf.mxu0
        %1114 = vmatprep.mubr.bf16.mxu0 0
        %1115 = vmatmul.mubr.bf16.gmra.mxu0 %v904
        %v1116 = vpop.f32.mrf.mxu0
        %v1117 = vadd.f32 %v824, %v1116
        %v1118 = vpop.f32.mrf.mxu0
        %v1119 = vpop.f32.mrf.mxu0
        %v1120 = vadd.f32 %v824, %v1119
        %v1121 = vpop.f32.mrf.mxu0
        %1122 = vmatprep.mubr.bf16.mxu0 0
        %1123 = vmatmul.mubr.bf16.gmra.mxu0 %v905
        %v1124 = vpop.f32.mrf.mxu0
        %v1125 = vadd.f32 %v824, %v1124
        %v1126 = vpop.f32.mrf.mxu0
        %v1127 = vpop.f32.mrf.mxu0
        %v1128 = vadd.f32 %v824, %v1127
        %v1129 = vpop.f32.mrf.mxu0
        %1130 = vdwg.mxu0
        %v1131 = vxor.u32 %v677, 2147483648
        %v1132 = vxor.u32 %v680, 2147483648
        %v1133 = vxor.u32 %v685, 2147483648
        %v1134 = vxor.u32 %v688, 2147483648
        %v1135 = vxor.u32 %v693, 2147483648
        %v1136 = vxor.u32 %v696, 2147483648
        %v1137 = vxor.u32 %v701, 2147483648
        %v1138 = vxor.u32 %v704, 2147483648
        %v1139 = vxor.u32 %v709, 2147483648
        %v1140 = vxor.u32 %v712, 2147483648
        %v1141 = vxor.u32 %v717, 2147483648
        %v1142 = vxor.u32 %v720, 2147483648
        %v1143 = vxor.u32 %v725, 2147483648
        %v1144 = vxor.u32 %v728, 2147483648
        %v1145 = vxor.u32 %v733, 2147483648
        %v1146 = vxor.u32 %v736, 2147483648
        %v1147 = vxor.u32 %v741, 2147483648
        %v1148 = vxor.u32 %v744, 2147483648
        %v1149 = vxor.u32 %v749, 2147483648
        %v1150 = vxor.u32 %v752, 2147483648
        %v1151 = vxor.u32 %v757, 2147483648
        %v1152 = vxor.u32 %v760, 2147483648
        %v1153 = vxor.u32 %v765, 2147483648
        %v1154 = vxor.u32 %v768, 2147483648
        %v1155 = vxor.u32 %v773, 2147483648
        %v1156 = vxor.u32 %v776, 2147483648
        %v1157 = vxor.u32 %v781, 2147483648
        %v1158 = vxor.u32 %v784, 2147483648
        %v1159 = vxor.u32 %v789, 2147483648
        %v1160 = vxor.u32 %v792, 2147483648
        %v1161 = vxor.u32 %v797, 2147483648
        %v1162 = vxor.u32 %v800, 2147483648
        %v1163 = vmul.f32 %v1131, 1.442695
        %v1164 = vpow.pop %v1163
        %v1165 = vmul.f32 %v1132, 1.442695
        %v1166 = vpow.pop %v1165
        %v1167 = vmul.f32 %v1133, 1.442695
        %v1168 = vpow.pop %v1167
        %v1169 = vmul.f32 %v1134, 1.442695
        %v1170 = vpow.pop %v1169
        %v1171 = vmul.f32 %v1135, 1.442695
        %v1172 = vpow.pop %v1171
        %v1173 = vmul.f32 %v1136, 1.442695
        %v1174 = vpow.pop %v1173
        %v1175 = vmul.f32 %v1137, 1.442695
        %v1176 = vpow.pop %v1175
        %v1177 = vmul.f32 %v1138, 1.442695
        %v1178 = vpow.pop %v1177
        %v1179 = vmul.f32 %v1139, 1.442695
        %v1180 = vpow.pop %v1179
        %v1181 = vmul.f32 %v1140, 1.442695
        %v1182 = vpow.pop %v1181
        %v1183 = vmul.f32 %v1141, 1.442695
        %v1184 = vpow.pop %v1183
        %v1185 = vmul.f32 %v1142, 1.442695
        %v1186 = vpow.pop %v1185
        %v1187 = vmul.f32 %v1143, 1.442695
        %v1188 = vpow.pop %v1187
        %v1189 = vmul.f32 %v1144, 1.442695
        %v1190 = vpow.pop %v1189
        %v1191 = vmul.f32 %v1145, 1.442695
        %v1192 = vpow.pop %v1191
        %v1193 = vmul.f32 %v1146, 1.442695
        %v1194 = vpow.pop %v1193
        %v1195 = vmul.f32 %v1147, 1.442695
        %v1196 = vpow.pop %v1195
        %v1197 = vmul.f32 %v1148, 1.442695
        %v1198 = vpow.pop %v1197
        %v1199 = vmul.f32 %v1149, 1.442695
        %v1200 = vpow.pop %v1199
        %v1201 = vmul.f32 %v1150, 1.442695
        %v1202 = vpow.pop %v1201
        %v1203 = vmul.f32 %v1151, 1.442695
        %v1204 = vpow.pop %v1203
        %v1205 = vmul.f32 %v1152, 1.442695
        %v1206 = vpow.pop %v1205
        %v1207 = vmul.f32 %v1153, 1.442695
        %v1208 = vpow.pop %v1207
        %v1209 = vmul.f32 %v1154, 1.442695
        %v1210 = vpow.pop %v1209
        %v1211 = vmul.f32 %v1155, 1.442695
        %v1212 = vpow.pop %v1211
        %v1213 = vmul.f32 %v1156, 1.442695
        %v1214 = vpow.pop %v1213
        %v1215 = vmul.f32 %v1157, 1.442695
        %v1216 = vpow.pop %v1215
        %v1217 = vmul.f32 %v1158, 1.442695
        %v1218 = vpow.pop %v1217
        %v1219 = vmul.f32 %v1159, 1.442695
        %v1220 = vpow.pop %v1219
        %v1221 = vmul.f32 %v1160, 1.442695
        %v1222 = vpow.pop %v1221
        %v1223 = vmul.f32 %v1161, 1.442695
        %v1224 = vpow.pop %v1223
        %v1225 = vmul.f32 %v1162, 1.442695
        %v1226 = vpow.pop %v1225
        %v1227 = vadd.f32 %v1164, 1.0
        %v1228 = vadd.f32 %v1166, 1.0
        %v1229 = vadd.f32 %v1168, 1.0
        %v1230 = vadd.f32 %v1170, 1.0
        %v1231 = vadd.f32 %v1172, 1.0
        %v1232 = vadd.f32 %v1174, 1.0
        %v1233 = vadd.f32 %v1176, 1.0
        %v1234 = vadd.f32 %v1178, 1.0
        %v1235 = vadd.f32 %v1180, 1.0
        %v1236 = vadd.f32 %v1182, 1.0
        %v1237 = vadd.f32 %v1184, 1.0
        %v1238 = vadd.f32 %v1186, 1.0
        %v1239 = vadd.f32 %v1188, 1.0
        %v1240 = vadd.f32 %v1190, 1.0
        %v1241 = vadd.f32 %v1192, 1.0
        %v1242 = vadd.f32 %v1194, 1.0
        %v1243 = vadd.f32 %v1196, 1.0
        %v1244 = vadd.f32 %v1198, 1.0
        %v1245 = vadd.f32 %v1200, 1.0
        %v1246 = vadd.f32 %v1202, 1.0
        %v1247 = vadd.f32 %v1204, 1.0
        %v1248 = vadd.f32 %v1206, 1.0
        %v1249 = vadd.f32 %v1208, 1.0
        %v1250 = vadd.f32 %v1210, 1.0
        %v1251 = vadd.f32 %v1212, 1.0
        %v1252 = vadd.f32 %v1214, 1.0
        %v1253 = vadd.f32 %v1216, 1.0
        %v1254 = vadd.f32 %v1218, 1.0
        %v1255 = vadd.f32 %v1220, 1.0
        %v1256 = vadd.f32 %v1222, 1.0
        %v1257 = vadd.f32 %v1224, 1.0
        %v1258 = vadd.f32 %v1226, 1.0
        %v1259 = vrcp.pop %v1227
        %v1260 = vmul.f32 1.0, %v1259
        %v1261 = vrcp.pop %v1228
        %v1262 = vmul.f32 1.0, %v1261
        %v1263 = vrcp.pop %v1229
        %v1264 = vmul.f32 1.0, %v1263
        %v1265 = vrcp.pop %v1230
        %v1266 = vmul.f32 1.0, %v1265
        %v1267 = vrcp.pop %v1231
        %v1268 = vmul.f32 1.0, %v1267
        %v1269 = vrcp.pop %v1232
        %v1270 = vmul.f32 1.0, %v1269
        %v1271 = vrcp.pop %v1233
        %v1272 = vmul.f32 1.0, %v1271
        %v1273 = vrcp.pop %v1234
        %v1274 = vmul.f32 1.0, %v1273
        %v1275 = vrcp.pop %v1235
        %v1276 = vmul.f32 1.0, %v1275
        %v1277 = vrcp.pop %v1236
        %v1278 = vmul.f32 1.0, %v1277
        %v1279 = vrcp.pop %v1237
        %v1280 = vmul.f32 1.0, %v1279
        %v1281 = vrcp.pop %v1238
        %v1282 = vmul.f32 1.0, %v1281
        %v1283 = vrcp.pop %v1239
        %v1284 = vmul.f32 1.0, %v1283
        %v1285 = vrcp.pop %v1240
        %v1286 = vmul.f32 1.0, %v1285
        %v1287 = vrcp.pop %v1241
        %v1288 = vmul.f32 1.0, %v1287
        %v1289 = vrcp.pop %v1242
        %v1290 = vmul.f32 1.0, %v1289
        %v1291 = vrcp.pop %v1243
        %v1292 = vmul.f32 1.0, %v1291
        %v1293 = vrcp.pop %v1244
        %v1294 = vmul.f32 1.0, %v1293
        %v1295 = vrcp.pop %v1245
        %v1296 = vmul.f32 1.0, %v1295
        %v1297 = vrcp.pop %v1246
        %v1298 = vmul.f32 1.0, %v1297
        %v1299 = vrcp.pop %v1247
        %v1300 = vmul.f32 1.0, %v1299
        %v1301 = vrcp.pop %v1248
        %v1302 = vmul.f32 1.0, %v1301
        %v1303 = vrcp.pop %v1249
        %v1304 = vmul.f32 1.0, %v1303
        %v1305 = vrcp.pop %v1250
        %v1306 = vmul.f32 1.0, %v1305
        %v1307 = vrcp.pop %v1251
        %v1308 = vmul.f32 1.0, %v1307
        %v1309 = vrcp.pop %v1252
        %v1310 = vmul.f32 1.0, %v1309
        %v1311 = vrcp.pop %v1253
        %v1312 = vmul.f32 1.0, %v1311
        %v1313 = vrcp.pop %v1254
        %v1314 = vmul.f32 1.0, %v1313
        %v1315 = vrcp.pop %v1255
        %v1316 = vmul.f32 1.0, %v1315
        %v1317 = vrcp.pop %v1256
        %v1318 = vmul.f32 1.0, %v1317
        %v1319 = vrcp.pop %v1257
        %v1320 = vmul.f32 1.0, %v1319
        %v1321 = vrcp.pop %v1258
        %v1322 = vmul.f32 1.0, %v1321
        %v1323 = vmul.f32 %v1260, %v1005
        %v1324 = vmul.f32 %v1262, %v1008
        %v1325 = vmul.f32 %v1264, %v1013
        %v1326 = vmul.f32 %v1266, %v1016
        %v1327 = vmul.f32 %v1268, %v1021
        %v1328 = vmul.f32 %v1270, %v1024
        %v1329 = vmul.f32 %v1272, %v1029
        %v1330 = vmul.f32 %v1274, %v1032
        %v1331 = vmul.f32 %v1276, %v1037
        %v1332 = vmul.f32 %v1278, %v1040
        %v1333 = vmul.f32 %v1280, %v1045
        %v1334 = vmul.f32 %v1282, %v1048
        %v1335 = vmul.f32 %v1284, %v1053
        %v1336 = vmul.f32 %v1286, %v1056
        %v1337 = vmul.f32 %v1288, %v1061
        %v1338 = vmul.f32 %v1290, %v1064
        %v1339 = vmul.f32 %v1292, %v1069
        %v1340 = vmul.f32 %v1294, %v1072
        %v1341 = vmul.f32 %v1296, %v1077
        %v1342 = vmul.f32 %v1298, %v1080
        %v1343 = vmul.f32 %v1300, %v1085
        %v1344 = vmul.f32 %v1302, %v1088
        %v1345 = vmul.f32 %v1304, %v1093
        %v1346 = vmul.f32 %v1306, %v1096
        %v1347 = vmul.f32 %v1308, %v1101
        %v1348 = vmul.f32 %v1310, %v1104
        %v1349 = vmul.f32 %v1312, %v1109
        %v1350 = vmul.f32 %v1314, %v1112
        %v1351 = vmul.f32 %v1316, %v1117
        %v1352 = vmul.f32 %v1318, %v1120
        %v1353 = vmul.f32 %v1320, %v1125
        %v1354 = vmul.f32 %v1322, %v1128
        %v1355 = vpack.c.bf16 %v1324, %v1323
        %v1356 = vpack.c.bf16 %v1326, %v1325
        %v1357 = vpack.c.bf16 %v1328, %v1327
        %v1358 = vpack.c.bf16 %v1330, %v1329
        %v1359 = vpack.c.bf16 %v1332, %v1331
        %v1360 = vpack.c.bf16 %v1334, %v1333
        %v1361 = vpack.c.bf16 %v1336, %v1335
        %v1362 = vpack.c.bf16 %v1338, %v1337
        %v1363 = vpack.c.bf16 %v1340, %v1339
        %v1364 = vpack.c.bf16 %v1342, %v1341
        %v1365 = vpack.c.bf16 %v1344, %v1343
        %v1366 = vpack.c.bf16 %v1346, %v1345
        %v1367 = vpack.c.bf16 %v1348, %v1347
        %v1368 = vpack.c.bf16 %v1350, %v1349
        %v1369 = vpack.c.bf16 %v1352, %v1351
        %v1370 = vpack.c.bf16 %v1354, %v1353
        %v1371 = vld [vmem:[#allocation10] sm:$0xf]
        %v1372 = vld [vmem:[#allocation10 + $0x4] sm:$0xf]
        %v1373 = vld [vmem:[#allocation10 + $0x8] sm:$0xf]
        %v1374 = vld [vmem:[#allocation10 + $0xc] sm:$0xf]
        %v1375 = vld [vmem:[#allocation10 + $0x10] sm:$0xf]
        %v1376 = vld [vmem:[#allocation10 + $0x14] sm:$0xf]
        %v1377 = vld [vmem:[#allocation10 + $0x18] sm:$0xf]
        %v1378 = vld [vmem:[#allocation10 + $0x1c] sm:$0xf]
        %v1379 = vld [vmem:[#allocation10 + $0x20] sm:$0xf]
        %v1380 = vld [vmem:[#allocation10 + $0x24] sm:$0xf]
        %v1381 = vld [vmem:[#allocation10 + $0x28] sm:$0xf]
        %v1382 = vld [vmem:[#allocation10 + $0x2c] sm:$0xf]
        %v1383 = vld [vmem:[#allocation10 + $0x30] sm:$0xf]
        %v1384 = vld [vmem:[#allocation10 + $0x34] sm:$0xf]
        %v1385 = vld [vmem:[#allocation10 + $0x38] sm:$0xf]
        %v1386 = vld [vmem:[#allocation10 + $0x3c] sm:$0xf]
        %v1387 = vld [vmem:[%s7] sm:$0x1]
        %v1389 = vlaneseq
        %v1390 = vshrl.u32 %v1389, 7
        %v1391 = vsub.s32 0, %v1390
        %v1392 = vrot.slane %v1387, %v1391
        %v1410 = vunpack.c.l.b16 %v1371
        %v1411 = vunpack.c.l.b16 %v1372
        %v1412 = vunpack.c.l.b16 %v1373
        %v1413 = vunpack.c.l.b16 %v1374
        %v1414 = vunpack.c.l.b16 %v1375
        %v1415 = vunpack.c.l.b16 %v1376
        %v1416 = vunpack.c.l.b16 %v1377
        %v1417 = vunpack.c.l.b16 %v1378
        %v1418 = vunpack.c.l.b16 %v1379
        %v1419 = vunpack.c.l.b16 %v1380
        %v1420 = vunpack.c.l.b16 %v1381
        %v1421 = vunpack.c.l.b16 %v1382
        %v1422 = vunpack.c.l.b16 %v1383
        %v1423 = vunpack.c.l.b16 %v1384
        %v1424 = vunpack.c.l.b16 %v1385
        %v1425 = vunpack.c.l.b16 %v1386
        %v1426 = vpack.c.b16 %v1411, %v1410
        %v1427 = vpack.c.b16 %v1413, %v1412
        %v1428 = vpack.c.b16 %v1415, %v1414
        %v1429 = vpack.c.b16 %v1417, %v1416
        %v1430 = vpack.c.b16 %v1419, %v1418
        %v1431 = vpack.c.b16 %v1421, %v1420
        %v1432 = vpack.c.b16 %v1423, %v1422
        %v1433 = vpack.c.b16 %v1425, %v1424
        %1442 = vmatprep.subr.bf16.mxu0 0
        %1443 = vmatpush1.bf16.msra.mxu0 %v1433
        %1444 = vmatprep.subr.bf16.mxu0 0
        %1445 = vmatpush1.bf16.msra.mxu0 %v1432
        %1446 = vmatprep.subr.bf16.mxu0 0
        %1447 = vmatpush1.bf16.msra.mxu0 %v1431
        %1448 = vmatprep.subr.bf16.mxu0 0
        %1449 = vmatpush1.bf16.msra.mxu0 %v1430
        %1450 = vmatprep.subr.bf16.mxu0 0
        %1451 = vmatpush1.bf16.msra.mxu0 %v1429
        %1452 = vmatprep.subr.bf16.mxu0 0
        %1453 = vmatpush1.bf16.msra.mxu0 %v1428
        %1454 = vmatprep.subr.bf16.mxu0 0
        %1455 = vmatpush1.bf16.msra.mxu0 %v1427
        %1456 = vmatprep.subr.bf16.mxu0 0
        %1457 = vmatpush1.bf16.msra.mxu0 %v1426
        %1458 = vmatprep.subr.bf16.mxu0 0
        %1459 = vmatpush2.bf16.msra.mxu0 0
        %1460 = vmatprep.subr.bf16.mxu0 0
        %1461 = vmatpush2.bf16.msra.mxu0 0
        %1462 = vmatprep.subr.bf16.mxu0 0
        %1463 = vmatpush2.bf16.msra.mxu0 0
        %1464 = vmatprep.subr.bf16.mxu0 0
        %1465 = vmatpush2.bf16.msra.mxu0 0
        %1466 = vmatprep.subr.bf16.mxu0 0
        %1467 = vmatpush2.bf16.msra.mxu0 0
        %1468 = vmatprep.subr.bf16.mxu0 0
        %1469 = vmatpush2.bf16.msra.mxu0 0
        %1470 = vmatprep.subr.bf16.mxu0 0
        %1471 = vmatpush2.bf16.msra.mxu0 0
        %1472 = vmatprep.subr.bf16.mxu0 0
        %1473 = vmatpush2.bf16.msra.mxu0 0
        %1474 = vmatprep.mubr.bf16.mxu0 0
        %1475 = vmatmul.mubr.bf16.gmra.mxu0 %v1355
        %v1476 = vpop.f32.mrf.mxu0
        %v1477 = vadd.f32 %v1392, %v1476
        %v1478 = vpop.f32.mrf.mxu0
        %v1479 = vpop.f32.mrf.mxu0
        %v1480 = vadd.f32 %v1392, %v1479
        %v1481 = vpop.f32.mrf.mxu0
        %1482 = vmatprep.mubr.bf16.mxu0 0
        %1483 = vmatmul.mubr.bf16.gmra.mxu0 %v1356
        %v1484 = vpop.f32.mrf.mxu0
        %v1485 = vadd.f32 %v1392, %v1484
        %v1486 = vpop.f32.mrf.mxu0
        %v1487 = vpop.f32.mrf.mxu0
        %v1488 = vadd.f32 %v1392, %v1487
        %v1489 = vpop.f32.mrf.mxu0
        %1490 = vmatprep.mubr.bf16.mxu0 0
        %1491 = vmatmul.mubr.bf16.gmra.mxu0 %v1357
        %v1492 = vpop.f32.mrf.mxu0
        %v1493 = vadd.f32 %v1392, %v1492
        %v1494 = vpop.f32.mrf.mxu0
        %v1495 = vpop.f32.mrf.mxu0
        %v1496 = vadd.f32 %v1392, %v1495
        %v1497 = vpop.f32.mrf.mxu0
        %1498 = vmatprep.mubr.bf16.mxu0 0
        %1499 = vmatmul.mubr.bf16.gmra.mxu0 %v1358
        %v1500 = vpop.f32.mrf.mxu0
        %v1501 = vadd.f32 %v1392, %v1500
        %v1502 = vpop.f32.mrf.mxu0
        %v1503 = vpop.f32.mrf.mxu0
        %v1504 = vadd.f32 %v1392, %v1503
        %v1505 = vpop.f32.mrf.mxu0
        %1506 = vmatprep.mubr.bf16.mxu0 0
        %1507 = vmatmul.mubr.bf16.gmra.mxu0 %v1359
        %v1508 = vpop.f32.mrf.mxu0
        %v1509 = vadd.f32 %v1392, %v1508
        %v1510 = vpop.f32.mrf.mxu0
        %v1511 = vpop.f32.mrf.mxu0
        %v1512 = vadd.f32 %v1392, %v1511
        %v1513 = vpop.f32.mrf.mxu0
        %1514 = vmatprep.mubr.bf16.mxu0 0
        %1515 = vmatmul.mubr.bf16.gmra.mxu0 %v1360
        %v1516 = vpop.f32.mrf.mxu0
        %v1517 = vadd.f32 %v1392, %v1516
        %v1518 = vpop.f32.mrf.mxu0
        %v1519 = vpop.f32.mrf.mxu0
        %v1520 = vadd.f32 %v1392, %v1519
        %v1521 = vpop.f32.mrf.mxu0
        %1522 = vmatprep.mubr.bf16.mxu0 0
        %1523 = vmatmul.mubr.bf16.gmra.mxu0 %v1361
        %v1524 = vpop.f32.mrf.mxu0
        %v1525 = vadd.f32 %v1392, %v1524
        %v1526 = vpop.f32.mrf.mxu0
        %v1527 = vpop.f32.mrf.mxu0
        %v1528 = vadd.f32 %v1392, %v1527
        %v1529 = vpop.f32.mrf.mxu0
        %1530 = vmatprep.mubr.bf16.mxu0 0
        %1531 = vmatmul.mubr.bf16.gmra.mxu0 %v1362
        %v1532 = vpop.f32.mrf.mxu0
        %v1533 = vadd.f32 %v1392, %v1532
        %v1534 = vpop.f32.mrf.mxu0
        %v1535 = vpop.f32.mrf.mxu0
        %v1536 = vadd.f32 %v1392, %v1535
        %v1537 = vpop.f32.mrf.mxu0
        %1538 = vmatprep.mubr.bf16.mxu0 0
        %1539 = vmatmul.mubr.bf16.gmra.mxu0 %v1363
        %v1540 = vpop.f32.mrf.mxu0
        %v1541 = vadd.f32 %v1392, %v1540
        %v1542 = vpop.f32.mrf.mxu0
        %v1543 = vpop.f32.mrf.mxu0
        %v1544 = vadd.f32 %v1392, %v1543
        %v1545 = vpop.f32.mrf.mxu0
        %1546 = vmatprep.mubr.bf16.mxu0 0
        %1547 = vmatmul.mubr.bf16.gmra.mxu0 %v1364
        %v1548 = vpop.f32.mrf.mxu0
        %v1549 = vadd.f32 %v1392, %v1548
        %v1550 = vpop.f32.mrf.mxu0
        %v1551 = vpop.f32.mrf.mxu0
        %v1552 = vadd.f32 %v1392, %v1551
        %v1553 = vpop.f32.mrf.mxu0
        %1554 = vmatprep.mubr.bf16.mxu0 0
        %1555 = vmatmul.mubr.bf16.gmra.mxu0 %v1365
        %v1556 = vpop.f32.mrf.mxu0
        %v1557 = vadd.f32 %v1392, %v1556
        %v1558 = vpop.f32.mrf.mxu0
        %v1559 = vpop.f32.mrf.mxu0
        %v1560 = vadd.f32 %v1392, %v1559
        %v1561 = vpop.f32.mrf.mxu0
        %1562 = vmatprep.mubr.bf16.mxu0 0
        %1563 = vmatmul.mubr.bf16.gmra.mxu0 %v1366
        %v1564 = vpop.f32.mrf.mxu0
        %v1565 = vadd.f32 %v1392, %v1564
        %v1566 = vpop.f32.mrf.mxu0
        %v1567 = vpop.f32.mrf.mxu0
        %v1568 = vadd.f32 %v1392, %v1567
        %v1569 = vpop.f32.mrf.mxu0
        %1570 = vmatprep.mubr.bf16.mxu0 0
        %1571 = vmatmul.mubr.bf16.gmra.mxu0 %v1367
        %v1572 = vpop.f32.mrf.mxu0
        %v1573 = vadd.f32 %v1392, %v1572
        %v1574 = vpop.f32.mrf.mxu0
        %v1575 = vpop.f32.mrf.mxu0
        %v1576 = vadd.f32 %v1392, %v1575
        %v1577 = vpop.f32.mrf.mxu0
        %1578 = vmatprep.mubr.bf16.mxu0 0
        %1579 = vmatmul.mubr.bf16.gmra.mxu0 %v1368
        %v1580 = vpop.f32.mrf.mxu0
        %v1581 = vadd.f32 %v1392, %v1580
        %v1582 = vpop.f32.mrf.mxu0
        %v1583 = vpop.f32.mrf.mxu0
        %v1584 = vadd.f32 %v1392, %v1583
        %v1585 = vpop.f32.mrf.mxu0
        %1586 = vmatprep.mubr.bf16.mxu0 0
        %1587 = vmatmul.mubr.bf16.gmra.mxu0 %v1369
        %v1588 = vpop.f32.mrf.mxu0
        %v1589 = vadd.f32 %v1392, %v1588
        %v1590 = vpop.f32.mrf.mxu0
        %v1591 = vpop.f32.mrf.mxu0
        %v1592 = vadd.f32 %v1392, %v1591
        %v1593 = vpop.f32.mrf.mxu0
        %1594 = vmatprep.mubr.bf16.mxu0 0
        %1595 = vmatmul.mubr.bf16.gmra.mxu0 %v1370
        %v1596 = vpop.f32.mrf.mxu0
        %v1597 = vadd.f32 %v1392, %v1596
        %v1598 = vpop.f32.mrf.mxu0
        %v1599 = vpop.f32.mrf.mxu0
        %v1600 = vadd.f32 %v1392, %v1599
        %v1601 = vpop.f32.mrf.mxu0
        %1602 = vdwg.mxu0
        %1603 = vst [vmem:[%s406] sm:$0xff] %v1477
        %1604 = vst [vmem:[%s406 + $0x8] sm:$0xff] %v1480
        %1605 = vst [vmem:[%s406 + $0x10] sm:$0xff] %v1485
        %1606 = vst [vmem:[%s406 + $0x18] sm:$0xff] %v1488
        %1607 = vst [vmem:[%s406 + $0x20] sm:$0xff] %v1493
        %1608 = vst [vmem:[%s406 + $0x28] sm:$0xff] %v1496
        %1609 = vst [vmem:[%s406 + $0x30] sm:$0xff] %v1501
        %1610 = vst [vmem:[%s406 + $0x38] sm:$0xff] %v1504
        %1611 = vst [vmem:[%s406 + $0x40] sm:$0xff] %v1509
        %1612 = vst [vmem:[%s406 + $0x48] sm:$0xff] %v1512
        %1613 = vst [vmem:[%s406 + $0x50] sm:$0xff] %v1517
        %1614 = vst [vmem:[%s406 + $0x58] sm:$0xff] %v1520
        %1615 = vst [vmem:[%s406 + $0x60] sm:$0xff] %v1525
        %1616 = vst [vmem:[%s406 + $0x68] sm:$0xff] %v1528
        %1617 = vst [vmem:[%s406 + $0x70] sm:$0xff] %v1533
        %1618 = vst [vmem:[%s406 + $0x78] sm:$0xff] %v1536
        %1619 = vst [vmem:[%s406 + $0x80] sm:$0xff] %v1541
        %1620 = vst [vmem:[%s406 + $0x88] sm:$0xff] %v1544
        %1621 = vst [vmem:[%s406 + $0x90] sm:$0xff] %v1549
        %1622 = vst [vmem:[%s406 + $0x98] sm:$0xff] %v1552
        %1623 = vst [vmem:[%s406 + $0xa0] sm:$0xff] %v1557
        %1624 = vst [vmem:[%s406 + $0xa8] sm:$0xff] %v1560
        %1625 = vst [vmem:[%s406 + $0xb0] sm:$0xff] %v1565
        %1626 = vst [vmem:[%s406 + $0xb8] sm:$0xff] %v1568
        %1627 = vst [vmem:[%s406 + $0xc0] sm:$0xff] %v1573
        %1628 = vst [vmem:[%s406 + $0xc8] sm:$0xff] %v1576
        %1629 = vst [vmem:[%s406 + $0xd0] sm:$0xff] %v1581
        %1630 = vst [vmem:[%s406 + $0xd8] sm:$0xff] %v1584
        %1631 = vst [vmem:[%s406 + $0xe0] sm:$0xff] %v1589
        %1632 = vst [vmem:[%s406 + $0xe8] sm:$0xff] %v1592
        %1633 = vst [vmem:[%s406 + $0xf0] sm:$0xff] %v1597
        %1634 = vst [vmem:[%s406 + $0xf8] sm:$0xff] %v1600
        %s1635 = sand.u32 %s215, 1
        %s1636 = scalar_lea.sflag [#allocation4], %s1635
        %s1637 = sand.u32 %s215, 1
        %s1638 = smul.addr %s1637, 256
        %s1639 = scalar_lea.vmem [#allocation11], %s1638
        // Predicated region
        $region73: #{tpu_custom_call.1} parent=51 // pred_check
          %p1640 = pneg %p225
        $region74: #{tpu_custom_call.1} parent=51 // pred_check_branch
          %1642 = sbr.rel (%p1640) target = $region76
        $region75: #{tpu_custom_call.1} parent=51 // pred_region
          %s1643 = smul.u32 32, %s29
          %s1645 = ssub.s32 4096, 4096
          %1646 = vsyncadd %s1636, %s1645
          %s1647 = smul.addr %s1643, 128
          %s1648 = scalar_lea.hbm %s8, %s1647
          %s1649 = sshll.u32 %s1639, 4
          %s1650 = int_to_ptr.vmem [resolvable:$true] %s1649
          %1655 = dma.vmem_to_hbm [thread:$0]  %s1650, 4096, %s1648, %s1636, 128, 128, 8
        $region76: #{tpu_custom_call.1} parent=51 // pred_fallthru
          _
      $region52: #{tpu_custom_call.1} parent=5 // pred_fallthru
        _
      %p1656 = scmp.le.s32.totalorder 2, %s24
      // Predicated region
      $region77: #{tpu_custom_call.1} parent=5 // pred_check
        %p1657 = pneg %p1656
      $region78: #{tpu_custom_call.1} parent=5 // pred_check_branch
        %1659 = sbr.rel (%p1657) target = $region80
      $region79: #{tpu_custom_call.1} parent=5 // pred_region
        %s1660 = ssub.s32 %s24, 2
        // Predicated region
        $region81: #{tpu_custom_call.1} parent=79 // pred_check
          %p1661 = pneg %p231
        $region82: #{tpu_custom_call.1} parent=79 // pred_check_branch
          %1663 = sbr.rel (%p1661) target = $region84
        $region83: #{tpu_custom_call.1} parent=79 // pred_region
          %s1664 = sand.u32 %s216, 1
          %s1665 = scalar_lea.sflag [#allocation4], %s1664
          %s1666 = sand.u32 %s216, 1
          %s1667 = smul.addr %s1666, 256
          %s1668 = scalar_lea.vmem [#allocation11], %s1667
          %1669 = dma.done %s1665, 4096
        $region84: #{tpu_custom_call.1} parent=79 // pred_fallthru
          _
      $region80: #{tpu_custom_call.1} parent=5 // pred_fallthru
        _
    $region6: #{tpu_custom_call.1} parent=1 // loop_footer
      %s28 = sadd.s32 1, %s24
    $region7: #{tpu_custom_call.1} parent=1 // loop_footer_branch
      %23 = sbr.rel target = $region3
    $region8: #{tpu_custom_call.1} parent=1 // loop_exit
      _
    %1670 = vsyncpa [#allocation3], 1
    %s1671 = scalar_lea.sflag [#allocation3], 1
    %1672 = vsyncpa %s1671, 1
    %1673 = vsyncpa [#allocation6], 1
    %s1674 = scalar_lea.sflag [#allocation6], 1
    %1675 = vsyncpa %s1674, 1
    %1676 = vsyncpa [#allocation9], 1
    %1677 = vsyncpa [#allocation4], 1
    %s1678 = scalar_lea.sflag [#allocation4], 1
    %1679 = vsyncpa %s1678, 1

// kernel: tpu_custom_call.1
$region0: #{tpu_custom_call.1}
  #allocation0 [shape = 'u32[]', space=smem, size = 0x4, offset = 0x4, fixed_abs, tag = 'smem constant byte address 0x4 - core index']
  #allocation1 [shape = 'u32[144,128]{1,0:T(1,128)}', space=vmem, size = 0x12000, scoped, tag = 'internal scratch']
  %s0 = inlined_call_operand.hbm [shape: bf16[64,8,128], index: 0, kind: input, shape index: {}]
  %s1 = inlined_call_operand.hbm [shape: bf16[64,8,128], index: 1, kind: input, shape index: {}]
  %s2 = inlined_call_operand.hbm [shape: bf16[128,128], index: 2, kind: input, shape index: {}]
  %s3 = inlined_call_operand.vmem [shape: f32[1,128], index: 3, kind: input, shape index: {}]
  %s4 = inlined_call_operand.hbm [shape: bf16[128,128], index: 4, kind: input, shape index: {}]
  %s5 = inlined_call_operand.vmem [shape: f32[1,128], index: 5, kind: input, shape index: {}]
  %s6 = inlined_call_operand.hbm [shape: bf16[128,128], index: 6, kind: input, shape index: {}]
  %s7 = inlined_call_operand.vmem [shape: f32[1,128], index: 7, kind: input, shape index: {}]
  %s8 = inlined_call_operand.hbm [shape: f32[64,8,128], index: 8, kind: output, shape index: {}]
  %s9 = sld [smem:[#allocation0]]
  $region85: #{tpu_custom_call.1} parent=0
    _
  %s11 = ssub.s32 1, %s9
  %s12 = scalar_select 0, %s11, %s9
  $region1: #{tpu_custom_call.1} parent=0
    #allocation2 [shape = 'u8[131072]{0}', space=vmem, size = 0x20000, scoped, tag = 'input window, operand 0']
    #allocation3 [shape = 's32[2]{0}', space=sflag, size = 0x8, scoped, tag = 'scoped memory for tpu_custom_call.1']
    #allocation4 [shape = 's32[2]{0}', space=sflag, size = 0x8, scoped, tag = 'scoped memory for tpu_custom_call.1']
    #allocation5 [shape = 'u8[131072]{0}', space=vmem, size = 0x20000, scoped, tag = 'input window, operand 1']
    #allocation6 [shape = 's32[2]{0}', space=sflag, size = 0x8, scoped, tag = 'scoped memory for tpu_custom_call.1']
    #allocation7 [shape = 'u8[32768]{0}', space=vmem, size = 0x8000, scoped, tag = 'input window, operand 2, single buffered']
    #allocation8 [shape = 'u8[32768]{0}', space=vmem, size = 0x8000, scoped, tag = 'input window, operand 4, single buffered']
    #allocation9 [shape = 's32[1]{0}', space=sflag, size = 0x4, scoped, tag = 'scoped memory for tpu_custom_call.1']
    #allocation10 [shape = 'u8[32768]{0}', space=vmem, size = 0x8000, scoped, tag = 'input window, operand 6, single buffered']
    #allocation11 [shape = 'u8[262144]{0}', space=vmem, size = 0x40000, scoped, tag = 'output window, operand 0']
    %13 = vsyncpa [#allocation3], 0
    %s14 = scalar_lea.sflag [#allocation3], 1
    %15 = vsyncpa %s14, 0
    %16 = vsyncpa [#allocation6], 0
    %s17 = scalar_lea.sflag [#allocation6], 1
    %18 = vsyncpa %s17, 0
    %19 = vsyncpa [#allocation9], 0
    %20 = vsyncpa [#allocation4], 0
    %s21 = scalar_lea.sflag [#allocation4], 1
    %22 = vsyncpa %s21, 0
    loop: start=0, step=1, limit=4
    $region2: #{tpu_custom_call.1} parent=1 // loop_pre_header
      _
    $region3: #{tpu_custom_call.1} parent=1 // loop_header
      %s24 = sphi 0, %s28
      %p25 = scmp.ge.s32.totalorder %s24, 4
      %s34 = sphi 0, %s36
      %s37 = sphi 0, %s34
      %s38 = sphi 0, %s37
      %s54 = sphi 0, %s38
      %s60 = sphi 0, %s62
      %s63 = sphi 0, %s60
      %s64 = sphi 0, %s63
      %s80 = sphi 0, %s64
      %s84 = sphi 0, %s84
      %s86 = sphi 0, %s84
      %s87 = sphi 0, %s86
      %s101 = sphi 0, %s87
      %s105 = sphi 0, %s105
      %s107 = sphi 0, %s105
      %s108 = sphi 0, %s107
      %s122 = sphi 0, %s108
      %s126 = sphi 0, %s126
      %s128 = sphi 0, %s126
      %s129 = sphi 0, %s128
      %s143 = sphi 0, %s129
      %s147 = sphi 0, %s147
      %s149 = sphi 0, %s147
      %s150 = sphi 0, %s149
      %s164 = sphi 0, %s150
      %s168 = sphi 0, %s168
      %s170 = sphi 0, %s168
      %s171 = sphi 0, %s170
      %s185 = sphi 0, %s171
      %s189 = sphi 0, %s189
      %s191 = sphi 0, %s189
      %s192 = sphi 0, %s191
      %s206 = sphi 0, %s192
      %s212 = sphi 0, %s214
      %s215 = sphi 0, %s212
      %s216 = sphi 0, %s215
      %s232 = sphi 0, %s216
    $region4: #{tpu_custom_call.1} parent=1 // loop_header_branch
      %27 = sbr.rel (%p25) target = $region8
    $region5: #{tpu_custom_call.1} parent=1 // loop_body
      %s29 = ssub.s32 %s24, 1
      %s30 = ssub.s32 %s24, 2
      %s31 = sadd.s32 %s24, 1
      %s32 = ssub.s32 %s24, %s31
      %p33 = scmp.eq.s32.totalorder %s32, 0
      %s35 = sadd.s32 %s34, 1
      %s36 = scalar_select %p33, %s34, %s35
      %p39 = pneg %p33
      %p40 = scmp.eq.s32.totalorder %s24, 1
      %p41 = por %p39, %p40
      %p42 = scmp.ne.s32.totalorder %s34, %s37
      %p43 = scmp.eq.s32.totalorder %s24, 0
      %p44 = por %p42, %p43
      %p45 = scmp.ne.s32.totalorder %s34, %s37
      %p46 = scmp.eq.s32.totalorder %s29, 1
      %p47 = por %p45, %p46
      %p48 = scmp.ne.s32.totalorder %s37, %s38
      %p49 = scmp.eq.s32.totalorder %s29, 0
      %p50 = por %p48, %p49
      %p51 = scmp.ne.s32.totalorder %s37, %s38
      %p52 = scmp.eq.s32.totalorder %s30, 1
      %p53 = por %p51, %p52
      %p55 = scmp.ne.s32.totalorder %s38, %s54
      %p56 = scmp.eq.s32.totalorder %s30, 0
      %p57 = por %p55, %p56
      %s58 = ssub.s32 %s24, %s31
      %p59 = scmp.eq.s32.totalorder %s58, 0
      %s61 = sadd.s32 %s60, 1
      %s62 = scalar_select %p59, %s60, %s61
      %p65 = pneg %p59
      %p66 = scmp.eq.s32.totalorder %s24, 1
      %p67 = por %p65, %p66
      %p68 = scmp.ne.s32.totalorder %s60, %s63
      %p69 = scmp.eq.s32.totalorder %s24, 0
      %p70 = por %p68, %p69
      %p71 = scmp.ne.s32.totalorder %s60, %s63
      %p72 = scmp.eq.s32.totalorder %s29, 1
      %p73 = por %p71, %p72
      %p74 = scmp.ne.s32.totalorder %s63, %s64
      %p75 = scmp.eq.s32.totalorder %s29, 0
      %p76 = por %p74, %p75
      %p77 = scmp.ne.s32.totalorder %s63, %s64
      %p78 = scmp.eq.s32.totalorder %s30, 1
      %p79 = por %p77, %p78
      %p81 = scmp.ne.s32.totalorder %s64, %s80
      %p82 = scmp.eq.s32.totalorder %s30, 0
      %p83 = por %p81, %p82
      %s85 = sadd.s32 %s84, 1
      %p88 = scmp.eq.s32.totalorder %s24, 1
      %p89 = scmp.ne.s32.totalorder %s84, %s86
      %p90 = scmp.eq.s32.totalorder %s24, 0
      %p91 = por %p89, %p90
      %p92 = scmp.ne.s32.totalorder %s84, %s86
      %p93 = scmp.eq.s32.totalorder %s29, 1
      %p94 = por %p92, %p93
      %p95 = scmp.ne.s32.totalorder %s86, %s87
      %p96 = scmp.eq.s32.totalorder %s29, 0
      %p97 = por %p95, %p96
      %p98 = scmp.ne.s32.totalorder %s86, %s87
      %p99 = scmp.eq.s32.totalorder %s30, 1
      %p100 = por %p98, %p99
      %p102 = scmp.ne.s32.totalorder %s87, %s101
      %p103 = scmp.eq.s32.totalorder %s30, 0
      %p104 = por %p102, %p103
      %s106 = sadd.s32 %s105, 1
      %p109 = scmp.eq.s32.totalorder %s24, 1
      %p110 = scmp.ne.s32.totalorder %s105, %s107
      %p111 = scmp.eq.s32.totalorder %s24, 0
      %p112 = por %p110, %p111
      %p113 = scmp.ne.s32.totalorder %s105, %s107
      %p114 = scmp.eq.s32.totalorder %s29, 1
      %p115 = por %p113, %p114
      %p116 = scmp.ne.s32.totalorder %s107, %s108
      %p117 = scmp.eq.s32.totalorder %s29, 0
      %p118 = por %p116, %p117
      %p119 = scmp.ne.s32.totalorder %s107, %s108
      %p120 = scmp.eq.s32.totalorder %s30, 1
      %p121 = por %p119, %p120
      %p123 = scmp.ne.s32.totalorder %s108, %s122
      %p124 = scmp.eq.s32.totalorder %s30, 0
      %p125 = por %p123, %p124
      %s127 = sadd.s32 %s126, 1
      %p130 = scmp.eq.s32.totalorder %s24, 1
      %p131 = scmp.ne.s32.totalorder %s126, %s128
      %p132 = scmp.eq.s32.totalorder %s24, 0
      %p133 = por %p131, %p132
      %p134 = scmp.ne.s32.totalorder %s126, %s128
      %p135 = scmp.eq.s32.totalorder %s29, 1
      %p136 = por %p134, %p135
      %p137 = scmp.ne.s32.totalorder %s128, %s129
      %p138 = scmp.eq.s32.totalorder %s29, 0
      %p139 = por %p137, %p138
      %p140 = scmp.ne.s32.totalorder %s128, %s129
      %p141 = scmp.eq.s32.totalorder %s30, 1
      %p142 = por %p140, %p141
      %p144 = scmp.ne.s32.totalorder %s129, %s143
      %p145 = scmp.eq.s32.totalorder %s30, 0
      %p146 = por %p144, %p145
      %s148 = sadd.s32 %s147, 1
      %p151 = scmp.eq.s32.totalorder %s24, 1
      %p152 = scmp.ne.s32.totalorder %s147, %s149
      %p153 = scmp.eq.s32.totalorder %s24, 0
      %p154 = por %p152, %p153
      %p155 = scmp.ne.s32.totalorder %s147, %s149
      %p156 = scmp.eq.s32.totalorder %s29, 1
      %p157 = por %p155, %p156
      %p158 = scmp.ne.s32.totalorder %s149, %s150
      %p159 = scmp.eq.s32.totalorder %s29, 0
      %p160 = por %p158, %p159
      %p161 = scmp.ne.s32.totalorder %s149, %s150
      %p162 = scmp.eq.s32.totalorder %s30, 1
      %p163 = por %p161, %p162
      %p165 = scmp.ne.s32.totalorder %s150, %s164
      %p166 = scmp.eq.s32.totalorder %s30, 0
      %p167 = por %p165, %p166
      %s169 = sadd.s32 %s168, 1
      %p172 = scmp.eq.s32.totalorder %s24, 1
      %p173 = scmp.ne.s32.totalorder %s168, %s170
      %p174 = scmp.eq.s32.totalorder %s24, 0
      %p175 = por %p173, %p174
      %p176 = scmp.ne.s32.totalorder %s168, %s170
      %p177 = scmp.eq.s32.totalorder %s29, 1
      %p178 = por %p176, %p177
      %p179 = scmp.ne.s32.totalorder %s170, %s171
      %p180 = scmp.eq.s32.totalorder %s29, 0
      %p181 = por %p179, %p180
      %p182 = scmp.ne.s32.totalorder %s170, %s171
      %p183 = scmp.eq.s32.totalorder %s30, 1
      %p184 = por %p182, %p183
      %p186 = scmp.ne.s32.totalorder %s171, %s185
      %p187 = scmp.eq.s32.totalorder %s30, 0
      %p188 = por %p186, %p187
      %s190 = sadd.s32 %s189, 1
      %p193 = scmp.eq.s32.totalorder %s24, 1
      %p194 = scmp.ne.s32.totalorder %s189, %s191
      %p195 = scmp.eq.s32.totalorder %s24, 0
      %p196 = por %p194, %p195
      %p197 = scmp.ne.s32.totalorder %s189, %s191
      %p198 = scmp.eq.s32.totalorder %s29, 1
      %p199 = por %p197, %p198
      %p200 = scmp.ne.s32.totalorder %s191, %s192
      %p201 = scmp.eq.s32.totalorder %s29, 0
      %p202 = por %p200, %p201
      %p203 = scmp.ne.s32.totalorder %s191, %s192
      %p204 = scmp.eq.s32.totalorder %s30, 1
      %p205 = por %p203, %p204
      %p207 = scmp.ne.s32.totalorder %s192, %s206
      %p208 = scmp.eq.s32.totalorder %s30, 0
      %p209 = por %p207, %p208
      %s210 = ssub.s32 %s24, %s31
      %p211 = scmp.eq.s32.totalorder %s210, 0
      %s213 = sadd.s32 %s212, 1
      %s214 = scalar_select %p211, %s212, %s213
      %p217 = pneg %p211
      %p218 = scmp.eq.s32.totalorder %s24, 1
      %p219 = por %p217, %p218
      %p220 = scmp.ne.s32.totalorder %s212, %s215
      %p221 = scmp.eq.s32.totalorder %s24, 0
      %p222 = por %p220, %p221
      %p223 = scmp.ne.s32.totalorder %s212, %s215
      %p224 = scmp.eq.s32.totalorder %s29, 1
      %p225 = por %p223, %p224
      %p226 = scmp.ne.s32.totalorder %s215, %s216
      %p227 = scmp.eq.s32.totalorder %s29, 0
      %p228 = por %p226, %p227
      %p229 = scmp.ne.s32.totalorder %s215, %s216
      %p230 = scmp.eq.s32.totalorder %s30, 1
      %p231 = por %p229, %p230
      %p233 = scmp.ne.s32.totalorder %s216, %s232
      %p234 = scmp.eq.s32.totalorder %s30, 0
      %p235 = por %p233, %p234
      %p236 = scmp.le.s32.totalorder 1, %s24
      %p237 = scmp.lt.s32.totalorder %s24, 3
      %p238 = pnand %p236, %p237
      %p239 = pneg %p238
      // Predicated region
      $region9: #{tpu_custom_call.1} parent=5 // pred_check
        _
      $region10: #{tpu_custom_call.1} parent=5 // pred_check_branch
        %241 = sbr.rel (%p238) target = $region12
      $region11: #{tpu_custom_call.1} parent=5 // pred_region
        %s242 = ssub.s32 %s24, 1
        // Predicated region
        $region13: #{tpu_custom_call.1} parent=11 // pred_check
          %p243 = pneg %p97
        $region14: #{tpu_custom_call.1} parent=11 // pred_check_branch
          %245 = sbr.rel (%p243) target = $region16
        $region15: #{tpu_custom_call.1} parent=11 // pred_region
          %s247 = ssub.s32 1024, 1024
          %248 = vsyncadd [#allocation6], %s247
          %s249 = sshll.u32 [#allocation7], 4
          %s250 = int_to_ptr.vmem [resolvable:$true] %s249
          %255 = dma.hbm_to_vmem [thread:$0]  %s2, 1024, %s250, [#allocation6], 64, 64, 4
        $region16: #{tpu_custom_call.1} parent=11 // pred_fallthru
          _
        // Predicated region
        $region17: #{tpu_custom_call.1} parent=11 // pred_check
          %p256 = pneg %p118
        $region18: #{tpu_custom_call.1} parent=11 // pred_check_branch
          %258 = sbr.rel (%p256) target = $region20
        $region19: #{tpu_custom_call.1} parent=11 // pred_region
          _
        $region20: #{tpu_custom_call.1} parent=11 // pred_fallthru
          _
        // Predicated region
        $region21: #{tpu_custom_call.1} parent=11 // pred_check
          %p259 = pneg %p139
        $region22: #{tpu_custom_call.1} parent=11 // pred_check_branch
          %261 = sbr.rel (%p259) target = $region24
        $region23: #{tpu_custom_call.1} parent=11 // pred_region
          %s263 = ssub.s32 1024, 1024
          %264 = vsyncadd [#allocation9], %s263
          %s265 = sshll.u32 [#allocation8], 4
          %s266 = int_to_ptr.vmem [resolvable:$true] %s265
          %271 = dma.hbm_to_vmem [thread:$0]  %s4, 1024, %s266, [#allocation9], 64, 64, 4
        $region24: #{tpu_custom_call.1} parent=11 // pred_fallthru
          _
        // Predicated region
        $region25: #{tpu_custom_call.1} parent=11 // pred_check
          %p272 = pneg %p160
        $region26: #{tpu_custom_call.1} parent=11 // pred_check_branch
          %274 = sbr.rel (%p272) target = $region28
        $region27: #{tpu_custom_call.1} parent=11 // pred_region
          _
        $region28: #{tpu_custom_call.1} parent=11 // pred_fallthru
          _
        // Predicated region
        $region29: #{tpu_custom_call.1} parent=11 // pred_check
          %p275 = pneg %p181
        $region30: #{tpu_custom_call.1} parent=11 // pred_check_branch
          %277 = sbr.rel (%p275) target = $region32
        $region31: #{tpu_custom_call.1} parent=11 // pred_region
          %s279 = ssub.s32 1024, 1024
          %280 = vsyncadd [#allocation9], %s279
          %s281 = sshll.u32 [#allocation10], 4
          %s282 = int_to_ptr.vmem [resolvable:$true] %s281
          %287 = dma.hbm_to_vmem [thread:$0]  %s6, 1024, %s282, [#allocation9], 64, 64, 4
        $region32: #{tpu_custom_call.1} parent=11 // pred_fallthru
          _
        // Predicated region
        $region33: #{tpu_custom_call.1} parent=11 // pred_check
          %p288 = pneg %p202
        $region34: #{tpu_custom_call.1} parent=11 // pred_check_branch
          %290 = sbr.rel (%p288) target = $region36
        $region35: #{tpu_custom_call.1} parent=11 // pred_region
          _
        $region36: #{tpu_custom_call.1} parent=11 // pred_fallthru
          _
      $region12: #{tpu_custom_call.1} parent=5 // pred_fallthru
        _
      %p291 = scmp.lt.s32.totalorder %s24, 2
      // Predicated region
      $region37: #{tpu_custom_call.1} parent=5 // pred_check
        %p292 = pneg %p291
      $region38: #{tpu_custom_call.1} parent=5 // pred_check_branch
        %294 = sbr.rel (%p292) target = $region40
      $region39: #{tpu_custom_call.1} parent=5 // pred_region
        // Predicated region
        $region41: #{tpu_custom_call.1} parent=39 // pred_check
          %p295 = pneg %p44
        $region42: #{tpu_custom_call.1} parent=39 // pred_check_branch
          %297 = sbr.rel (%p295) target = $region44
        $region43: #{tpu_custom_call.1} parent=39 // pred_region
          %s298 = sand.u32 %s34, 1
          %s299 = scalar_lea.sflag [#allocation3], %s298
          %s300 = sand.u32 %s34, 1
          %s301 = smul.addr %s300, 128
          %s302 = scalar_lea.vmem [#allocation2], %s301
          %s303 = smul.u32 32, %s24
          %s305 = ssub.s32 2048, 2048
          %306 = vsyncadd %s299, %s305
          %s307 = smul.addr %s303, 64
          %s308 = scalar_lea.hbm %s0, %s307
          %s309 = sshll.u32 %s302, 4
          %s310 = int_to_ptr.vmem [resolvable:$true] %s309
          %315 = dma.hbm_to_vmem [thread:$0]  %s308, 2048, %s310, %s299, 64, 64, 4
        $region44: #{tpu_custom_call.1} parent=39 // pred_fallthru
          _
        // Predicated region
        $region45: #{tpu_custom_call.1} parent=39 // pred_check
          %p316 = pneg %p70
        $region46: #{tpu_custom_call.1} parent=39 // pred_check_branch
          %318 = sbr.rel (%p316) target = $region48
        $region47: #{tpu_custom_call.1} parent=39 // pred_region
          %s319 = sand.u32 %s24, 1
          %s320 = scalar_lea.sflag [#allocation6], %s319
          %s321 = sand.u32 %s60, 1
          %s322 = smul.addr %s321, 128
          %s323 = scalar_lea.vmem [#allocation5], %s322
          %s324 = smul.u32 32, %s24
          %s326 = ssub.s32 2048, 2048
          %327 = vsyncadd %s320, %s326
          %s328 = smul.addr %s324, 64
          %s329 = scalar_lea.hbm %s1, %s328
          %s330 = sshll.u32 %s323, 4
          %s331 = int_to_ptr.vmem [resolvable:$true] %s330
          %336 = dma.hbm_to_vmem [thread:$0]  %s329, 2048, %s331, %s320, 64, 64, 4
        $region48: #{tpu_custom_call.1} parent=39 // pred_fallthru
          _
      $region40: #{tpu_custom_call.1} parent=5 // pred_fallthru
        _
      %p337 = scmp.le.s32.totalorder 1, %s24
      %p338 = scmp.lt.s32.totalorder %s24, 3
      %p339 = pnand %p337, %p338
      %p340 = pneg %p339
      // Predicated region
      $region49: #{tpu_custom_call.1} parent=5 // pred_check
        _
      $region50: #{tpu_custom_call.1} parent=5 // pred_check_branch
        %342 = sbr.rel (%p339) target = $region52
      $region51: #{tpu_custom_call.1} parent=5 // pred_region
        %s343 = ssub.s32 %s24, 1
        %s344 = sand.u32 %s37, 1
        %s345 = scalar_lea.sflag [#allocation3], %s344
        %s346 = sand.u32 %s37, 1
        %s347 = smul.addr %s346, 128
        %s348 = scalar_lea.vmem [#allocation2], %s347
        // Predicated region
        $region53: #{tpu_custom_call.1} parent=51 // pred_check
          %p349 = pneg %p50
        $region54: #{tpu_custom_call.1} parent=51 // pred_check_branch
          %351 = sbr.rel (%p349) target = $region56
        $region55: #{tpu_custom_call.1} parent=51 // pred_region
          %352 = dma.done %s345, 2048
        $region56: #{tpu_custom_call.1} parent=51 // pred_fallthru
          _
        %s353 = sand.u32 %s29, 1
        %s354 = scalar_lea.sflag [#allocation6], %s353
        %s355 = sand.u32 %s63, 1
        %s356 = smul.addr %s355, 128
        %s357 = scalar_lea.vmem [#allocation5], %s356
        // Predicated region
        $region57: #{tpu_custom_call.1} parent=51 // pred_check
          %p358 = pneg %p76
        $region58: #{tpu_custom_call.1} parent=51 // pred_check_branch
          %360 = sbr.rel (%p358) target = $region60
        $region59: #{tpu_custom_call.1} parent=51 // pred_region
          %361 = dma.done %s354, 2048
        $region60: #{tpu_custom_call.1} parent=51 // pred_fallthru
          _
        // Predicated region
        $region61: #{tpu_custom_call.1} parent=51 // pred_check
          %p362 = pneg %p97
        $region62: #{tpu_custom_call.1} parent=51 // pred_check_branch
          %364 = sbr.rel (%p362) target = $region64
        $region63: #{tpu_custom_call.1} parent=51 // pred_region
          %365 = dma.done [#allocation6], 1024
        $region64: #{tpu_custom_call.1} parent=51 // pred_fallthru
          _
        // Predicated region
        $region65: #{tpu_custom_call.1} parent=51 // pred_check
          %p366 = pneg %p139
        $region66: #{tpu_custom_call.1} parent=51 // pred_check_branch
          %368 = sbr.rel (%p366) target = $region68
        $region67: #{tpu_custom_call.1} parent=51 // pred_region
          %369 = dma.done [#allocation9], 1024
        $region68: #{tpu_custom_call.1} parent=51 // pred_fallthru
          _
        // Predicated region
        $region69: #{tpu_custom_call.1} parent=51 // pred_check
          %p370 = pneg %p181
        $region70: #{tpu_custom_call.1} parent=51 // pred_check_branch
          %372 = sbr.rel (%p370) target = $region72
        $region71: #{tpu_custom_call.1} parent=51 // pred_region
          %373 = dma.done [#allocation9], 1024
        $region72: #{tpu_custom_call.1} parent=51 // pred_fallthru
          _
        %s374 = sand.u32 %s37, 1
        %s375 = scalar_lea.sflag [#allocation3], %s374
        %s376 = sand.u32 %s37, 1
        %s377 = smul.addr %s376, 128
        %s378 = scalar_lea.vmem [#allocation2], %s377
        %p379 = pneg %p50
        %p380 = pneg %p47
        %s381 = sand.u32 %s29, 1
        %s382 = scalar_lea.sflag [#allocation6], %s381
        %s383 = sand.u32 %s63, 1
        %s384 = smul.addr %s383, 128
        %s385 = scalar_lea.vmem [#allocation5], %s384
        %p386 = pneg %p76
        %p387 = pneg %p73
        %p388 = pneg %p97
        %p389 = pneg %p94
        %p390 = pneg %p118
        %p391 = pneg %p115
        %p392 = pneg %p139
        %p393 = pneg %p136
        %p394 = pneg %p160
        %p395 = pneg %p157
        %p396 = pneg %p181
        %p397 = pneg %p178
        %p398 = pneg %p202
        %p399 = pneg %p199
        %p400 = pneg %p228
        %p401 = pneg %p225
        %s402 = sand.u32 %s215, 1
        %s403 = scalar_lea.sflag [#allocation4], %s402
        %s404 = sand.u32 %s215, 1
        %s405 = smul.addr %s404, 256
        %s406 = scalar_lea.vmem [#allocation11], %s405
        %s407 = smul.u32 32, %s29
        %s408 = smul.u32 32, %s29
        %s409 = smul.u32 32, %s29
        %v411 = vld [vmem:[%s348] sm:$0xf]
        %v412 = vld [vmem:[%s348 + $0x4] sm:$0xf]
        %v413 = vld [vmem:[%s348 + $0x8] sm:$0xf]
        %v414 = vld [vmem:[%s348 + $0xc] sm:$0xf]
        %v415 = vld [vmem:[%s348 + $0x10] sm:$0xf]
        %v416 = vld [vmem:[%s348 + $0x14] sm:$0xf]
        %v417 = vld [vmem:[%s348 + $0x18] sm:$0xf]
        %v418 = vld [vmem:[%s348 + $0x1c] sm:$0xf]
        %v419 = vld [vmem:[%s348 + $0x20] sm:$0xf]
        %v420 = vld [vmem:[%s348 + $0x24] sm:$0xf]
        %v421 = vld [vmem:[%s348 + $0x28] sm:$0xf]
        %v422 = vld [vmem:[%s348 + $0x2c] sm:$0xf]
        %v423 = vld [vmem:[%s348 + $0x30] sm:$0xf]
        %v424 = vld [vmem:[%s348 + $0x34] sm:$0xf]
        %v425 = vld [vmem:[%s348 + $0x38] sm:$0xf]
        %v426 = vld [vmem:[%s348 + $0x3c] sm:$0xf]
        %v427 = vld [vmem:[%s348 + $0x40] sm:$0xf]
        %v428 = vld [vmem:[%s348 + $0x44] sm:$0xf]
        %v429 = vld [vmem:[%s348 + $0x48] sm:$0xf]
        %v430 = vld [vmem:[%s348 + $0x4c] sm:$0xf]
        %v431 = vld [vmem:[%s348 + $0x50] sm:$0xf]
        %v432 = vld [vmem:[%s348 + $0x54] sm:$0xf]
        %v433 = vld [vmem:[%s348 + $0x58] sm:$0xf]
        %v434 = vld [vmem:[%s348 + $0x5c] sm:$0xf]
        %v435 = vld [vmem:[%s348 + $0x60] sm:$0xf]
        %v436 = vld [vmem:[%s348 + $0x64] sm:$0xf]
        %v437 = vld [vmem:[%s348 + $0x68] sm:$0xf]
        %v438 = vld [vmem:[%s348 + $0x6c] sm:$0xf]
        %v439 = vld [vmem:[%s348 + $0x70] sm:$0xf]
        %v440 = vld [vmem:[%s348 + $0x74] sm:$0xf]
        %v441 = vld [vmem:[%s348 + $0x78] sm:$0xf]
        %v442 = vld [vmem:[%s348 + $0x7c] sm:$0xf]
        %v443 = vld [vmem:[%s357] sm:$0xf]
        %v444 = vld [vmem:[%s357 + $0x4] sm:$0xf]
        %v445 = vld [vmem:[%s357 + $0x8] sm:$0xf]
        %v446 = vld [vmem:[%s357 + $0xc] sm:$0xf]
        %v447 = vld [vmem:[%s357 + $0x10] sm:$0xf]
        %v448 = vld [vmem:[%s357 + $0x14] sm:$0xf]
        %v449 = vld [vmem:[%s357 + $0x18] sm:$0xf]
        %v450 = vld [vmem:[%s357 + $0x1c] sm:$0xf]
        %v451 = vld [vmem:[%s357 + $0x20] sm:$0xf]
        %v452 = vld [vmem:[%s357 + $0x24] sm:$0xf]
        %v453 = vld [vmem:[%s357 + $0x28] sm:$0xf]
        %v454 = vld [vmem:[%s357 + $0x2c] sm:$0xf]
        %v455 = vld [vmem:[%s357 + $0x30] sm:$0xf]
        %v456 = vld [vmem:[%s357 + $0x34] sm:$0xf]
        %v457 = vld [vmem:[%s357 + $0x38] sm:$0xf]
        %v458 = vld [vmem:[%s357 + $0x3c] sm:$0xf]
        %v459 = vld [vmem:[%s357 + $0x40] sm:$0xf]
        %v460 = vld [vmem:[%s357 + $0x44] sm:$0xf]
        %v461 = vld [vmem:[%s357 + $0x48] sm:$0xf]
        %v462 = vld [vmem:[%s357 + $0x4c] sm:$0xf]
        %v463 = vld [vmem:[%s357 + $0x50] sm:$0xf]
        %v464 = vld [vmem:[%s357 + $0x54] sm:$0xf]
        %v465 = vld [vmem:[%s357 + $0x58] sm:$0xf]
        %v466 = vld [vmem:[%s357 + $0x5c] sm:$0xf]
        %v467 = vld [vmem:[%s357 + $0x60] sm:$0xf]
        %v468 = vld [vmem:[%s357 + $0x64] sm:$0xf]
        %v469 = vld [vmem:[%s357 + $0x68] sm:$0xf]
        %v470 = vld [vmem:[%s357 + $0x6c] sm:$0xf]
        %v471 = vld [vmem:[%s357 + $0x70] sm:$0xf]
        %v472 = vld [vmem:[%s357 + $0x74] sm:$0xf]
        %v473 = vld [vmem:[%s357 + $0x78] sm:$0xf]
        %v474 = vld [vmem:[%s357 + $0x7c] sm:$0xf]
        %v475 = vld [vmem:[#allocation7] sm:$0xf]
        %v476 = vld [vmem:[#allocation7 + $0x4] sm:$0xf]
        %v477 = vld [vmem:[#allocation7 + $0x8] sm:$0xf]
        %v478 = vld [vmem:[#allocation7 + $0xc] sm:$0xf]
        %v479 = vld [vmem:[#allocation7 + $0x10] sm:$0xf]
        %v480 = vld [vmem:[#allocation7 + $0x14] sm:$0xf]
        %v481 = vld [vmem:[#allocation7 + $0x18] sm:$0xf]
        %v482 = vld [vmem:[#allocation7 + $0x1c] sm:$0xf]
        %v483 = vld [vmem:[#allocation7 + $0x20] sm:$0xf]
        %v484 = vld [vmem:[#allocation7 + $0x24] sm:$0xf]
        %v485 = vld [vmem:[#allocation7 + $0x28] sm:$0xf]
        %v486 = vld [vmem:[#allocation7 + $0x2c] sm:$0xf]
        %v487 = vld [vmem:[#allocation7 + $0x30] sm:$0xf]
        %v488 = vld [vmem:[#allocation7 + $0x34] sm:$0xf]
        %v489 = vld [vmem:[#allocation7 + $0x38] sm:$0xf]
        %v490 = vld [vmem:[#allocation7 + $0x3c] sm:$0xf]
        %v491 = vld [vmem:[%s3] sm:$0x1]
        %v493 = vlaneseq
        %v494 = vshrl.u32 %v493, 7
        %v495 = vsub.s32 0, %v494
        %v496 = vrot.slane %v491, %v495
        %v530 = vunpack.c.l.b16 %v443
        %v531 = vunpack.c.l.b16 %v444
        %v532 = vunpack.c.l.b16 %v445
        %v533 = vunpack.c.l.b16 %v446
        %v534 = vunpack.c.l.b16 %v447
        %v535 = vunpack.c.l.b16 %v448
        %v536 = vunpack.c.l.b16 %v449
        %v537 = vunpack.c.l.b16 %v450
        %v538 = vunpack.c.l.b16 %v451
        %v539 = vunpack.c.l.b16 %v452
        %v540 = vunpack.c.l.b16 %v453
        %v541 = vunpack.c.l.b16 %v454
        %v542 = vunpack.c.l.b16 %v455
        %v543 = vunpack.c.l.b16 %v456
        %v544 = vunpack.c.l.b16 %v457
        %v545 = vunpack.c.l.b16 %v458
        %v546 = vunpack.c.l.b16 %v459
        %v547 = vunpack.c.l.b16 %v460
        %v548 = vunpack.c.l.b16 %v461
        %v549 = vunpack.c.l.b16 %v462
        %v550 = vunpack.c.l.b16 %v463
        %v551 = vunpack.c.l.b16 %v464
        %v552 = vunpack.c.l.b16 %v465
        %v553 = vunpack.c.l.b16 %v466
        %v554 = vunpack.c.l.b16 %v467
        %v555 = vunpack.c.l.b16 %v468
        %v556 = vunpack.c.l.b16 %v469
        %v557 = vunpack.c.l.b16 %v470
        %v558 = vunpack.c.l.b16 %v471
        %v559 = vunpack.c.l.b16 %v472
        %v560 = vunpack.c.l.b16 %v473
        %v561 = vunpack.c.l.b16 %v474
        %v562 = vpack.c.b16 %v531, %v530
        %v563 = vpack.c.b16 %v533, %v532
        %v564 = vpack.c.b16 %v535, %v534
        %v565 = vpack.c.b16 %v537, %v536
        %v566 = vpack.c.b16 %v539, %v538
        %v567 = vpack.c.b16 %v541, %v540
        %v568 = vpack.c.b16 %v543, %v542
        %v569 = vpack.c.b16 %v545, %v544
        %v570 = vpack.c.b16 %v547, %v546
        %v571 = vpack.c.b16 %v549, %v548
        %v572 = vpack.c.b16 %v551, %v550
        %v573 = vpack.c.b16 %v553, %v552
        %v574 = vpack.c.b16 %v555, %v554
        %v575 = vpack.c.b16 %v557, %v556
        %v576 = vpack.c.b16 %v559, %v558
        %v577 = vpack.c.b16 %v561, %v560
        %v610 = vunpack.c.l.b16 %v475
        %v611 = vunpack.c.l.b16 %v476
        %v612 = vunpack.c.l.b16 %v477
        %v613 = vunpack.c.l.b16 %v478
        %v614 = vunpack.c.l.b16 %v479
        %v615 = vunpack.c.l.b16 %v480
        %v616 = vunpack.c.l.b16 %v481
        %v617 = vunpack.c.l.b16 %v482
        %v618 = vunpack.c.l.b16 %v483
        %v619 = vunpack.c.l.b16 %v484
        %v620 = vunpack.c.l.b16 %v485
        %v621 = vunpack.c.l.b16 %v486
        %v622 = vunpack.c.l.b16 %v487
        %v623 = vunpack.c.l.b16 %v488
        %v624 = vunpack.c.l.b16 %v489
        %v625 = vunpack.c.l.b16 %v490
        %v626 = vpack.c.b16 %v611, %v610
        %v627 = vpack.c.b16 %v613, %v612
        %v628 = vpack.c.b16 %v615, %v614
        %v629 = vpack.c.b16 %v617, %v616
        %v630 = vpack.c.b16 %v619, %v618
        %v631 = vpack.c.b16 %v621, %v620
        %v632 = vpack.c.b16 %v623, %v622
        %v633 = vpack.c.b16 %v625, %v624
        %642 = vmatprep.subr.bf16.mxu0 0
        %643 = vmatpush1.bf16.msra.mxu0 %v633
        %644 = vmatprep.subr.bf16.mxu0 0
        %645 = vmatpush1.bf16.msra.mxu0 %v632
        %646 = vmatprep.subr.bf16.mxu0 0
        %647 = vmatpush1.bf16.msra.mxu0 %v631
        %648 = vmatprep.subr.bf16.mxu0 0
        %649 = vmatpush1.bf16.msra.mxu0 %v630
        %650 = vmatprep.subr.bf16.mxu0 0
        %651 = vmatpush1.bf16.msra.mxu0 %v629
        %652 = vmatprep.subr.bf16.mxu0 0
        %653 = vmatpush1.bf16.msra.mxu0 %v628
        %654 = vmatprep.subr.bf16.mxu0 0
        %655 = vmatpush1.bf16.msra.mxu0 %v627
        %656 = vmatprep.subr.bf16.mxu0 0
        %657 = vmatpush1.bf16.msra.mxu0 %v626
        %658 = vmatprep.subr.bf16.mxu0 0
        %659 = vmatpush2.bf16.msra.mxu0 0
        %660 = vmatprep.subr.bf16.mxu0 0
        %661 = vmatpush2.bf16.msra.mxu0 0
        %662 = vmatprep.subr.bf16.mxu0 0
        %663 = vmatpush2.bf16.msra.mxu0 0
        %664 = vmatprep.subr.bf16.mxu0 0
        %665 = vmatpush2.bf16.msra.mxu0 0
        %666 = vmatprep.subr.bf16.mxu0 0
        %667 = vmatpush2.bf16.msra.mxu0 0
        %668 = vmatprep.subr.bf16.mxu0 0
        %669 = vmatpush2.bf16.msra.mxu0 0
        %670 = vmatprep.subr.bf16.mxu0 0
        %671 = vmatpush2.bf16.msra.mxu0 0
        %672 = vmatprep.subr.bf16.mxu0 0
        %673 = vmatpush2.bf16.msra.mxu0 0
        %674 = vmatprep.mubr.bf16.mxu0 0
        %675 = vmatmul.mubr.bf16.gmra.mxu0 %v562
        %v676 = vpop.f32.mrf.mxu0
        %v677 = vadd.f32 %v496, %v676
        %v678 = vpop.f32.mrf.mxu0
        %v679 = vpop.f32.mrf.mxu0
        %v680 = vadd.f32 %v496, %v679
        %v681 = vpop.f32.mrf.mxu0
        %682 = vmatprep.mubr.bf16.mxu0 0
        %683 = vmatmul.mubr.bf16.gmra.mxu0 %v563
        %v684 = vpop.f32.mrf.mxu0
        %v685 = vadd.f32 %v496, %v684
        %v686 = vpop.f32.mrf.mxu0
        %v687 = vpop.f32.mrf.mxu0
        %v688 = vadd.f32 %v496, %v687
        %v689 = vpop.f32.mrf.mxu0
        %690 = vmatprep.mubr.bf16.mxu0 0
        %691 = vmatmul.mubr.bf16.gmra.mxu0 %v564
        %v692 = vpop.f32.mrf.mxu0
        %v693 = vadd.f32 %v496, %v692
        %v694 = vpop.f32.mrf.mxu0
        %v695 = vpop.f32.mrf.mxu0
        %v696 = vadd.f32 %v496, %v695
        %v697 = vpop.f32.mrf.mxu0
        %698 = vmatprep.mubr.bf16.mxu0 0
        %699 = vmatmul.mubr.bf16.gmra.mxu0 %v565
        %v700 = vpop.f32.mrf.mxu0
        %v701 = vadd.f32 %v496, %v700
        %v702 = vpop.f32.mrf.mxu0
        %v703 = vpop.f32.mrf.mxu0
        %v704 = vadd.f32 %v496, %v703
        %v705 = vpop.f32.mrf.mxu0
        %706 = vmatprep.mubr.bf16.mxu0 0
        %707 = vmatmul.mubr.bf16.gmra.mxu0 %v566
        %v708 = vpop.f32.mrf.mxu0
        %v709 = vadd.f32 %v496, %v708
        %v710 = vpop.f32.mrf.mxu0
        %v711 = vpop.f32.mrf.mxu0
        %v712 = vadd.f32 %v496, %v711
        %v713 = vpop.f32.mrf.mxu0
        %714 = vmatprep.mubr.bf16.mxu0 0
        %715 = vmatmul.mubr.bf16.gmra.mxu0 %v567
        %v716 = vpop.f32.mrf.mxu0
        %v717 = vadd.f32 %v496, %v716
        %v718 = vpop.f32.mrf.mxu0
        %v719 = vpop.f32.mrf.mxu0
        %v720 = vadd.f32 %v496, %v719
        %v721 = vpop.f32.mrf.mxu0
        %722 = vmatprep.mubr.bf16.mxu0 0
        %723 = vmatmul.mubr.bf16.gmra.mxu0 %v568
        %v724 = vpop.f32.mrf.mxu0
        %v725 = vadd.f32 %v496, %v724
        %v726 = vpop.f32.mrf.mxu0
        %v727 = vpop.f32.mrf.mxu0
        %v728 = vadd.f32 %v496, %v727
        %v729 = vpop.f32.mrf.mxu0
        %730 = vmatprep.mubr.bf16.mxu0 0
        %731 = vmatmul.mubr.bf16.gmra.mxu0 %v569
        %v732 = vpop.f32.mrf.mxu0
        %v733 = vadd.f32 %v496, %v732
        %v734 = vpop.f32.mrf.mxu0
        %v735 = vpop.f32.mrf.mxu0
        %v736 = vadd.f32 %v496, %v735
        %v737 = vpop.f32.mrf.mxu0
        %738 = vmatprep.mubr.bf16.mxu0 0
        %739 = vmatmul.mubr.bf16.gmra.mxu0 %v570
        %v740 = vpop.f32.mrf.mxu0
        %v741 = vadd.f32 %v496, %v740
        %v742 = vpop.f32.mrf.mxu0
        %v743 = vpop.f32.mrf.mxu0
        %v744 = vadd.f32 %v496, %v743
        %v745 = vpop.f32.mrf.mxu0
        %746 = vmatprep.mubr.bf16.mxu0 0
        %747 = vmatmul.mubr.bf16.gmra.mxu0 %v571
        %v748 = vpop.f32.mrf.mxu0
        %v749 = vadd.f32 %v496, %v748
        %v750 = vpop.f32.mrf.mxu0
        %v751 = vpop.f32.mrf.mxu0
        %v752 = vadd.f32 %v496, %v751
        %v753 = vpop.f32.mrf.mxu0
        %754 = vmatprep.mubr.bf16.mxu0 0
        %755 = vmatmul.mubr.bf16.gmra.mxu0 %v572
        %v756 = vpop.f32.mrf.mxu0
        %v757 = vadd.f32 %v496, %v756
        %v758 = vpop.f32.mrf.mxu0
        %v759 = vpop.f32.mrf.mxu0
        %v760 = vadd.f32 %v496, %v759
        %v761 = vpop.f32.mrf.mxu0
        %762 = vmatprep.mubr.bf16.mxu0 0
        %763 = vmatmul.mubr.bf16.gmra.mxu0 %v573
        %v764 = vpop.f32.mrf.mxu0
        %v765 = vadd.f32 %v496, %v764
        %v766 = vpop.f32.mrf.mxu0
        %v767 = vpop.f32.mrf.mxu0
        %v768 = vadd.f32 %v496, %v767
        %v769 = vpop.f32.mrf.mxu0
        %770 = vmatprep.mubr.bf16.mxu0 0
        %771 = vmatmul.mubr.bf16.gmra.mxu0 %v574
        %v772 = vpop.f32.mrf.mxu0
        %v773 = vadd.f32 %v496, %v772
        %v774 = vpop.f32.mrf.mxu0
        %v775 = vpop.f32.mrf.mxu0
        %v776 = vadd.f32 %v496, %v775
        %v777 = vpop.f32.mrf.mxu0
        %778 = vmatprep.mubr.bf16.mxu0 0
        %779 = vmatmul.mubr.bf16.gmra.mxu0 %v575
        %v780 = vpop.f32.mrf.mxu0
        %v781 = vadd.f32 %v496, %v780
        %v782 = vpop.f32.mrf.mxu0
        %v783 = vpop.f32.mrf.mxu0
        %v784 = vadd.f32 %v496, %v783
        %v785 = vpop.f32.mrf.mxu0
        %786 = vmatprep.mubr.bf16.mxu0 0
        %787 = vmatmul.mubr.bf16.gmra.mxu0 %v576
        %v788 = vpop.f32.mrf.mxu0
        %v789 = vadd.f32 %v496, %v788
        %v790 = vpop.f32.mrf.mxu0
        %v791 = vpop.f32.mrf.mxu0
        %v792 = vadd.f32 %v496, %v791
        %v793 = vpop.f32.mrf.mxu0
        %794 = vmatprep.mubr.bf16.mxu0 0
        %795 = vmatmul.mubr.bf16.gmra.mxu0 %v577
        %v796 = vpop.f32.mrf.mxu0
        %v797 = vadd.f32 %v496, %v796
        %v798 = vpop.f32.mrf.mxu0
        %v799 = vpop.f32.mrf.mxu0
        %v800 = vadd.f32 %v496, %v799
        %v801 = vpop.f32.mrf.mxu0
        %802 = vdwg.mxu0
        %v803 = vld [vmem:[#allocation8] sm:$0xf]
        %v804 = vld [vmem:[#allocation8 + $0x4] sm:$0xf]
        %v805 = vld [vmem:[#allocation8 + $0x8] sm:$0xf]
        %v806 = vld [vmem:[#allocation8 + $0xc] sm:$0xf]
        %v807 = vld [vmem:[#allocation8 + $0x10] sm:$0xf]
        %v808 = vld [vmem:[#allocation8 + $0x14] sm:$0xf]
        %v809 = vld [vmem:[#allocation8 + $0x18] sm:$0xf]
        %v810 = vld [vmem:[#allocation8 + $0x1c] sm:$0xf]
        %v811 = vld [vmem:[#allocation8 + $0x20] sm:$0xf]
        %v812 = vld [vmem:[#allocation8 + $0x24] sm:$0xf]
        %v813 = vld [vmem:[#allocation8 + $0x28] sm:$0xf]
        %v814 = vld [vmem:[#allocation8 + $0x2c] sm:$0xf]
        %v815 = vld [vmem:[#allocation8 + $0x30] sm:$0xf]
        %v816 = vld [vmem:[#allocation8 + $0x34] sm:$0xf]
        %v817 = vld [vmem:[#allocation8 + $0x38] sm:$0xf]
        %v818 = vld [vmem:[#allocation8 + $0x3c] sm:$0xf]
        %v819 = vld [vmem:[%s5] sm:$0x1]
        %v821 = vlaneseq
        %v822 = vshrl.u32 %v821, 7
        %v823 = vsub.s32 0, %v822
        %v824 = vrot.slane %v819, %v823
        %v858 = vunpack.c.l.b16 %v411
        %v859 = vunpack.c.l.b16 %v412
        %v860 = vunpack.c.l.b16 %v413
        %v861 = vunpack.c.l.b16 %v414
        %v862 = vunpack.c.l.b16 %v415
        %v863 = vunpack.c.l.b16 %v416
        %v864 = vunpack.c.l.b16 %v417
        %v865 = vunpack.c.l.b16 %v418
        %v866 = vunpack.c.l.b16 %v419
        %v867 = vunpack.c.l.b16 %v420
        %v868 = vunpack.c.l.b16 %v421
        %v869 = vunpack.c.l.b16 %v422
        %v870 = vunpack.c.l.b16 %v423
        %v871 = vunpack.c.l.b16 %v424
        %v872 = vunpack.c.l.b16 %v425
        %v873 = vunpack.c.l.b16 %v426
        %v874 = vunpack.c.l.b16 %v427
        %v875 = vunpack.c.l.b16 %v428
        %v876 = vunpack.c.l.b16 %v429
        %v877 = vunpack.c.l.b16 %v430
        %v878 = vunpack.c.l.b16 %v431
        %v879 = vunpack.c.l.b16 %v432
        %v880 = vunpack.c.l.b16 %v433
        %v881 = vunpack.c.l.b16 %v434
        %v882 = vunpack.c.l.b16 %v435
        %v883 = vunpack.c.l.b16 %v436
        %v884 = vunpack.c.l.b16 %v437
        %v885 = vunpack.c.l.b16 %v438
        %v886 = vunpack.c.l.b16 %v439
        %v887 = vunpack.c.l.b16 %v440
        %v888 = vunpack.c.l.b16 %v441
        %v889 = vunpack.c.l.b16 %v442
        %v890 = vpack.c.b16 %v859, %v858
        %v891 = vpack.c.b16 %v861, %v860
        %v892 = vpack.c.b16 %v863, %v862
        %v893 = vpack.c.b16 %v865, %v864
        %v894 = vpack.c.b16 %v867, %v866
        %v895 = vpack.c.b16 %v869, %v868
        %v896 = vpack.c.b16 %v871, %v870
        %v897 = vpack.c.b16 %v873, %v872
        %v898 = vpack.c.b16 %v875, %v874
        %v899 = vpack.c.b16 %v877, %v876
        %v900 = vpack.c.b16 %v879, %v878
        %v901 = vpack.c.b16 %v881, %v880
        %v902 = vpack.c.b16 %v883, %v882
        %v903 = vpack.c.b16 %v885, %v884
        %v904 = vpack.c.b16 %v887, %v886
        %v905 = vpack.c.b16 %v889, %v888
        %v938 = vunpack.c.l.b16 %v803
        %v939 = vunpack.c.l.b16 %v804
        %v940 = vunpack.c.l.b16 %v805
        %v941 = vunpack.c.l.b16 %v806
        %v942 = vunpack.c.l.b16 %v807
        %v943 = vunpack.c.l.b16 %v808
        %v944 = vunpack.c.l.b16 %v809
        %v945 = vunpack.c.l.b16 %v810
        %v946 = vunpack.c.l.b16 %v811
        %v947 = vunpack.c.l.b16 %v812
        %v948 = vunpack.c.l.b16 %v813
        %v949 = vunpack.c.l.b16 %v814
        %v950 = vunpack.c.l.b16 %v815
        %v951 = vunpack.c.l.b16 %v816
        %v952 = vunpack.c.l.b16 %v817
        %v953 = vunpack.c.l.b16 %v818
        %v954 = vpack.c.b16 %v939, %v938
        %v955 = vpack.c.b16 %v941, %v940
        %v956 = vpack.c.b16 %v943, %v942
        %v957 = vpack.c.b16 %v945, %v944
        %v958 = vpack.c.b16 %v947, %v946
        %v959 = vpack.c.b16 %v949, %v948
        %v960 = vpack.c.b16 %v951, %v950
        %v961 = vpack.c.b16 %v953, %v952
        %970 = vmatprep.subr.bf16.mxu0 0
        %971 = vmatpush1.bf16.msra.mxu0 %v961
        %972 = vmatprep.subr.bf16.mxu0 0
        %973 = vmatpush1.bf16.msra.mxu0 %v960
        %974 = vmatprep.subr.bf16.mxu0 0
        %975 = vmatpush1.bf16.msra.mxu0 %v959
        %976 = vmatprep.subr.bf16.mxu0 0
        %977 = vmatpush1.bf16.msra.mxu0 %v958
        %978 = vmatprep.subr.bf16.mxu0 0
        %979 = vmatpush1.bf16.msra.mxu0 %v957
        %980 = vmatprep.subr.bf16.mxu0 0
        %981 = vmatpush1.bf16.msra.mxu0 %v956
        %982 = vmatprep.subr.bf16.mxu0 0
        %983 = vmatpush1.bf16.msra.mxu0 %v955
        %984 = vmatprep.subr.bf16.mxu0 0
        %985 = vmatpush1.bf16.msra.mxu0 %v954
        %986 = vmatprep.subr.bf16.mxu0 0
        %987 = vmatpush2.bf16.msra.mxu0 0
        %988 = vmatprep.subr.bf16.mxu0 0
        %989 = vmatpush2.bf16.msra.mxu0 0
        %990 = vmatprep.subr.bf16.mxu0 0
        %991 = vmatpush2.bf16.msra.mxu0 0
        %992 = vmatprep.subr.bf16.mxu0 0
        %993 = vmatpush2.bf16.msra.mxu0 0
        %994 = vmatprep.subr.bf16.mxu0 0
        %995 = vmatpush2.bf16.msra.mxu0 0
        %996 = vmatprep.subr.bf16.mxu0 0
        %997 = vmatpush2.bf16.msra.mxu0 0
        %998 = vmatprep.subr.bf16.mxu0 0
        %999 = vmatpush2.bf16.msra.mxu0 0
        %1000 = vmatprep.subr.bf16.mxu0 0
        %1001 = vmatpush2.bf16.msra.mxu0 0
        %1002 = vmatprep.mubr.bf16.mxu0 0
        %1003 = vmatmul.mubr.bf16.gmra.mxu0 %v890
        %v1004 = vpop.f32.mrf.mxu0
        %v1005 = vadd.f32 %v824, %v1004
        %v1006 = vpop.f32.mrf.mxu0
        %v1007 = vpop.f32.mrf.mxu0
        %v1008 = vadd.f32 %v824, %v1007
        %v1009 = vpop.f32.mrf.mxu0
        %1010 = vmatprep.mubr.bf16.mxu0 0
        %1011 = vmatmul.mubr.bf16.gmra.mxu0 %v891
        %v1012 = vpop.f32.mrf.mxu0
        %v1013 = vadd.f32 %v824, %v1012
        %v1014 = vpop.f32.mrf.mxu0
        %v1015 = vpop.f32.mrf.mxu0
        %v1016 = vadd.f32 %v824, %v1015
        %v1017 = vpop.f32.mrf.mxu0
        %1018 = vmatprep.mubr.bf16.mxu0 0
        %1019 = vmatmul.mubr.bf16.gmra.mxu0 %v892
        %v1020 = vpop.f32.mrf.mxu0
        %v1021 = vadd.f32 %v824, %v1020
        %v1022 = vpop.f32.mrf.mxu0
        %v1023 = vpop.f32.mrf.mxu0
        %v1024 = vadd.f32 %v824, %v1023
        %v1025 = vpop.f32.mrf.mxu0
        %1026 = vmatprep.mubr.bf16.mxu0 0
        %1027 = vmatmul.mubr.bf16.gmra.mxu0 %v893
        %v1028 = vpop.f32.mrf.mxu0
        %v1029 = vadd.f32 %v824, %v1028
        %v1030 = vpop.f32.mrf.mxu0
        %v1031 = vpop.f32.mrf.mxu0
        %v1032 = vadd.f32 %v824, %v1031
        %v1033 = vpop.f32.mrf.mxu0
        %1034 = vmatprep.mubr.bf16.mxu0 0
        %1035 = vmatmul.mubr.bf16.gmra.mxu0 %v894
        %v1036 = vpop.f32.mrf.mxu0
        %v1037 = vadd.f32 %v824, %v1036
        %v1038 = vpop.f32.mrf.mxu0
        %v1039 = vpop.f32.mrf.mxu0
        %v1040 = vadd.f32 %v824, %v1039
        %v1041 = vpop.f32.mrf.mxu0
        %1042 = vmatprep.mubr.bf16.mxu0 0
        %1043 = vmatmul.mubr.bf16.gmra.mxu0 %v895
        %v1044 = vpop.f32.mrf.mxu0
        %v1045 = vadd.f32 %v824, %v1044
        %v1046 = vpop.f32.mrf.mxu0
        %v1047 = vpop.f32.mrf.mxu0
        %v1048 = vadd.f32 %v824, %v1047
        %v1049 = vpop.f32.mrf.mxu0
        %1050 = vmatprep.mubr.bf16.mxu0 0
        %1051 = vmatmul.mubr.bf16.gmra.mxu0 %v896
        %v1052 = vpop.f32.mrf.mxu0
        %v1053 = vadd.f32 %v824, %v1052
        %v1054 = vpop.f32.mrf.mxu0
        %v1055 = vpop.f32.mrf.mxu0
        %v1056 = vadd.f32 %v824, %v1055
        %v1057 = vpop.f32.mrf.mxu0
        %1058 = vmatprep.mubr.bf16.mxu0 0
        %1059 = vmatmul.mubr.bf16.gmra.mxu0 %v897
        %v1060 = vpop.f32.mrf.mxu0
        %v1061 = vadd.f32 %v824, %v1060
        %v1062 = vpop.f32.mrf.mxu0
        %v1063 = vpop.f32.mrf.mxu0
        %v1064 = vadd.f32 %v824, %v1063
        %v1065 = vpop.f32.mrf.mxu0
        %1066 = vmatprep.mubr.bf16.mxu0 0
        %1067 = vmatmul.mubr.bf16.gmra.mxu0 %v898
        %v1068 = vpop.f32.mrf.mxu0
        %v1069 = vadd.f32 %v824, %v1068
        %v1070 = vpop.f32.mrf.mxu0
        %v1071 = vpop.f32.mrf.mxu0
        %v1072 = vadd.f32 %v824, %v1071
        %v1073 = vpop.f32.mrf.mxu0
        %1074 = vmatprep.mubr.bf16.mxu0 0
        %1075 = vmatmul.mubr.bf16.gmra.mxu0 %v899
        %v1076 = vpop.f32.mrf.mxu0
        %v1077 = vadd.f32 %v824, %v1076
        %v1078 = vpop.f32.mrf.mxu0
        %v1079 = vpop.f32.mrf.mxu0
        %v1080 = vadd.f32 %v824, %v1079
        %v1081 = vpop.f32.mrf.mxu0
        %1082 = vmatprep.mubr.bf16.mxu0 0
        %1083 = vmatmul.mubr.bf16.gmra.mxu0 %v900
        %v1084 = vpop.f32.mrf.mxu0
        %v1085 = vadd.f32 %v824, %v1084
        %v1086 = vpop.f32.mrf.mxu0
        %v1087 = vpop.f32.mrf.mxu0
        %v1088 = vadd.f32 %v824, %v1087
        %v1089 = vpop.f32.mrf.mxu0
        %1090 = vmatprep.mubr.bf16.mxu0 0
        %1091 = vmatmul.mubr.bf16.gmra.mxu0 %v901
        %v1092 = vpop.f32.mrf.mxu0
        %v1093 = vadd.f32 %v824, %v1092
        %v1094 = vpop.f32.mrf.mxu0
        %v1095 = vpop.f32.mrf.mxu0
        %v1096 = vadd.f32 %v824, %v1095
        %v1097 = vpop.f32.mrf.mxu0
        %1098 = vmatprep.mubr.bf16.mxu0 0
        %1099 = vmatmul.mubr.bf16.gmra.mxu0 %v902
        %v1100 = vpop.f32.mrf.mxu0
        %v1101 = vadd.f32 %v824, %v1100
        %v1102 = vpop.f32.mrf.mxu0
        %v1103 = vpop.f32.mrf.mxu0
        %v1104 = vadd.f32 %v824, %v1103
        %v1105 = vpop.f32.mrf.mxu0
        %1106 = vmatprep.mubr.bf16.mxu0 0
        %1107 = vmatmul.mubr.bf16.gmra.mxu0 %v903
        %v1108 = vpop.f32.mrf.mxu0
        %v1109 = vadd.f32 %v824, %v1108
        %v1110 = vpop.f32.mrf.mxu0
        %v1111 = vpop.f32.mrf.mxu0
        %v1112 = vadd.f32 %v824, %v1111
        %v1113 = vpop.f32.mrf.mxu0
        %1114 = vmatprep.mubr.bf16.mxu0 0
        %1115 = vmatmul.mubr.bf16.gmra.mxu0 %v904
        %v1116 = vpop.f32.mrf.mxu0
        %v1117 = vadd.f32 %v824, %v1116
        %v1118 = vpop.f32.mrf.mxu0
        %v1119 = vpop.f32.mrf.mxu0
        %v1120 = vadd.f32 %v824, %v1119
        %v1121 = vpop.f32.mrf.mxu0
        %1122 = vmatprep.mubr.bf16.mxu0 0
        %1123 = vmatmul.mubr.bf16.gmra.mxu0 %v905
        %v1124 = vpop.f32.mrf.mxu0
        %v1125 = vadd.f32 %v824, %v1124
        %v1126 = vpop.f32.mrf.mxu0
        %v1127 = vpop.f32.mrf.mxu0
        %v1128 = vadd.f32 %v824, %v1127
        %v1129 = vpop.f32.mrf.mxu0
        %1130 = vdwg.mxu0
        %v1131 = vxor.u32 %v677, 2147483648
        %v1132 = vxor.u32 %v680, 2147483648
        %v1133 = vxor.u32 %v685, 2147483648
        %v1134 = vxor.u32 %v688, 2147483648
        %v1135 = vxor.u32 %v693, 2147483648
        %v1136 = vxor.u32 %v696, 2147483648
        %v1137 = vxor.u32 %v701, 2147483648
        %v1138 = vxor.u32 %v704, 2147483648
        %v1139 = vxor.u32 %v709, 2147483648
        %v1140 = vxor.u32 %v712, 2147483648
        %v1141 = vxor.u32 %v717, 2147483648
        %v1142 = vxor.u32 %v720, 2147483648
        %v1143 = vxor.u32 %v725, 2147483648
        %v1144 = vxor.u32 %v728, 2147483648
        %v1145 = vxor.u32 %v733, 2147483648
        %v1146 = vxor.u32 %v736, 2147483648
        %v1147 = vxor.u32 %v741, 2147483648
        %v1148 = vxor.u32 %v744, 2147483648
        %v1149 = vxor.u32 %v749, 2147483648
        %v1150 = vxor.u32 %v752, 2147483648
        %v1151 = vxor.u32 %v757, 2147483648
        %v1152 = vxor.u32 %v760, 2147483648
        %v1153 = vxor.u32 %v765, 2147483648
        %v1154 = vxor.u32 %v768, 2147483648
        %v1155 = vxor.u32 %v773, 2147483648
        %v1156 = vxor.u32 %v776, 2147483648
        %v1157 = vxor.u32 %v781, 2147483648
        %v1158 = vxor.u32 %v784, 2147483648
        %v1159 = vxor.u32 %v789, 2147483648
        %v1160 = vxor.u32 %v792, 2147483648
        %v1161 = vxor.u32 %v797, 2147483648
        %v1162 = vxor.u32 %v800, 2147483648
        %v1163 = vmul.f32 %v1131, 1.442695
        %v1164 = vpow.pop %v1163
        %v1165 = vmul.f32 %v1132, 1.442695
        %v1166 = vpow.pop %v1165
        %v1167 = vmul.f32 %v1133, 1.442695
        %v1168 = vpow.pop %v1167
        %v1169 = vmul.f32 %v1134, 1.442695
        %v1170 = vpow.pop %v1169
        %v1171 = vmul.f32 %v1135, 1.442695
        %v1172 = vpow.pop %v1171
        %v1173 = vmul.f32 %v1136, 1.442695
        %v1174 = vpow.pop %v1173
        %v1175 = vmul.f32 %v1137, 1.442695
        %v1176 = vpow.pop %v1175
        %v1177 = vmul.f32 %v1138, 1.442695
        %v1178 = vpow.pop %v1177
        %v1179 = vmul.f32 %v1139, 1.442695
        %v1180 = vpow.pop %v1179
        %v1181 = vmul.f32 %v1140, 1.442695
        %v1182 = vpow.pop %v1181
        %v1183 = vmul.f32 %v1141, 1.442695
        %v1184 = vpow.pop %v1183
        %v1185 = vmul.f32 %v1142, 1.442695
        %v1186 = vpow.pop %v1185
        %v1187 = vmul.f32 %v1143, 1.442695
        %v1188 = vpow.pop %v1187
        %v1189 = vmul.f32 %v1144, 1.442695
        %v1190 = vpow.pop %v1189
        %v1191 = vmul.f32 %v1145, 1.442695
        %v1192 = vpow.pop %v1191
        %v1193 = vmul.f32 %v1146, 1.442695
        %v1194 = vpow.pop %v1193
        %v1195 = vmul.f32 %v1147, 1.442695
        %v1196 = vpow.pop %v1195
        %v1197 = vmul.f32 %v1148, 1.442695
        %v1198 = vpow.pop %v1197
        %v1199 = vmul.f32 %v1149, 1.442695
        %v1200 = vpow.pop %v1199
        %v1201 = vmul.f32 %v1150, 1.442695
        %v1202 = vpow.pop %v1201
        %v1203 = vmul.f32 %v1151, 1.442695
        %v1204 = vpow.pop %v1203
        %v1205 = vmul.f32 %v1152, 1.442695
        %v1206 = vpow.pop %v1205
        %v1207 = vmul.f32 %v1153, 1.442695
        %v1208 = vpow.pop %v1207
        %v1209 = vmul.f32 %v1154, 1.442695
        %v1210 = vpow.pop %v1209
        %v1211 = vmul.f32 %v1155, 1.442695
        %v1212 = vpow.pop %v1211
        %v1213 = vmul.f32 %v1156, 1.442695
        %v1214 = vpow.pop %v1213
        %v1215 = vmul.f32 %v1157, 1.442695
        %v1216 = vpow.pop %v1215
        %v1217 = vmul.f32 %v1158, 1.442695
        %v1218 = vpow.pop %v1217
        %v1219 = vmul.f32 %v1159, 1.442695
        %v1220 = vpow.pop %v1219
        %v1221 = vmul.f32 %v1160, 1.442695
        %v1222 = vpow.pop %v1221
        %v1223 = vmul.f32 %v1161, 1.442695
        %v1224 = vpow.pop %v1223
        %v1225 = vmul.f32 %v1162, 1.442695
        %v1226 = vpow.pop %v1225
        %v1227 = vadd.f32 %v1164, 1.0
        %v1228 = vadd.f32 %v1166, 1.0
        %v1229 = vadd.f32 %v1168, 1.0
        %v1230 = vadd.f32 %v1170, 1.0
        %v1231 = vadd.f32 %v1172, 1.0
        %v1232 = vadd.f32 %v1174, 1.0
        %v1233 = vadd.f32 %v1176, 1.0
        %v1234 = vadd.f32 %v1178, 1.0
        %v1235 = vadd.f32 %v1180, 1.0
        %v1236 = vadd.f32 %v1182, 1.0
        %v1237 = vadd.f32 %v1184, 1.0
        %v1238 = vadd.f32 %v1186, 1.0
        %v1239 = vadd.f32 %v1188, 1.0
        %v1240 = vadd.f32 %v1190, 1.0
        %v1241 = vadd.f32 %v1192, 1.0
        %v1242 = vadd.f32 %v1194, 1.0
        %v1243 = vadd.f32 %v1196, 1.0
        %v1244 = vadd.f32 %v1198, 1.0
        %v1245 = vadd.f32 %v1200, 1.0
        %v1246 = vadd.f32 %v1202, 1.0
        %v1247 = vadd.f32 %v1204, 1.0
        %v1248 = vadd.f32 %v1206, 1.0
        %v1249 = vadd.f32 %v1208, 1.0
        %v1250 = vadd.f32 %v1210, 1.0
        %v1251 = vadd.f32 %v1212, 1.0
        %v1252 = vadd.f32 %v1214, 1.0
        %v1253 = vadd.f32 %v1216, 1.0
        %v1254 = vadd.f32 %v1218, 1.0
        %v1255 = vadd.f32 %v1220, 1.0
        %v1256 = vadd.f32 %v1222, 1.0
        %v1257 = vadd.f32 %v1224, 1.0
        %v1258 = vadd.f32 %v1226, 1.0
        %v1259 = vrcp.pop %v1227
        %v1260 = vmul.f32 1.0, %v1259
        %v1261 = vrcp.pop %v1228
        %v1262 = vmul.f32 1.0, %v1261
        %v1263 = vrcp.pop %v1229
        %v1264 = vmul.f32 1.0, %v1263
        %v1265 = vrcp.pop %v1230
        %v1266 = vmul.f32 1.0, %v1265
        %v1267 = vrcp.pop %v1231
        %v1268 = vmul.f32 1.0, %v1267
        %v1269 = vrcp.pop %v1232
        %v1270 = vmul.f32 1.0, %v1269
        %v1271 = vrcp.pop %v1233
        %v1272 = vmul.f32 1.0, %v1271
        %v1273 = vrcp.pop %v1234
        %v1274 = vmul.f32 1.0, %v1273
        %v1275 = vrcp.pop %v1235
        %v1276 = vmul.f32 1.0, %v1275
        %v1277 = vrcp.pop %v1236
        %v1278 = vmul.f32 1.0, %v1277
        %v1279 = vrcp.pop %v1237
        %v1280 = vmul.f32 1.0, %v1279
        %v1281 = vrcp.pop %v1238
        %v1282 = vmul.f32 1.0, %v1281
        %v1283 = vrcp.pop %v1239
        %v1284 = vmul.f32 1.0, %v1283
        %v1285 = vrcp.pop %v1240
        %v1286 = vmul.f32 1.0, %v1285
        %v1287 = vrcp.pop %v1241
        %v1288 = vmul.f32 1.0, %v1287
        %v1289 = vrcp.pop %v1242
        %v1290 = vmul.f32 1.0, %v1289
        %v1291 = vrcp.pop %v1243
        %v1292 = vmul.f32 1.0, %v1291
        %v1293 = vrcp.pop %v1244
        %v1294 = vmul.f32 1.0, %v1293
        %v1295 = vrcp.pop %v1245
        %v1296 = vmul.f32 1.0, %v1295
        %v1297 = vrcp.pop %v1246
        %v1298 = vmul.f32 1.0, %v1297
        %v1299 = vrcp.pop %v1247
        %v1300 = vmul.f32 1.0, %v1299
        %v1301 = vrcp.pop %v1248
        %v1302 = vmul.f32 1.0, %v1301
        %v1303 = vrcp.pop %v1249
        %v1304 = vmul.f32 1.0, %v1303
        %v1305 = vrcp.pop %v1250
        %v1306 = vmul.f32 1.0, %v1305
        %v1307 = vrcp.pop %v1251
        %v1308 = vmul.f32 1.0, %v1307
        %v1309 = vrcp.pop %v1252
        %v1310 = vmul.f32 1.0, %v1309
        %v1311 = vrcp.pop %v1253
        %v1312 = vmul.f32 1.0, %v1311
        %v1313 = vrcp.pop %v1254
        %v1314 = vmul.f32 1.0, %v1313
        %v1315 = vrcp.pop %v1255
        %v1316 = vmul.f32 1.0, %v1315
        %v1317 = vrcp.pop %v1256
        %v1318 = vmul.f32 1.0, %v1317
        %v1319 = vrcp.pop %v1257
        %v1320 = vmul.f32 1.0, %v1319
        %v1321 = vrcp.pop %v1258
        %v1322 = vmul.f32 1.0, %v1321
        %v1323 = vmul.f32 %v1260, %v1005
        %v1324 = vmul.f32 %v1262, %v1008
        %v1325 = vmul.f32 %v1264, %v1013
        %v1326 = vmul.f32 %v1266, %v1016
        %v1327 = vmul.f32 %v1268, %v1021
        %v1328 = vmul.f32 %v1270, %v1024
        %v1329 = vmul.f32 %v1272, %v1029
        %v1330 = vmul.f32 %v1274, %v1032
        %v1331 = vmul.f32 %v1276, %v1037
        %v1332 = vmul.f32 %v1278, %v1040
        %v1333 = vmul.f32 %v1280, %v1045
        %v1334 = vmul.f32 %v1282, %v1048
        %v1335 = vmul.f32 %v1284, %v1053
        %v1336 = vmul.f32 %v1286, %v1056
        %v1337 = vmul.f32 %v1288, %v1061
        %v1338 = vmul.f32 %v1290, %v1064
        %v1339 = vmul.f32 %v1292, %v1069
        %v1340 = vmul.f32 %v1294, %v1072
        %v1341 = vmul.f32 %v1296, %v1077
        %v1342 = vmul.f32 %v1298, %v1080
        %v1343 = vmul.f32 %v1300, %v1085
        %v1344 = vmul.f32 %v1302, %v1088
        %v1345 = vmul.f32 %v1304, %v1093
        %v1346 = vmul.f32 %v1306, %v1096
        %v1347 = vmul.f32 %v1308, %v1101
        %v1348 = vmul.f32 %v1310, %v1104
        %v1349 = vmul.f32 %v1312, %v1109
        %v1350 = vmul.f32 %v1314, %v1112
        %v1351 = vmul.f32 %v1316, %v1117
        %v1352 = vmul.f32 %v1318, %v1120
        %v1353 = vmul.f32 %v1320, %v1125
        %v1354 = vmul.f32 %v1322, %v1128
        %v1355 = vpack.c.bf16 %v1324, %v1323
        %v1356 = vpack.c.bf16 %v1326, %v1325
        %v1357 = vpack.c.bf16 %v1328, %v1327
        %v1358 = vpack.c.bf16 %v1330, %v1329
        %v1359 = vpack.c.bf16 %v1332, %v1331
        %v1360 = vpack.c.bf16 %v1334, %v1333
        %v1361 = vpack.c.bf16 %v1336, %v1335
        %v1362 = vpack.c.bf16 %v1338, %v1337
        %v1363 = vpack.c.bf16 %v1340, %v1339
        %v1364 = vpack.c.bf16 %v1342, %v1341
        %v1365 = vpack.c.bf16 %v1344, %v1343
        %v1366 = vpack.c.bf16 %v1346, %v1345
        %v1367 = vpack.c.bf16 %v1348, %v1347
        %v1368 = vpack.c.bf16 %v1350, %v1349
        %v1369 = vpack.c.bf16 %v1352, %v1351
        %v1370 = vpack.c.bf16 %v1354, %v1353
        %v1371 = vld [vmem:[#allocation10] sm:$0xf]
        %v1372 = vld [vmem:[#allocation10 + $0x4] sm:$0xf]
        %v1373 = vld [vmem:[#allocation10 + $0x8] sm:$0xf]
        %v1374 = vld [vmem:[#allocation10 + $0xc] sm:$0xf]
        %v1375 = vld [vmem:[#allocation10 + $0x10] sm:$0xf]
        %v1376 = vld [vmem:[#allocation10 + $0x14] sm:$0xf]
        %v1377 = vld [vmem:[#allocation10 + $0x18] sm:$0xf]
        %v1378 = vld [vmem:[#allocation10 + $0x1c] sm:$0xf]
        %v1379 = vld [vmem:[#allocation10 + $0x20] sm:$0xf]
        %v1380 = vld [vmem:[#allocation10 + $0x24] sm:$0xf]
        %v1381 = vld [vmem:[#allocation10 + $0x28] sm:$0xf]
        %v1382 = vld [vmem:[#allocation10 + $0x2c] sm:$0xf]
        %v1383 = vld [vmem:[#allocation10 + $0x30] sm:$0xf]
        %v1384 = vld [vmem:[#allocation10 + $0x34] sm:$0xf]
        %v1385 = vld [vmem:[#allocation10 + $0x38] sm:$0xf]
        %v1386 = vld [vmem:[#allocation10 + $0x3c] sm:$0xf]
        %v1387 = vld [vmem:[%s7] sm:$0x1]
        %v1389 = vlaneseq
        %v1390 = vshrl.u32 %v1389, 7
        %v1391 = vsub.s32 0, %v1390
        %v1392 = vrot.slane %v1387, %v1391
        %v1410 = vunpack.c.l.b16 %v1371
        %v1411 = vunpack.c.l.b16 %v1372
        %v1412 = vunpack.c.l.b16 %v1373
        %v1413 = vunpack.c.l.b16 %v1374
        %v1414 = vunpack.c.l.b16 %v1375
        %v1415 = vunpack.c.l.b16 %v1376
        %v1416 = vunpack.c.l.b16 %v1377
        %v1417 = vunpack.c.l.b16 %v1378
        %v1418 = vunpack.c.l.b16 %v1379
        %v1419 = vunpack.c.l.b16 %v1380
        %v1420 = vunpack.c.l.b16 %v1381
        %v1421 = vunpack.c.l.b16 %v1382
        %v1422 = vunpack.c.l.b16 %v1383
        %v1423 = vunpack.c.l.b16 %v1384
        %v1424 = vunpack.c.l.b16 %v1385
        %v1425 = vunpack.c.l.b16 %v1386
        %v1426 = vpack.c.b16 %v1411, %v1410
        %v1427 = vpack.c.b16 %v1413, %v1412
        %v1428 = vpack.c.b16 %v1415, %v1414
        %v1429 = vpack.c.b16 %v1417, %v1416
        %v1430 = vpack.c.b16 %v1419, %v1418
        %v1431 = vpack.c.b16 %v1421, %v1420
        %v1432 = vpack.c.b16 %v1423, %v1422
        %v1433 = vpack.c.b16 %v1425, %v1424
        %1442 = vmatprep.subr.bf16.mxu0 0
        %1443 = vmatpush1.bf16.msra.mxu0 %v1433
        %1444 = vmatprep.subr.bf16.mxu0 0
        %1445 = vmatpush1.bf16.msra.mxu0 %v1432
        %1446 = vmatprep.subr.bf16.mxu0 0
        %1447 = vmatpush1.bf16.msra.mxu0 %v1431
        %1448 = vmatprep.subr.bf16.mxu0 0
        %1449 = vmatpush1.bf16.msra.mxu0 %v1430
        %1450 = vmatprep.subr.bf16.mxu0 0
        %1451 = vmatpush1.bf16.msra.mxu0 %v1429
        %1452 = vmatprep.subr.bf16.mxu0 0
        %1453 = vmatpush1.bf16.msra.mxu0 %v1428
        %1454 = vmatprep.subr.bf16.mxu0 0
        %1455 = vmatpush1.bf16.msra.mxu0 %v1427
        %1456 = vmatprep.subr.bf16.mxu0 0
        %1457 = vmatpush1.bf16.msra.mxu0 %v1426
        %1458 = vmatprep.subr.bf16.mxu0 0
        %1459 = vmatpush2.bf16.msra.mxu0 0
        %1460 = vmatprep.subr.bf16.mxu0 0
        %1461 = vmatpush2.bf16.msra.mxu0 0
        %1462 = vmatprep.subr.bf16.mxu0 0
        %1463 = vmatpush2.bf16.msra.mxu0 0
        %1464 = vmatprep.subr.bf16.mxu0 0
        %1465 = vmatpush2.bf16.msra.mxu0 0
        %1466 = vmatprep.subr.bf16.mxu0 0
        %1467 = vmatpush2.bf16.msra.mxu0 0
        %1468 = vmatprep.subr.bf16.mxu0 0
        %1469 = vmatpush2.bf16.msra.mxu0 0
        %1470 = vmatprep.subr.bf16.mxu0 0
        %1471 = vmatpush2.bf16.msra.mxu0 0
        %1472 = vmatprep.subr.bf16.mxu0 0
        %1473 = vmatpush2.bf16.msra.mxu0 0
        %1474 = vmatprep.mubr.bf16.mxu0 0
        %1475 = vmatmul.mubr.bf16.gmra.mxu0 %v1355
        %v1476 = vpop.f32.mrf.mxu0
        %v1477 = vadd.f32 %v1392, %v1476
        %v1478 = vpop.f32.mrf.mxu0
        %v1479 = vpop.f32.mrf.mxu0
        %v1480 = vadd.f32 %v1392, %v1479
        %v1481 = vpop.f32.mrf.mxu0
        %1482 = vmatprep.mubr.bf16.mxu0 0
        %1483 = vmatmul.mubr.bf16.gmra.mxu0 %v1356
        %v1484 = vpop.f32.mrf.mxu0
        %v1485 = vadd.f32 %v1392, %v1484
        %v1486 = vpop.f32.mrf.mxu0
        %v1487 = vpop.f32.mrf.mxu0
        %v1488 = vadd.f32 %v1392, %v1487
        %v1489 = vpop.f32.mrf.mxu0
        %1490 = vmatprep.mubr.bf16.mxu0 0
        %1491 = vmatmul.mubr.bf16.gmra.mxu0 %v1357
        %v1492 = vpop.f32.mrf.mxu0
        %v1493 = vadd.f32 %v1392, %v1492
        %v1494 = vpop.f32.mrf.mxu0
        %v1495 = vpop.f32.mrf.mxu0
        %v1496 = vadd.f32 %v1392, %v1495
        %v1497 = vpop.f32.mrf.mxu0
        %1498 = vmatprep.mubr.bf16.mxu0 0
        %1499 = vmatmul.mubr.bf16.gmra.mxu0 %v1358
        %v1500 = vpop.f32.mrf.mxu0
        %v1501 = vadd.f32 %v1392, %v1500
        %v1502 = vpop.f32.mrf.mxu0
        %v1503 = vpop.f32.mrf.mxu0
        %v1504 = vadd.f32 %v1392, %v1503
        %v1505 = vpop.f32.mrf.mxu0
        %1506 = vmatprep.mubr.bf16.mxu0 0
        %1507 = vmatmul.mubr.bf16.gmra.mxu0 %v1359
        %v1508 = vpop.f32.mrf.mxu0
        %v1509 = vadd.f32 %v1392, %v1508
        %v1510 = vpop.f32.mrf.mxu0
        %v1511 = vpop.f32.mrf.mxu0
        %v1512 = vadd.f32 %v1392, %v1511
        %v1513 = vpop.f32.mrf.mxu0
        %1514 = vmatprep.mubr.bf16.mxu0 0
        %1515 = vmatmul.mubr.bf16.gmra.mxu0 %v1360
        %v1516 = vpop.f32.mrf.mxu0
        %v1517 = vadd.f32 %v1392, %v1516
        %v1518 = vpop.f32.mrf.mxu0
        %v1519 = vpop.f32.mrf.mxu0
        %v1520 = vadd.f32 %v1392, %v1519
        %v1521 = vpop.f32.mrf.mxu0
        %1522 = vmatprep.mubr.bf16.mxu0 0
        %1523 = vmatmul.mubr.bf16.gmra.mxu0 %v1361
        %v1524 = vpop.f32.mrf.mxu0
        %v1525 = vadd.f32 %v1392, %v1524
        %v1526 = vpop.f32.mrf.mxu0
        %v1527 = vpop.f32.mrf.mxu0
        %v1528 = vadd.f32 %v1392, %v1527
        %v1529 = vpop.f32.mrf.mxu0
        %1530 = vmatprep.mubr.bf16.mxu0 0
        %1531 = vmatmul.mubr.bf16.gmra.mxu0 %v1362
        %v1532 = vpop.f32.mrf.mxu0
        %v1533 = vadd.f32 %v1392, %v1532
        %v1534 = vpop.f32.mrf.mxu0
        %v1535 = vpop.f32.mrf.mxu0
        %v1536 = vadd.f32 %v1392, %v1535
        %v1537 = vpop.f32.mrf.mxu0
        %1538 = vmatprep.mubr.bf16.mxu0 0
        %1539 = vmatmul.mubr.bf16.gmra.mxu0 %v1363
        %v1540 = vpop.f32.mrf.mxu0
        %v1541 = vadd.f32 %v1392, %v1540
        %v1542 = vpop.f32.mrf.mxu0
        %v1543 = vpop.f32.mrf.mxu0
        %v1544 = vadd.f32 %v1392, %v1543
        %v1545 = vpop.f32.mrf.mxu0
        %1546 = vmatprep.mubr.bf16.mxu0 0
        %1547 = vmatmul.mubr.bf16.gmra.mxu0 %v1364
        %v1548 = vpop.f32.mrf.mxu0
        %v1549 = vadd.f32 %v1392, %v1548
        %v1550 = vpop.f32.mrf.mxu0
        %v1551 = vpop.f32.mrf.mxu0
        %v1552 = vadd.f32 %v1392, %v1551
        %v1553 = vpop.f32.mrf.mxu0
        %1554 = vmatprep.mubr.bf16.mxu0 0
        %1555 = vmatmul.mubr.bf16.gmra.mxu0 %v1365
        %v1556 = vpop.f32.mrf.mxu0
        %v1557 = vadd.f32 %v1392, %v1556
        %v1558 = vpop.f32.mrf.mxu0
        %v1559 = vpop.f32.mrf.mxu0
        %v1560 = vadd.f32 %v1392, %v1559
        %v1561 = vpop.f32.mrf.mxu0
        %1562 = vmatprep.mubr.bf16.mxu0 0
        %1563 = vmatmul.mubr.bf16.gmra.mxu0 %v1366
        %v1564 = vpop.f32.mrf.mxu0
        %v1565 = vadd.f32 %v1392, %v1564
        %v1566 = vpop.f32.mrf.mxu0
        %v1567 = vpop.f32.mrf.mxu0
        %v1568 = vadd.f32 %v1392, %v1567
        %v1569 = vpop.f32.mrf.mxu0
        %1570 = vmatprep.mubr.bf16.mxu0 0
        %1571 = vmatmul.mubr.bf16.gmra.mxu0 %v1367
        %v1572 = vpop.f32.mrf.mxu0
        %v1573 = vadd.f32 %v1392, %v1572
        %v1574 = vpop.f32.mrf.mxu0
        %v1575 = vpop.f32.mrf.mxu0
        %v1576 = vadd.f32 %v1392, %v1575
        %v1577 = vpop.f32.mrf.mxu0
        %1578 = vmatprep.mubr.bf16.mxu0 0
        %1579 = vmatmul.mubr.bf16.gmra.mxu0 %v1368
        %v1580 = vpop.f32.mrf.mxu0
        %v1581 = vadd.f32 %v1392, %v1580
        %v1582 = vpop.f32.mrf.mxu0
        %v1583 = vpop.f32.mrf.mxu0
        %v1584 = vadd.f32 %v1392, %v1583
        %v1585 = vpop.f32.mrf.mxu0
        %1586 = vmatprep.mubr.bf16.mxu0 0
        %1587 = vmatmul.mubr.bf16.gmra.mxu0 %v1369
        %v1588 = vpop.f32.mrf.mxu0
        %v1589 = vadd.f32 %v1392, %v1588
        %v1590 = vpop.f32.mrf.mxu0
        %v1591 = vpop.f32.mrf.mxu0
        %v1592 = vadd.f32 %v1392, %v1591
        %v1593 = vpop.f32.mrf.mxu0
        %1594 = vmatprep.mubr.bf16.mxu0 0
        %1595 = vmatmul.mubr.bf16.gmra.mxu0 %v1370
        %v1596 = vpop.f32.mrf.mxu0
        %v1597 = vadd.f32 %v1392, %v1596
        %v1598 = vpop.f32.mrf.mxu0
        %v1599 = vpop.f32.mrf.mxu0
        %v1600 = vadd.f32 %v1392, %v1599
        %v1601 = vpop.f32.mrf.mxu0
        %1602 = vdwg.mxu0
        %1603 = vst [vmem:[%s406] sm:$0xff] %v1477
        %1604 = vst [vmem:[%s406 + $0x8] sm:$0xff] %v1480
        %1605 = vst [vmem:[%s406 + $0x10] sm:$0xff] %v1485
        %1606 = vst [vmem:[%s406 + $0x18] sm:$0xff] %v1488
        %1607 = vst [vmem:[%s406 + $0x20] sm:$0xff] %v1493
        %1608 = vst [vmem:[%s406 + $0x28] sm:$0xff] %v1496
        %1609 = vst [vmem:[%s406 + $0x30] sm:$0xff] %v1501
        %1610 = vst [vmem:[%s406 + $0x38] sm:$0xff] %v1504
        %1611 = vst [vmem:[%s406 + $0x40] sm:$0xff] %v1509
        %1612 = vst [vmem:[%s406 + $0x48] sm:$0xff] %v1512
        %1613 = vst [vmem:[%s406 + $0x50] sm:$0xff] %v1517
        %1614 = vst [vmem:[%s406 + $0x58] sm:$0xff] %v1520
        %1615 = vst [vmem:[%s406 + $0x60] sm:$0xff] %v1525
        %1616 = vst [vmem:[%s406 + $0x68] sm:$0xff] %v1528
        %1617 = vst [vmem:[%s406 + $0x70] sm:$0xff] %v1533
        %1618 = vst [vmem:[%s406 + $0x78] sm:$0xff] %v1536
        %1619 = vst [vmem:[%s406 + $0x80] sm:$0xff] %v1541
        %1620 = vst [vmem:[%s406 + $0x88] sm:$0xff] %v1544
        %1621 = vst [vmem:[%s406 + $0x90] sm:$0xff] %v1549
        %1622 = vst [vmem:[%s406 + $0x98] sm:$0xff] %v1552
        %1623 = vst [vmem:[%s406 + $0xa0] sm:$0xff] %v1557
        %1624 = vst [vmem:[%s406 + $0xa8] sm:$0xff] %v1560
        %1625 = vst [vmem:[%s406 + $0xb0] sm:$0xff] %v1565
        %1626 = vst [vmem:[%s406 + $0xb8] sm:$0xff] %v1568
        %1627 = vst [vmem:[%s406 + $0xc0] sm:$0xff] %v1573
        %1628 = vst [vmem:[%s406 + $0xc8] sm:$0xff] %v1576
        %1629 = vst [vmem:[%s406 + $0xd0] sm:$0xff] %v1581
        %1630 = vst [vmem:[%s406 + $0xd8] sm:$0xff] %v1584
        %1631 = vst [vmem:[%s406 + $0xe0] sm:$0xff] %v1589
        %1632 = vst [vmem:[%s406 + $0xe8] sm:$0xff] %v1592
        %1633 = vst [vmem:[%s406 + $0xf0] sm:$0xff] %v1597
        %1634 = vst [vmem:[%s406 + $0xf8] sm:$0xff] %v1600
        %s1635 = sand.u32 %s215, 1
        %s1636 = scalar_lea.sflag [#allocation4], %s1635
        %s1637 = sand.u32 %s215, 1
        %s1638 = smul.addr %s1637, 256
        %s1639 = scalar_lea.vmem [#allocation11], %s1638
        // Predicated region
        $region73: #{tpu_custom_call.1} parent=51 // pred_check
          %p1640 = pneg %p225
        $region74: #{tpu_custom_call.1} parent=51 // pred_check_branch
          %1642 = sbr.rel (%p1640) target = $region76
        $region75: #{tpu_custom_call.1} parent=51 // pred_region
          %s1643 = smul.u32 32, %s29
          %s1645 = ssub.s32 4096, 4096
          %1646 = vsyncadd %s1636, %s1645
          %s1647 = smul.addr %s1643, 128
          %s1648 = scalar_lea.hbm %s8, %s1647
          %s1649 = sshll.u32 %s1639, 4
          %s1650 = int_to_ptr.vmem [resolvable:$true] %s1649
          %1655 = dma.vmem_to_hbm [thread:$0]  %s1650, 4096, %s1648, %s1636, 128, 128, 8
        $region76: #{tpu_custom_call.1} parent=51 // pred_fallthru
          _
      $region52: #{tpu_custom_call.1} parent=5 // pred_fallthru
        _
      %p1656 = scmp.le.s32.totalorder 2, %s24
      // Predicated region
      $region77: #{tpu_custom_call.1} parent=5 // pred_check
        %p1657 = pneg %p1656
      $region78: #{tpu_custom_call.1} parent=5 // pred_check_branch
        %1659 = sbr.rel (%p1657) target = $region80
      $region79: #{tpu_custom_call.1} parent=5 // pred_region
        %s1660 = ssub.s32 %s24, 2
        // Predicated region
        $region81: #{tpu_custom_call.1} parent=79 // pred_check
          %p1661 = pneg %p231
        $region82: #{tpu_custom_call.1} parent=79 // pred_check_branch
          %1663 = sbr.rel (%p1661) target = $region84
        $region83: #{tpu_custom_call.1} parent=79 // pred_region
          %s1664 = sand.u32 %s216, 1
          %s1665 = scalar_lea.sflag [#allocation4], %s1664
          %s1666 = sand.u32 %s216, 1
          %s1667 = smul.addr %s1666, 256
          %s1668 = scalar_lea.vmem [#allocation11], %s1667
          %1669 = dma.done %s1665, 4096
        $region84: #{tpu_custom_call.1} parent=79 // pred_fallthru
          _
      $region80: #{tpu_custom_call.1} parent=5 // pred_fallthru
        _
    $region6: #{tpu_custom_call.1} parent=1 // loop_footer
      %s28 = sadd.s32 1, %s24
    $region7: #{tpu_custom_call.1} parent=1 // loop_footer_branch
      %23 = sbr.rel target = $region3
    $region8: #{tpu_custom_call.1} parent=1 // loop_exit
      _
    %1670 = vsyncpa [#allocation3], 1
    %s1671 = scalar_lea.sflag [#allocation3], 1
    %1672 = vsyncpa %s1671, 1
    %1673 = vsyncpa [#allocation6], 1
    %s1674 = scalar_lea.sflag [#allocation6], 1
    %1675 = vsyncpa %s1674, 1
    %1676 = vsyncpa [#allocation9], 1
    %1677 = vsyncpa [#allocation4], 1
    %s1678 = scalar_lea.sflag [#allocation4], 1
    %1679 = vsyncpa %s1678, 1

</llo_original>
